<compile_context>
chip_gen: v6e
topology: v6e:2x2x1
jax: 0.10.0
libtpu: 0.0.40
codegen_flags: <defaults>
</compile_context>

<pallas_src>
import functools
import math

import jax
import jax.numpy as jnp
from jax.experimental import pallas as pl
from jax.experimental.pallas import tpu as pltpu

LN_EPS = 1e-5  # nn.LayerNorm default


def _layernorm(x, g, b):
    # Single pass: E[x] and E[x^2] together -> half the cross-lane reduces.
    mean = jnp.mean(x, axis=-1, keepdims=True)
    mean_sq = jnp.mean(x * x, axis=-1, keepdims=True)
    var = mean_sq - mean * mean
    return (x - mean) * jax.lax.rsqrt(var + LN_EPS) * g + b


# ---------------------------------------------------------------------------
# Fused kernel: all layers + final LayerNorm.  grid = (batch_tiles, layers)
# ---------------------------------------------------------------------------
def _encoder_kernel(x_ref,
                    ln0_g_ref, ln0_b_ref, wq_ref, bq_ref, wk_ref, bk_ref,
                    wv_ref, bv_ref, wo_ref, bo_ref,
                    ln1_g_ref, ln1_b_ref, w1_ref, b1_ref, w2_ref, b2_ref,
                    lnf_g_ref, lnf_b_ref,
                    o_ref,
                    *, seq_len, num_heads, mxu_dtype, approx_recip):
    layer = pl.program_id(1)
    rows, D = x_ref.shape
    S = seq_len
    Bt = rows // S
    H = num_heads
    dh = D // H
    f32 = jnp.float32

    # Activation carry = the resident output block (block index constant across
    # the inner "arbitrary" layer axis -> stays in VMEM, written to HBM once
    # per batch tile).  Seed it from the input at layer 0.
    @pl.when(layer == 0)
    def _():
        o_ref[...] = x_ref[...]

    x2 = o_ref[...].astype(f32)

    # ---------------- sublayer 0: x + MHA(LayerNorm(x)) ----------------
    xn = _layernorm(x2, ln0_g_ref[0], ln0_b_ref[0])
    xn_mx = xn.astype(mxu_dtype)

    wq = wq_ref[0]
    wk = wk_ref[0]
    wv = wv_ref[0]
    wo = wo_ref[0]
    bq = bq_ref[0]
    bk = bk_ref[0]
    bv = bv_ref[0]
    scale = 1.0 / math.sqrt(dh)

    x_new = x2 + bo_ref[0]                       # residual + output-proj bias
    for h in range(H):                           # short static head loop
        cs = slice(h * dh, (h + 1) * dh)
        # Per-head projections via sliced *weight* columns: the big (rows, D)
        # activations are never lane-sliced.
        qh = jnp.dot(xn_mx, wq[:, cs], preferred_element_type=f32) + bq[:, cs]
        kh = jnp.dot(xn_mx, wk[:, cs], preferred_element_type=f32) + bk[:, cs]
        vh = jnp.dot(xn_mx, wv[:, cs], preferred_element_type=f32) + bv[:, cs]
        qh = (qh * scale).reshape(Bt, S, dh)     # 1/sqrt(dh) folded into q once
        kh = kh.reshape(Bt, S, dh)
        vh = vh.reshape(Bt, S, dh)
        # Contract on last axes directly (no k.T materialization).
        s = jnp.einsum("bqd,bkd->bqk",
                       qh.astype(mxu_dtype), kh.astype(mxu_dtype),
                       preferred_element_type=f32)
        s = s - jnp.max(s, axis=-1, keepdims=True)
        p = jnp.exp(s)
        denom = jnp.sum(p, axis=-1, keepdims=True)
        if approx_recip:
            p = p * pl.reciprocal(denom, approx=True)    # EUP slot, ~free
        else:
            p = p / denom
        ctx = jnp.einsum("bqk,bkd->bqd",
                         p.astype(mxu_dtype), vh.astype(mxu_dtype),
                         preferred_element_type=f32)
        # Per-head output projection accumulated straight into the residual:
        # full-D lane-dense adds, no (B,S,D) attention slab, no narrow stores.
        x_new = x_new + jnp.dot(ctx.reshape(rows, dh).astype(mxu_dtype),
                                wo[cs, :], preferred_element_type=f32)
    x2 = x_new

    # ---------------- sublayer 1: x + FFN(LayerNorm(x)) ----------------
    xn = _layernorm(x2, ln1_g_ref[0], ln1_b_ref[0])
    ff = jnp.dot(xn.astype(mxu_dtype), w1_ref[0],
                 preferred_element_type=f32) + b1_ref[0]
    ff = jnp.maximum(ff, 0.0)                    # ReLU (dropout = identity)
    x2 = x2 + jnp.dot(ff.astype(mxu_dtype), w2_ref[0],
                      preferred_element_type=f32) + b2_ref[0]

    # Carry to next layer; on the last layer emit the final LayerNorm instead.
    last = pl.num_programs(1) - 1

    @pl.when(layer < last)
    def _():
        o_ref[...] = x2.astype(o_ref.dtype)

    @pl.when(layer == last)
    def _():
        o_ref[...] = _layernorm(x2, lnf_g_ref[...],
                                lnf_b_ref[...]).astype(o_ref.dtype)


# ---------------------------------------------------------------------------
# Wrapper
# ---------------------------------------------------------------------------
def encoder_forward(x, params, *, num_heads, mxu_dtype=jnp.bfloat16,
                    batch_tile=None, approx_recip=True):
    B, S, D = x.shape
    assert D % num_heads == 0, "d_model must be divisible by num_heads"
    L = params["wq"].shape[0]
    d_ff = params["w1"].shape[-1]

    if batch_tile is None:
        batch_tile = B
    assert B % batch_tile == 0, "batch must divide evenly into batch tiles"
    nb = B // batch_tile
    rows_per_tile = batch_tile * S

    # Carry in f32 regardless of input dtype (output block is the carry).
    x2d = x.reshape(B * S, D).astype(jnp.float32)

    # Pre-cast matmul weights to the MXU dtype in the wrapper: halves weight
    # DMA bytes + the double-buffered weight VMEM when bf16.  Biases / LN
    # params stay f32 (added after the f32-accumulating matmul).
    weight_keys = {"wq", "wk", "wv", "wo", "w1", "w2"}
    layer_keys = ["ln0_g", "ln0_b", "wq", "bq", "wk", "bk", "wv", "bv",
                  "wo", "bo", "ln1_g", "ln1_b", "w1", "b1", "w2", "b2"]
    layer_args = [params[k].astype(mxu_dtype) if k in weight_keys else params[k]
                  for k in layer_keys]
    final_args = [params["lnf_g"], params["lnf_b"]]

    def layer_spec(shape):                        # block = one layer's slice
        nd = len(shape)
        return pl.BlockSpec((1,) + tuple(shape[1:]),
                            lambda b, l, _nd=nd: (l,) + (0,) * (_nd - 1))

    def const_spec(shape):                        # whole array, every step
        nd = len(shape)
        return pl.BlockSpec(tuple(shape), lambda b, l, _nd=nd: (0,) * _nd)

    act_spec = pl.BlockSpec((rows_per_tile, D), lambda b, l: (b, 0))

    in_specs = ([act_spec]
                + [layer_spec(a.shape) for a in layer_args]
                + [const_spec(a.shape) for a in final_args])

    # Explicit VMEM budget: activation tile + temporaries + 2x (one layer's
    # weights, double-buffered by the pipeline), clamped to [16, 64] MiB.
    w_bytes = jnp.dtype(mxu_dtype).itemsize
    layer_w_bytes = (4 * D * D + 2 * D * d_ff) * w_bytes
    act_bytes = 4 * rows_per_tile * (6 * D + d_ff) \
        + 4 * batch_tile * S * S * 2
    vmem_limit = int(min(max(3 * act_bytes + 2 * layer_w_bytes + (2 << 20),
                             16 << 20), 64 << 20))

    out = pl.pallas_call(
        functools.partial(_encoder_kernel, seq_len=S, num_heads=num_heads,
                          mxu_dtype=mxu_dtype, approx_recip=approx_recip),
        out_shape=jax.ShapeDtypeStruct((B * S, D), jnp.float32),
        grid=(nb, L),
        in_specs=in_specs,
        out_specs=act_spec,
        compiler_params=pltpu.CompilerParams(
            # batch tiles independent (megacore on v7x); layers sequential.
            dimension_semantics=("parallel", "arbitrary"),
            vmem_limit_bytes=vmem_limit),
    )(x2d, *layer_args, *final_args)

    return out.reshape(B, S, D).astype(x.dtype)


# ---------------------------------------------------------------------------
# Deterministic synthetic parameters (stacked per layer, (in, out) weights)
# ---------------------------------------------------------------------------
def init_params(key, num_layers, d_model, d_ff):
    L = num_layers
    ks = jax.random.split(key, 12)
    s = 0.02

    def nrm(k, shape):
        return s * jax.random.normal(k, shape, jnp.float32)

    return {
        "ln0_g": 1.0 + nrm(ks[0], (L, 1, d_model)),
        "ln0_b": nrm(ks[1], (L, 1, d_model)),
        "ln1_g": 1.0 + nrm(ks[2], (L, 1, d_model)),
        "ln1_b": nrm(ks[3], (L, 1, d_model)),
        "wq": nrm(ks[4], (L, d_model, d_model)),
        "bq": jnp.zeros((L, 1, d_model), jnp.float32),
        "wk": nrm(ks[5], (L, d_model, d_model)),
        "bk": jnp.zeros((L, 1, d_model), jnp.float32),
        "wv": nrm(ks[6], (L, d_model, d_model)),
        "bv": jnp.zeros((L, 1, d_model), jnp.float32),
        "wo": nrm(ks[7], (L, d_model, d_model)),
        "bo": nrm(ks[8], (L, 1, d_model)),
        "w1": nrm(ks[9], (L, d_model, d_ff)),
        "b1": nrm(ks[10], (L, 1, d_ff)),
        "w2": nrm(ks[11], (L, d_ff, d_model)),
        "b2": jnp.zeros((L, 1, d_model), jnp.float32),
        "lnf_g": jnp.ones((1, d_model), jnp.float32),
        "lnf_b": jnp.zeros((1, d_model), jnp.float32),
    }


# ---------------------------------------------------------------------------
# Pure-JAX reference (mirrors the PyTorch Encoder forward, f32 math)
# ---------------------------------------------------------------------------
def encoder_reference(x, params, *, num_heads):
    B, S, D = x.shape
    L = params["wq"].shape[0]
    H = num_heads
    dh = D // H

    def ln(v, g, b):
        m = jnp.mean(v, -1, keepdims=True)
        var = jnp.mean((v - m) ** 2, -1, keepdims=True)
        return (v - m) / jnp.sqrt(var + LN_EPS) * g + b

    h = x
    for l in range(L):
        xn = ln(h, params["ln0_g"][l, 0], params["ln0_b"][l, 0])
        q = xn @ params["wq"][l] + params["bq"][l, 0]
        k = xn @ params["wk"][l] + params["bk"][l, 0]
        v = xn @ params["wv"][l] + params["bv"][l, 0]
        q = q.reshape(B, S, H, dh).transpose(0, 2, 1, 3)
        k = k.reshape(B, S, H, dh).transpose(0, 2, 1, 3)
        v = v.reshape(B, S, H, dh).transpose(0, 2, 1, 3)
        s = jnp.einsum("bhqd,bhkd->bhqk", q, k) / jnp.sqrt(jnp.float32(dh))
        p = jax.nn.softmax(s, axis=-1)
        a = jnp.einsum("bhqk,bhkd->bhqd", p, v).transpose(0, 2, 1, 3).reshape(B, S, D)
        h = h + a @ params["wo"][l] + params["bo"][l, 0]
        xn = ln(h, params["ln1_g"][l, 0], params["ln1_b"][l, 0])
        f = jnp.maximum(xn @ params["w1"][l] + params["b1"][l, 0], 0.0)
        h = h + f @ params["w2"][l] + params["b2"][l, 0]
    return ln(h, params["lnf_g"][0], params["lnf_b"][0])


if __name__ == "__main__":
    B, S, D, H, D_FF, L = 2, 8, 32, 4, 64, 2
    key = jax.random.PRNGKey(0)
    k_x, k_p = jax.random.split(key)
    x = jax.random.normal(k_x, (B, S, D), jnp.float32)
    params = init_params(k_p, L, D, D_FF)

    ref = encoder_reference(x, params, num_heads=H)

    # Strict-parity path: f32 MXU inputs + exact reciprocal, single batch tile.
    out_f32 = encoder_forward(x, params, num_heads=H,
                              mxu_dtype=jnp.float32, approx_recip=False)
    jax.block_until_ready(out_f32)
    err_f32 = float(jnp.max(jnp.abs(out_f32 - ref)))
    assert err_f32 < 2e-3, f"f32 path max abs error vs reference: {err_f32}"

    # Default fast path: bf16 MXU inputs, approx-reciprocal softmax, and a
    # batch-parallel grid axis (2 tiles) exercising the megacore split.
    out = encoder_forward(x, params, num_heads=H, batch_tile=1)
    jax.block_until_ready(out)
    assert out.shape == (B, S, D) and out.dtype == jnp.float32
    err_bf16 = float(jnp.max(jnp.abs(out - ref)))
    assert err_bf16 < 5e-2, f"bf16 path max abs error vs reference: {err_bf16}"

    print("KERNEL_OK")
</pallas_src>

<mosaic_0001>
module attributes {stable_mosaic.version = 11 : i64} {
  func.func @_encoder_kernel(%arg0: i32, %arg1: i32, %arg2: memref<16x32xf32, #tpu.memory_space<vmem>>, %arg3: memref<1x1x32xf32, #tpu.memory_space<vmem>>, %arg4: memref<1x1x32xf32, #tpu.memory_space<vmem>>, %arg5: memref<1x32x32xf32, #tpu.memory_space<vmem>>, %arg6: memref<1x1x32xf32, #tpu.memory_space<vmem>>, %arg7: memref<1x32x32xf32, #tpu.memory_space<vmem>>, %arg8: memref<1x1x32xf32, #tpu.memory_space<vmem>>, %arg9: memref<1x32x32xf32, #tpu.memory_space<vmem>>, %arg10: memref<1x1x32xf32, #tpu.memory_space<vmem>>, %arg11: memref<1x32x32xf32, #tpu.memory_space<vmem>>, %arg12: memref<1x1x32xf32, #tpu.memory_space<vmem>>, %arg13: memref<1x1x32xf32, #tpu.memory_space<vmem>>, %arg14: memref<1x1x32xf32, #tpu.memory_space<vmem>>, %arg15: memref<1x32x64xf32, #tpu.memory_space<vmem>>, %arg16: memref<1x1x64xf32, #tpu.memory_space<vmem>>, %arg17: memref<1x64x32xf32, #tpu.memory_space<vmem>>, %arg18: memref<1x1x32xf32, #tpu.memory_space<vmem>>, %arg19: memref<1x32xf32, #tpu.memory_space<vmem>>, %arg20: memref<1x32xf32, #tpu.memory_space<vmem>>, %arg21: memref<16x32xf32, #tpu.memory_space<vmem>>) attributes {dimension_semantics = [#tpu.dimension_semantics<parallel>, #tpu.dimension_semantics<arbitrary>], iteration_bounds = array<i64: 1, 2>, scalar_prefetch = 0 : i64, scratch_operands = 0 : i64, tpu.core_type = #tpu.core_type<tc>, window_params = [{transform_indices = @transform_0, window_bounds = array<i64: 16, 32>}, {transform_indices = @transform_1, window_bounds = array<i64: 1, 1, 32>}, {transform_indices = @transform_2, window_bounds = array<i64: 1, 1, 32>}, {transform_indices = @transform_3, window_bounds = array<i64: 1, 32, 32>}, {transform_indices = @transform_4, window_bounds = array<i64: 1, 1, 32>}, {transform_indices = @transform_5, window_bounds = array<i64: 1, 32, 32>}, {transform_indices = @transform_6, window_bounds = array<i64: 1, 1, 32>}, {transform_indices = @transform_7, window_bounds = array<i64: 1, 32, 32>}, {transform_indices = @transform_8, window_bounds = array<i64: 1, 1, 32>}, {transform_indices = @transform_9, window_bounds = array<i64: 1, 32, 32>}, {transform_indices = @transform_10, window_bounds = array<i64: 1, 1, 32>}, {transform_indices = @transform_11, window_bounds = array<i64: 1, 1, 32>}, {transform_indices = @transform_12, window_bounds = array<i64: 1, 1, 32>}, {transform_indices = @transform_13, window_bounds = array<i64: 1, 32, 64>}, {transform_indices = @transform_14, window_bounds = array<i64: 1, 1, 64>}, {transform_indices = @transform_15, window_bounds = array<i64: 1, 64, 32>}, {transform_indices = @transform_16, window_bounds = array<i64: 1, 1, 32>}, {pipeline_mode = #tpu.pipeline_mode<synchronous>, transform_indices = @transform_17, window_bounds = array<i64: 1, 32>}, {pipeline_mode = #tpu.pipeline_mode<synchronous>, transform_indices = @transform_18, window_bounds = array<i64: 1, 32>}, {transform_indices = @transform_19, window_bounds = array<i64: 16, 32>}]} {
    %c0_i32 = arith.constant 0 : i32
    %0 = arith.cmpi eq, %arg1, %c0_i32 : i32
    %1 = arith.extui %0 : i1 to i32
    %c0_i32_0 = arith.constant 0 : i32
    %2 = arith.cmpi ne, %1, %c0_i32_0 : i32
    scf.if %2 {
      %c0_101 = arith.constant 0 : index
      %c0_102 = arith.constant 0 : index
      %237 = vector.load %arg2[%c0_101, %c0_102] : memref<16x32xf32, #tpu.memory_space<vmem>>, vector<16x32xf32>
      %c0_103 = arith.constant 0 : index
      %c0_104 = arith.constant 0 : index
      %238 = vector.load %arg21[%c0_103, %c0_104] : memref<16x32xf32, #tpu.memory_space<vmem>>, vector<16x32xf32>
      tpu.vector_store %arg21[%c0_103, %c0_104], %237 {strides = array<i32>} : memref<16x32xf32, #tpu.memory_space<vmem>>, vector<16x32xf32>,
    } else {
    }
    %c0 = arith.constant 0 : index
    %c0_1 = arith.constant 0 : index
    %3 = vector.load %arg21[%c0, %c0_1] : memref<16x32xf32, #tpu.memory_space<vmem>>, vector<16x32xf32>
    %c0_2 = arith.constant 0 : index
    %c0_3 = arith.constant 0 : index
    %c0_4 = arith.constant 0 : index
    %4 = vector.load %arg3[%c0_2, %c0_3, %c0_4] : memref<1x1x32xf32, #tpu.memory_space<vmem>>, vector<1x1x32xf32>
    %5 = vector.shape_cast %4 : vector<1x1x32xf32> to vector<1x32xf32>
    %c0_5 = arith.constant 0 : index
    %c0_6 = arith.constant 0 : index
    %c0_7 = arith.constant 0 : index
    %6 = vector.load %arg4[%c0_5, %c0_6, %c0_7] : memref<1x1x32xf32, #tpu.memory_space<vmem>>, vector<1x1x32xf32>
    %7 = vector.shape_cast %6 : vector<1x1x32xf32> to vector<1x32xf32>
    %cst = arith.constant dense<0.000000e+00> : vector<16xf32>
    %8 = vector.multi_reduction <add>, %3, %cst [1] : vector<16x32xf32> to vector<16xf32>
    %9 = vector.shape_cast %8 : vector<16xf32> to vector<16x1xf32>
    %cst_8 = arith.constant 3.200000e+01 : f32
    %10 = vector.broadcast %cst_8 : f32 to vector<16x1xf32>
    %11 = arith.divf %9, %10 : vector<16x1xf32>
    %12 = arith.mulf %3, %3 : vector<16x32xf32>
    %cst_9 = arith.constant dense<0.000000e+00> : vector<16xf32>
    %13 = vector.multi_reduction <add>, %12, %cst_9 [1] : vector<16x32xf32> to vector<16xf32>
    %14 = vector.shape_cast %13 : vector<16xf32> to vector<16x1xf32>
    %cst_10 = arith.constant 3.200000e+01 : f32
    %15 = vector.broadcast %cst_10 : f32 to vector<16x1xf32>
    %16 = arith.divf %14, %15 : vector<16x1xf32>
    %17 = arith.mulf %11, %11 : vector<16x1xf32>
    %18 = arith.subf %16, %17 : vector<16x1xf32>
    %19 = vector.broadcast %11 : vector<16x1xf32> to vector<16x32xf32>
    %20 = arith.subf %3, %19 : vector<16x32xf32>
    %cst_11 = arith.constant 9.99999974E-6 : f32
    %21 = vector.broadcast %cst_11 : f32 to vector<16x1xf32>
    %22 = arith.addf %18, %21 : vector<16x1xf32>
    %23 = math.rsqrt %22 : vector<16x1xf32>
    %24 = vector.broadcast %23 : vector<16x1xf32> to vector<16x32xf32>
    %25 = arith.mulf %20, %24 : vector<16x32xf32>
    %26 = vector.broadcast %5 : vector<1x32xf32> to vector<16x32xf32>
    %27 = arith.mulf %25, %26 : vector<16x32xf32>
    %28 = vector.broadcast %7 : vector<1x32xf32> to vector<16x32xf32>
    %29 = arith.addf %27, %28 : vector<16x32xf32>
    %c0_12 = arith.constant 0 : index
    %c0_13 = arith.constant 0 : index
    %c0_14 = arith.constant 0 : index
    %30 = vector.load %arg5[%c0_12, %c0_13, %c0_14] : memref<1x32x32xf32, #tpu.memory_space<vmem>>, vector<1x32x32xf32>
    %31 = vector.shape_cast %30 : vector<1x32x32xf32> to vector<32x32xf32>
    %c0_15 = arith.constant 0 : index
    %c0_16 = arith.constant 0 : index
    %c0_17 = arith.constant 0 : index
    %32 = vector.load %arg7[%c0_15, %c0_16, %c0_17] : memref<1x32x32xf32, #tpu.memory_space<vmem>>, vector<1x32x32xf32>
    %33 = vector.shape_cast %32 : vector<1x32x32xf32> to vector<32x32xf32>
    %c0_18 = arith.constant 0 : index
    %c0_19 = arith.constant 0 : index
    %c0_20 = arith.constant 0 : index
    %34 = vector.load %arg9[%c0_18, %c0_19, %c0_20] : memref<1x32x32xf32, #tpu.memory_space<vmem>>, vector<1x32x32xf32>
    %35 = vector.shape_cast %34 : vector<1x32x32xf32> to vector<32x32xf32>
    %c0_21 = arith.constant 0 : index
    %c0_22 = arith.constant 0 : index
    %c0_23 = arith.constant 0 : index
    %36 = vector.load %arg11[%c0_21, %c0_22, %c0_23] : memref<1x32x32xf32, #tpu.memory_space<vmem>>, vector<1x32x32xf32>
    %37 = vector.shape_cast %36 : vector<1x32x32xf32> to vector<32x32xf32>
    %c0_24 = arith.constant 0 : index
    %c0_25 = arith.constant 0 : index
    %c0_26 = arith.constant 0 : index
    %38 = vector.load %arg6[%c0_24, %c0_25, %c0_26] : memref<1x1x32xf32, #tpu.memory_space<vmem>>, vector<1x1x32xf32>
    %39 = vector.shape_cast %38 : vector<1x1x32xf32> to vector<1x32xf32>
    %c0_27 = arith.constant 0 : index
    %c0_28 = arith.constant 0 : index
    %c0_29 = arith.constant 0 : index
    %40 = vector.load %arg8[%c0_27, %c0_28, %c0_29] : memref<1x1x32xf32, #tpu.memory_space<vmem>>, vector<1x1x32xf32>
    %41 = vector.shape_cast %40 : vector<1x1x32xf32> to vector<1x32xf32>
    %c0_30 = arith.constant 0 : index
    %c0_31 = arith.constant 0 : index
    %c0_32 = arith.constant 0 : index
    %42 = vector.load %arg10[%c0_30, %c0_31, %c0_32] : memref<1x1x32xf32, #tpu.memory_space<vmem>>, vector<1x1x32xf32>
    %43 = vector.shape_cast %42 : vector<1x1x32xf32> to vector<1x32xf32>
    %c0_33 = arith.constant 0 : index
    %c0_34 = arith.constant 0 : index
    %c0_35 = arith.constant 0 : index
    %44 = vector.load %arg12[%c0_33, %c0_34, %c0_35] : memref<1x1x32xf32, #tpu.memory_space<vmem>>, vector<1x1x32xf32>
    %45 = vector.shape_cast %44 : vector<1x1x32xf32> to vector<1x32xf32>
    %46 = vector.broadcast %45 : vector<1x32xf32> to vector<16x32xf32>
    %47 = arith.addf %3, %46 : vector<16x32xf32>
    %48 = vector.extract_strided_slice %31 {offsets = [0, 0], sizes = [32, 8], strides = [1, 1]} : vector<32x32xf32> to vector<32x8xf32>
    %cst_36 = arith.constant dense<0.000000e+00> : vector<16x8xf32>
    %49 = tpu.matmul %29, %48, %cst_36 {dimension_numbers = #tpu.dot_dimension_numbers<[1], [0], [0], [1], [0, 0, 1, 1], [], []>} : vector<16x32xf32>, vector<32x8xf32>, vector<16x8xf32> -> vector<16x8xf32>
    %50 = vector.extract_strided_slice %39 {offsets = [0, 0], sizes = [1, 8], strides = [1, 1]} : vector<1x32xf32> to vector<1x8xf32>
    %51 = vector.broadcast %50 : vector<1x8xf32> to vector<16x8xf32>
    %52 = arith.addf %49, %51 : vector<16x8xf32>
    %53 = vector.extract_strided_slice %33 {offsets = [0, 0], sizes = [32, 8], strides = [1, 1]} : vector<32x32xf32> to vector<32x8xf32>
    %cst_37 = arith.constant dense<0.000000e+00> : vector<16x8xf32>
    %54 = tpu.matmul %29, %53, %cst_37 {dimension_numbers = #tpu.dot_dimension_numbers<[1], [0], [0], [1], [0, 0, 1, 1], [], []>} : vector<16x32xf32>, vector<32x8xf32>, vector<16x8xf32> -> vector<16x8xf32>
    %55 = vector.extract_strided_slice %41 {offsets = [0, 0], sizes = [1, 8], strides = [1, 1]} : vector<1x32xf32> to vector<1x8xf32>
    %56 = vector.broadcast %55 : vector<1x8xf32> to vector<16x8xf32>
    %57 = arith.addf %54, %56 : vector<16x8xf32>
    %58 = vector.extract_strided_slice %35 {offsets = [0, 0], sizes = [32, 8], strides = [1, 1]} : vector<32x32xf32> to vector<32x8xf32>
    %cst_38 = arith.constant dense<0.000000e+00> : vector<16x8xf32>
    %59 = tpu.matmul %29, %58, %cst_38 {dimension_numbers = #tpu.dot_dimension_numbers<[1], [0], [0], [1], [0, 0, 1, 1], [], []>} : vector<16x32xf32>, vector<32x8xf32>, vector<16x8xf32> -> vector<16x8xf32>
    %60 = vector.extract_strided_slice %43 {offsets = [0, 0], sizes = [1, 8], strides = [1, 1]} : vector<1x32xf32> to vector<1x8xf32>
    %61 = vector.broadcast %60 : vector<1x8xf32> to vector<16x8xf32>
    %62 = arith.addf %59, %61 : vector<16x8xf32>
    %cst_39 = arith.constant 0.353553385 : f32
    %63 = vector.broadcast %cst_39 : f32 to vector<16x8xf32>
    %64 = arith.mulf %52, %63 : vector<16x8xf32>
    %65 = vector.shape_cast %64 : vector<16x8xf32> to vector<2x8x8xf32>
    %66 = vector.shape_cast %57 : vector<16x8xf32> to vector<2x8x8xf32>
    %67 = vector.shape_cast %62 : vector<16x8xf32> to vector<2x8x8xf32>
    "tpu.trace_start"() <{level = 10 : i32, message = "bqd,bkd->bqk"}> : () -> ()
    %cst_40 = arith.constant dense<0.000000e+00> : vector<2x8x8xf32>
    %68 = tpu.matmul %65, %66, %cst_40 {dimension_numbers = #tpu.dot_dimension_numbers<[2], [2], [1], [1], [0, 0, 0, 1, 1, 1], [0], [0]>} : vector<2x8x8xf32>, vector<2x8x8xf32>, vector<2x8x8xf32> -> vector<2x8x8xf32>
    "tpu.trace_stop"() : () -> ()
    %cst_41 = arith.constant dense<0xFF800000> : vector<2x8xf32>
    %69 = vector.multi_reduction <maximumf>, %68, %cst_41 [2] : vector<2x8x8xf32> to vector<2x8xf32>
    %70 = vector.shape_cast %69 : vector<2x8xf32> to vector<2x8x1xf32>
    %71 = vector.broadcast %70 : vector<2x8x1xf32> to vector<2x8x8xf32>
    %72 = arith.subf %68, %71 : vector<2x8x8xf32>
    %73 = math.exp %72 : vector<2x8x8xf32>
    %cst_42 = arith.constant dense<0.000000e+00> : vector<2x8xf32>
    %74 = vector.multi_reduction <add>, %73, %cst_42 [2] : vector<2x8x8xf32> to vector<2x8xf32>
    %75 = vector.shape_cast %74 : vector<2x8xf32> to vector<2x8x1xf32>
    %76 = vector.broadcast %75 : vector<2x8x1xf32> to vector<2x8x8xf32>
    %77 = arith.divf %73, %76 : vector<2x8x8xf32>
    "tpu.trace_start"() <{level = 10 : i32, message = "bqk,bkd->bqd"}> : () -> ()
    %cst_43 = arith.constant dense<0.000000e+00> : vector<2x8x8xf32>
    %78 = tpu.matmul %77, %67, %cst_43 {dimension_numbers = #tpu.dot_dimension_numbers<[2], [1], [1], [2], [0, 0, 0, 1, 1, 2], [0], [0]>} : vector<2x8x8xf32>, vector<2x8x8xf32>, vector<2x8x8xf32> -> vector<2x8x8xf32>
    "tpu.trace_stop"() : () -> ()
    %79 = vector.shape_cast %78 : vector<2x8x8xf32> to vector<16x8xf32>
    %80 = vector.extract_strided_slice %37 {offsets = [0, 0], sizes = [8, 32], strides = [1, 1]} : vector<32x32xf32> to vector<8x32xf32>
    %cst_44 = arith.constant dense<0.000000e+00> : vector<16x32xf32>
    %81 = tpu.matmul %79, %80, %cst_44 {dimension_numbers = #tpu.dot_dimension_numbers<[1], [0], [0], [1], [0, 0, 1, 1], [], []>} : vector<16x8xf32>, vector<8x32xf32>, vector<16x32xf32> -> vector<16x32xf32>
    %82 = arith.addf %47, %81 : vector<16x32xf32>
    %83 = vector.extract_strided_slice %31 {offsets = [0, 8], sizes = [32, 8], strides = [1, 1]} : vector<32x32xf32> to vector<32x8xf32>
    %cst_45 = arith.constant dense<0.000000e+00> : vector<16x8xf32>
    %84 = tpu.matmul %29, %83, %cst_45 {dimension_numbers = #tpu.dot_dimension_numbers<[1], [0], [0], [1], [0, 0, 1, 1], [], []>} : vector<16x32xf32>, vector<32x8xf32>, vector<16x8xf32> -> vector<16x8xf32>
    %85 = vector.extract_strided_slice %39 {offsets = [0, 8], sizes = [1, 8], strides = [1, 1]} : vector<1x32xf32> to vector<1x8xf32>
    %86 = vector.broadcast %85 : vector<1x8xf32> to vector<16x8xf32>
    %87 = arith.addf %84, %86 : vector<16x8xf32>
    %88 = vector.extract_strided_slice %33 {offsets = [0, 8], sizes = [32, 8], strides = [1, 1]} : vector<32x32xf32> to vector<32x8xf32>
    %cst_46 = arith.constant dense<0.000000e+00> : vector<16x8xf32>
    %89 = tpu.matmul %29, %88, %cst_46 {dimension_numbers = #tpu.dot_dimension_numbers<[1], [0], [0], [1], [0, 0, 1, 1], [], []>} : vector<16x32xf32>, vector<32x8xf32>, vector<16x8xf32> -> vector<16x8xf32>
    %90 = vector.extract_strided_slice %41 {offsets = [0, 8], sizes = [1, 8], strides = [1, 1]} : vector<1x32xf32> to vector<1x8xf32>
    %91 = vector.broadcast %90 : vector<1x8xf32> to vector<16x8xf32>
    %92 = arith.addf %89, %91 : vector<16x8xf32>
    %93 = vector.extract_strided_slice %35 {offsets = [0, 8], sizes = [32, 8], strides = [1, 1]} : vector<32x32xf32> to vector<32x8xf32>
    %cst_47 = arith.constant dense<0.000000e+00> : vector<16x8xf32>
    %94 = tpu.matmul %29, %93, %cst_47 {dimension_numbers = #tpu.dot_dimension_numbers<[1], [0], [0], [1], [0, 0, 1, 1], [], []>} : vector<16x32xf32>, vector<32x8xf32>, vector<16x8xf32> -> vector<16x8xf32>
    %95 = vector.extract_strided_slice %43 {offsets = [0, 8], sizes = [1, 8], strides = [1, 1]} : vector<1x32xf32> to vector<1x8xf32>
    %96 = vector.broadcast %95 : vector<1x8xf32> to vector<16x8xf32>
    %97 = arith.addf %94, %96 : vector<16x8xf32>
    %cst_48 = arith.constant 0.353553385 : f32
    %98 = vector.broadcast %cst_48 : f32 to vector<16x8xf32>
    %99 = arith.mulf %87, %98 : vector<16x8xf32>
    %100 = vector.shape_cast %99 : vector<16x8xf32> to vector<2x8x8xf32>
    %101 = vector.shape_cast %92 : vector<16x8xf32> to vector<2x8x8xf32>
    %102 = vector.shape_cast %97 : vector<16x8xf32> to vector<2x8x8xf32>
    "tpu.trace_start"() <{level = 10 : i32, message = "bqd,bkd->bqk"}> : () -> ()
    %cst_49 = arith.constant dense<0.000000e+00> : vector<2x8x8xf32>
    %103 = tpu.matmul %100, %101, %cst_49 {dimension_numbers = #tpu.dot_dimension_numbers<[2], [2], [1], [1], [0, 0, 0, 1, 1, 1], [0], [0]>} : vector<2x8x8xf32>, vector<2x8x8xf32>, vector<2x8x8xf32> -> vector<2x8x8xf32>
    "tpu.trace_stop"() : () -> ()
    %cst_50 = arith.constant dense<0xFF800000> : vector<2x8xf32>
    %104 = vector.multi_reduction <maximumf>, %103, %cst_50 [2] : vector<2x8x8xf32> to vector<2x8xf32>
    %105 = vector.shape_cast %104 : vector<2x8xf32> to vector<2x8x1xf32>
    %106 = vector.broadcast %105 : vector<2x8x1xf32> to vector<2x8x8xf32>
    %107 = arith.subf %103, %106 : vector<2x8x8xf32>
    %108 = math.exp %107 : vector<2x8x8xf32>
    %cst_51 = arith.constant dense<0.000000e+00> : vector<2x8xf32>
    %109 = vector.multi_reduction <add>, %108, %cst_51 [2] : vector<2x8x8xf32> to vector<2x8xf32>
    %110 = vector.shape_cast %109 : vector<2x8xf32> to vector<2x8x1xf32>
    %111 = vector.broadcast %110 : vector<2x8x1xf32> to vector<2x8x8xf32>
    %112 = arith.divf %108, %111 : vector<2x8x8xf32>
    "tpu.trace_start"() <{level = 10 : i32, message = "bqk,bkd->bqd"}> : () -> ()
    %cst_52 = arith.constant dense<0.000000e+00> : vector<2x8x8xf32>
    %113 = tpu.matmul %112, %102, %cst_52 {dimension_numbers = #tpu.dot_dimension_numbers<[2], [1], [1], [2], [0, 0, 0, 1, 1, 2], [0], [0]>} : vector<2x8x8xf32>, vector<2x8x8xf32>, vector<2x8x8xf32> -> vector<2x8x8xf32>
    "tpu.trace_stop"() : () -> ()
    %114 = vector.shape_cast %113 : vector<2x8x8xf32> to vector<16x8xf32>
    %115 = vector.extract_strided_slice %37 {offsets = [8, 0], sizes = [8, 32], strides = [1, 1]} : vector<32x32xf32> to vector<8x32xf32>
    %cst_53 = arith.constant dense<0.000000e+00> : vector<16x32xf32>
    %116 = tpu.matmul %114, %115, %cst_53 {dimension_numbers = #tpu.dot_dimension_numbers<[1], [0], [0], [1], [0, 0, 1, 1], [], []>} : vector<16x8xf32>, vector<8x32xf32>, vector<16x32xf32> -> vector<16x32xf32>
    %117 = arith.addf %82, %116 : vector<16x32xf32>
    %118 = vector.extract_strided_slice %31 {offsets = [0, 16], sizes = [32, 8], strides = [1, 1]} : vector<32x32xf32> to vector<32x8xf32>
    %cst_54 = arith.constant dense<0.000000e+00> : vector<16x8xf32>
    %119 = tpu.matmul %29, %118, %cst_54 {dimension_numbers = #tpu.dot_dimension_numbers<[1], [0], [0], [1], [0, 0, 1, 1], [], []>} : vector<16x32xf32>, vector<32x8xf32>, vector<16x8xf32> -> vector<16x8xf32>
    %120 = vector.extract_strided_slice %39 {offsets = [0, 16], sizes = [1, 8], strides = [1, 1]} : vector<1x32xf32> to vector<1x8xf32>
    %121 = vector.broadcast %120 : vector<1x8xf32> to vector<16x8xf32>
    %122 = arith.addf %119, %121 : vector<16x8xf32>
    %123 = vector.extract_strided_slice %33 {offsets = [0, 16], sizes = [32, 8], strides = [1, 1]} : vector<32x32xf32> to vector<32x8xf32>
    %cst_55 = arith.constant dense<0.000000e+00> : vector<16x8xf32>
    %124 = tpu.matmul %29, %123, %cst_55 {dimension_numbers = #tpu.dot_dimension_numbers<[1], [0], [0], [1], [0, 0, 1, 1], [], []>} : vector<16x32xf32>, vector<32x8xf32>, vector<16x8xf32> -> vector<16x8xf32>
    %125 = vector.extract_strided_slice %41 {offsets = [0, 16], sizes = [1, 8], strides = [1, 1]} : vector<1x32xf32> to vector<1x8xf32>
    %126 = vector.broadcast %125 : vector<1x8xf32> to vector<16x8xf32>
    %127 = arith.addf %124, %126 : vector<16x8xf32>
    %128 = vector.extract_strided_slice %35 {offsets = [0, 16], sizes = [32, 8], strides = [1, 1]} : vector<32x32xf32> to vector<32x8xf32>
    %cst_56 = arith.constant dense<0.000000e+00> : vector<16x8xf32>
    %129 = tpu.matmul %29, %128, %cst_56 {dimension_numbers = #tpu.dot_dimension_numbers<[1], [0], [0], [1], [0, 0, 1, 1], [], []>} : vector<16x32xf32>, vector<32x8xf32>, vector<16x8xf32> -> vector<16x8xf32>
    %130 = vector.extract_strided_slice %43 {offsets = [0, 16], sizes = [1, 8], strides = [1, 1]} : vector<1x32xf32> to vector<1x8xf32>
    %131 = vector.broadcast %130 : vector<1x8xf32> to vector<16x8xf32>
    %132 = arith.addf %129, %131 : vector<16x8xf32>
    %cst_57 = arith.constant 0.353553385 : f32
    %133 = vector.broadcast %cst_57 : f32 to vector<16x8xf32>
    %134 = arith.mulf %122, %133 : vector<16x8xf32>
    %135 = vector.shape_cast %134 : vector<16x8xf32> to vector<2x8x8xf32>
    %136 = vector.shape_cast %127 : vector<16x8xf32> to vector<2x8x8xf32>
    %137 = vector.shape_cast %132 : vector<16x8xf32> to vector<2x8x8xf32>
    "tpu.trace_start"() <{level = 10 : i32, message = "bqd,bkd->bqk"}> : () -> ()
    %cst_58 = arith.constant dense<0.000000e+00> : vector<2x8x8xf32>
    %138 = tpu.matmul %135, %136, %cst_58 {dimension_numbers = #tpu.dot_dimension_numbers<[2], [2], [1], [1], [0, 0, 0, 1, 1, 1], [0], [0]>} : vector<2x8x8xf32>, vector<2x8x8xf32>, vector<2x8x8xf32> -> vector<2x8x8xf32>
    "tpu.trace_stop"() : () -> ()
    %cst_59 = arith.constant dense<0xFF800000> : vector<2x8xf32>
    %139 = vector.multi_reduction <maximumf>, %138, %cst_59 [2] : vector<2x8x8xf32> to vector<2x8xf32>
    %140 = vector.shape_cast %139 : vector<2x8xf32> to vector<2x8x1xf32>
    %141 = vector.broadcast %140 : vector<2x8x1xf32> to vector<2x8x8xf32>
    %142 = arith.subf %138, %141 : vector<2x8x8xf32>
    %143 = math.exp %142 : vector<2x8x8xf32>
    %cst_60 = arith.constant dense<0.000000e+00> : vector<2x8xf32>
    %144 = vector.multi_reduction <add>, %143, %cst_60 [2] : vector<2x8x8xf32> to vector<2x8xf32>
    %145 = vector.shape_cast %144 : vector<2x8xf32> to vector<2x8x1xf32>
    %146 = vector.broadcast %145 : vector<2x8x1xf32> to vector<2x8x8xf32>
    %147 = arith.divf %143, %146 : vector<2x8x8xf32>
    "tpu.trace_start"() <{level = 10 : i32, message = "bqk,bkd->bqd"}> : () -> ()
    %cst_61 = arith.constant dense<0.000000e+00> : vector<2x8x8xf32>
    %148 = tpu.matmul %147, %137, %cst_61 {dimension_numbers = #tpu.dot_dimension_numbers<[2], [1], [1], [2], [0, 0, 0, 1, 1, 2], [0], [0]>} : vector<2x8x8xf32>, vector<2x8x8xf32>, vector<2x8x8xf32> -> vector<2x8x8xf32>
    "tpu.trace_stop"() : () -> ()
    %149 = vector.shape_cast %148 : vector<2x8x8xf32> to vector<16x8xf32>
    %150 = vector.extract_strided_slice %37 {offsets = [16, 0], sizes = [8, 32], strides = [1, 1]} : vector<32x32xf32> to vector<8x32xf32>
    %cst_62 = arith.constant dense<0.000000e+00> : vector<16x32xf32>
    %151 = tpu.matmul %149, %150, %cst_62 {dimension_numbers = #tpu.dot_dimension_numbers<[1], [0], [0], [1], [0, 0, 1, 1], [], []>} : vector<16x8xf32>, vector<8x32xf32>, vector<16x32xf32> -> vector<16x32xf32>
    %152 = arith.addf %117, %151 : vector<16x32xf32>
    %153 = vector.extract_strided_slice %31 {offsets = [0, 24], sizes = [32, 8], strides = [1, 1]} : vector<32x32xf32> to vector<32x8xf32>
    %cst_63 = arith.constant dense<0.000000e+00> : vector<16x8xf32>
    %154 = tpu.matmul %29, %153, %cst_63 {dimension_numbers = #tpu.dot_dimension_numbers<[1], [0], [0], [1], [0, 0, 1, 1], [], []>} : vector<16x32xf32>, vector<32x8xf32>, vector<16x8xf32> -> vector<16x8xf32>
    %155 = vector.extract_strided_slice %39 {offsets = [0, 24], sizes = [1, 8], strides = [1, 1]} : vector<1x32xf32> to vector<1x8xf32>
    %156 = vector.broadcast %155 : vector<1x8xf32> to vector<16x8xf32>
    %157 = arith.addf %154, %156 : vector<16x8xf32>
    %158 = vector.extract_strided_slice %33 {offsets = [0, 24], sizes = [32, 8], strides = [1, 1]} : vector<32x32xf32> to vector<32x8xf32>
    %cst_64 = arith.constant dense<0.000000e+00> : vector<16x8xf32>
    %159 = tpu.matmul %29, %158, %cst_64 {dimension_numbers = #tpu.dot_dimension_numbers<[1], [0], [0], [1], [0, 0, 1, 1], [], []>} : vector<16x32xf32>, vector<32x8xf32>, vector<16x8xf32> -> vector<16x8xf32>
    %160 = vector.extract_strided_slice %41 {offsets = [0, 24], sizes = [1, 8], strides = [1, 1]} : vector<1x32xf32> to vector<1x8xf32>
    %161 = vector.broadcast %160 : vector<1x8xf32> to vector<16x8xf32>
    %162 = arith.addf %159, %161 : vector<16x8xf32>
    %163 = vector.extract_strided_slice %35 {offsets = [0, 24], sizes = [32, 8], strides = [1, 1]} : vector<32x32xf32> to vector<32x8xf32>
    %cst_65 = arith.constant dense<0.000000e+00> : vector<16x8xf32>
    %164 = tpu.matmul %29, %163, %cst_65 {dimension_numbers = #tpu.dot_dimension_numbers<[1], [0], [0], [1], [0, 0, 1, 1], [], []>} : vector<16x32xf32>, vector<32x8xf32>, vector<16x8xf32> -> vector<16x8xf32>
    %165 = vector.extract_strided_slice %43 {offsets = [0, 24], sizes = [1, 8], strides = [1, 1]} : vector<1x32xf32> to vector<1x8xf32>
    %166 = vector.broadcast %165 : vector<1x8xf32> to vector<16x8xf32>
    %167 = arith.addf %164, %166 : vector<16x8xf32>
    %cst_66 = arith.constant 0.353553385 : f32
    %168 = vector.broadcast %cst_66 : f32 to vector<16x8xf32>
    %169 = arith.mulf %157, %168 : vector<16x8xf32>
    %170 = vector.shape_cast %169 : vector<16x8xf32> to vector<2x8x8xf32>
    %171 = vector.shape_cast %162 : vector<16x8xf32> to vector<2x8x8xf32>
    %172 = vector.shape_cast %167 : vector<16x8xf32> to vector<2x8x8xf32>
    "tpu.trace_start"() <{level = 10 : i32, message = "bqd,bkd->bqk"}> : () -> ()
    %cst_67 = arith.constant dense<0.000000e+00> : vector<2x8x8xf32>
    %173 = tpu.matmul %170, %171, %cst_67 {dimension_numbers = #tpu.dot_dimension_numbers<[2], [2], [1], [1], [0, 0, 0, 1, 1, 1], [0], [0]>} : vector<2x8x8xf32>, vector<2x8x8xf32>, vector<2x8x8xf32> -> vector<2x8x8xf32>
    "tpu.trace_stop"() : () -> ()
    %cst_68 = arith.constant dense<0xFF800000> : vector<2x8xf32>
    %174 = vector.multi_reduction <maximumf>, %173, %cst_68 [2] : vector<2x8x8xf32> to vector<2x8xf32>
    %175 = vector.shape_cast %174 : vector<2x8xf32> to vector<2x8x1xf32>
    %176 = vector.broadcast %175 : vector<2x8x1xf32> to vector<2x8x8xf32>
    %177 = arith.subf %173, %176 : vector<2x8x8xf32>
    %178 = math.exp %177 : vector<2x8x8xf32>
    %cst_69 = arith.constant dense<0.000000e+00> : vector<2x8xf32>
    %179 = vector.multi_reduction <add>, %178, %cst_69 [2] : vector<2x8x8xf32> to vector<2x8xf32>
    %180 = vector.shape_cast %179 : vector<2x8xf32> to vector<2x8x1xf32>
    %181 = vector.broadcast %180 : vector<2x8x1xf32> to vector<2x8x8xf32>
    %182 = arith.divf %178, %181 : vector<2x8x8xf32>
    "tpu.trace_start"() <{level = 10 : i32, message = "bqk,bkd->bqd"}> : () -> ()
    %cst_70 = arith.constant dense<0.000000e+00> : vector<2x8x8xf32>
    %183 = tpu.matmul %182, %172, %cst_70 {dimension_numbers = #tpu.dot_dimension_numbers<[2], [1], [1], [2], [0, 0, 0, 1, 1, 2], [0], [0]>} : vector<2x8x8xf32>, vector<2x8x8xf32>, vector<2x8x8xf32> -> vector<2x8x8xf32>
    "tpu.trace_stop"() : () -> ()
    %184 = vector.shape_cast %183 : vector<2x8x8xf32> to vector<16x8xf32>
    %185 = vector.extract_strided_slice %37 {offsets = [24, 0], sizes = [8, 32], strides = [1, 1]} : vector<32x32xf32> to vector<8x32xf32>
    %cst_71 = arith.constant dense<0.000000e+00> : vector<16x32xf32>
    %186 = tpu.matmul %184, %185, %cst_71 {dimension_numbers = #tpu.dot_dimension_numbers<[1], [0], [0], [1], [0, 0, 1, 1], [], []>} : vector<16x8xf32>, vector<8x32xf32>, vector<16x32xf32> -> vector<16x32xf32>
    %187 = arith.addf %152, %186 : vector<16x32xf32>
    %c0_72 = arith.constant 0 : index
    %c0_73 = arith.constant 0 : index
    %c0_74 = arith.constant 0 : index
    %188 = vector.load %arg13[%c0_72, %c0_73, %c0_74] : memref<1x1x32xf32, #tpu.memory_space<vmem>>, vector<1x1x32xf32>
    %189 = vector.shape_cast %188 : vector<1x1x32xf32> to vector<1x32xf32>
    %c0_75 = arith.constant 0 : index
    %c0_76 = arith.constant 0 : index
    %c0_77 = arith.constant 0 : index
    %190 = vector.load %arg14[%c0_75, %c0_76, %c0_77] : memref<1x1x32xf32, #tpu.memory_space<vmem>>, vector<1x1x32xf32>
    %191 = vector.shape_cast %190 : vector<1x1x32xf32> to vector<1x32xf32>
    %cst_78 = arith.constant dense<0.000000e+00> : vector<16xf32>
    %192 = vector.multi_reduction <add>, %187, %cst_78 [1] : vector<16x32xf32> to vector<16xf32>
    %193 = vector.shape_cast %192 : vector<16xf32> to vector<16x1xf32>
    %cst_79 = arith.constant 3.200000e+01 : f32
    %194 = vector.broadcast %cst_79 : f32 to vector<16x1xf32>
    %195 = arith.divf %193, %194 : vector<16x1xf32>
    %196 = arith.mulf %187, %187 : vector<16x32xf32>
    %cst_80 = arith.constant dense<0.000000e+00> : vector<16xf32>
    %197 = vector.multi_reduction <add>, %196, %cst_80 [1] : vector<16x32xf32> to vector<16xf32>
    %198 = vector.shape_cast %197 : vector<16xf32> to vector<16x1xf32>
    %cst_81 = arith.constant 3.200000e+01 : f32
    %199 = vector.broadcast %cst_81 : f32 to vector<16x1xf32>
    %200 = arith.divf %198, %199 : vector<16x1xf32>
    %201 = arith.mulf %195, %195 : vector<16x1xf32>
    %202 = arith.subf %200, %201 : vector<16x1xf32>
    %203 = vector.broadcast %195 : vector<16x1xf32> to vector<16x32xf32>
    %204 = arith.subf %187, %203 : vector<16x32xf32>
    %cst_82 = arith.constant 9.99999974E-6 : f32
    %205 = vector.broadcast %cst_82 : f32 to vector<16x1xf32>
    %206 = arith.addf %202, %205 : vector<16x1xf32>
    %207 = math.rsqrt %206 : vector<16x1xf32>
    %208 = vector.broadcast %207 : vector<16x1xf32> to vector<16x32xf32>
    %209 = arith.mulf %204, %208 : vector<16x32xf32>
    %210 = vector.broadcast %189 : vector<1x32xf32> to vector<16x32xf32>
    %211 = arith.mulf %209, %210 : vector<16x32xf32>
    %212 = vector.broadcast %191 : vector<1x32xf32> to vector<16x32xf32>
    %213 = arith.addf %211, %212 : vector<16x32xf32>
    %c0_83 = arith.constant 0 : index
    %c0_84 = arith.constant 0 : index
    %c0_85 = arith.constant 0 : index
    %214 = vector.load %arg15[%c0_83, %c0_84, %c0_85] : memref<1x32x64xf32, #tpu.memory_space<vmem>>, vector<1x32x64xf32>
    %215 = vector.shape_cast %214 : vector<1x32x64xf32> to vector<32x64xf32>
    %cst_86 = arith.constant dense<0.000000e+00> : vector<16x64xf32>
    %216 = tpu.matmul %213, %215, %cst_86 {dimension_numbers = #tpu.dot_dimension_numbers<[1], [0], [0], [1], [0, 0, 1, 1], [], []>} : vector<16x32xf32>, vector<32x64xf32>, vector<16x64xf32> -> vector<16x64xf32>
    %c0_87 = arith.constant 0 : index
    %c0_88 = arith.constant 0 : index
    %c0_89 = arith.constant 0 : index
    %217 = vector.load %arg16[%c0_87, %c0_88, %c0_89] : memref<1x1x64xf32, #tpu.memory_space<vmem>>, vector<1x1x64xf32>
    %218 = vector.shape_cast %217 : vector<1x1x64xf32> to vector<1x64xf32>
    %219 = vector.broadcast %218 : vector<1x64xf32> to vector<16x64xf32>
    %220 = arith.addf %216, %219 : vector<16x64xf32>
    %cst_90 = arith.constant 0.000000e+00 : f32
    %221 = vector.broadcast %cst_90 : f32 to vector<16x64xf32>
    %222 = arith.maximumf %220, %221 : vector<16x64xf32>
    %c0_91 = arith.constant 0 : index
    %c0_92 = arith.constant 0 : index
    %c0_93 = arith.constant 0 : index
    %223 = vector.load %arg17[%c0_91, %c0_92, %c0_93] : memref<1x64x32xf32, #tpu.memory_space<vmem>>, vector<1x64x32xf32>
    %224 = vector.shape_cast %223 : vector<1x64x32xf32> to vector<64x32xf32>
    %cst_94 = arith.constant dense<0.000000e+00> : vector<16x32xf32>
    %225 = tpu.matmul %222, %224, %cst_94 {dimension_numbers = #tpu.dot_dimension_numbers<[1], [0], [0], [1], [0, 0, 1, 1], [], []>} : vector<16x64xf32>, vector<64x32xf32>, vector<16x32xf32> -> vector<16x32xf32>
    %226 = arith.addf %187, %225 : vector<16x32xf32>
    %c0_95 = arith.constant 0 : index
    %c0_96 = arith.constant 0 : index
    %c0_97 = arith.constant 0 : index
    %227 = vector.load %arg18[%c0_95, %c0_96, %c0_97] : memref<1x1x32xf32, #tpu.memory_space<vmem>>, vector<1x1x32xf32>
    %228 = vector.shape_cast %227 : vector<1x1x32xf32> to vector<1x32xf32>
    %229 = vector.broadcast %228 : vector<1x32xf32> to vector<16x32xf32>
    %230 = arith.addf %226, %229 : vector<16x32xf32>
    %c1_i32 = arith.constant 1 : i32
    %231 = arith.cmpi slt, %arg1, %c1_i32 : i32
    %232 = arith.extui %231 : i1 to i32
    %c0_i32_98 = arith.constant 0 : i32
    %233 = arith.cmpi ne, %232, %c0_i32_98 : i32
    scf.if %233 {
      %c0_101 = arith.constant 0 : index
      %c0_102 = arith.constant 0 : index
      %237 = vector.load %arg21[%c0_101, %c0_102] : memref<16x32xf32, #tpu.memory_space<vmem>>, vector<16x32xf32>
      tpu.vector_store %arg21[%c0_101, %c0_102], %230 {strides = array<i32>} : memref<16x32xf32, #tpu.memory_space<vmem>>, vector<16x32xf32>,
    } else {
    }
    %c1_i32_99 = arith.constant 1 : i32
    %234 = arith.cmpi eq, %arg1, %c1_i32_99 : i32
    %235 = arith.extui %234 : i1 to i32
    %c0_i32_100 = arith.constant 0 : i32
    %236 = arith.cmpi ne, %235, %c0_i32_100 : i32
    scf.if %236 {
      %c0_101 = arith.constant 0 : index
      %c0_102 = arith.constant 0 : index
      %237 = vector.load %arg19[%c0_101, %c0_102] : memref<1x32xf32, #tpu.memory_space<vmem>>, vector<1x32xf32>
      %c0_103 = arith.constant 0 : index
      %c0_104 = arith.constant 0 : index
      %238 = vector.load %arg20[%c0_103, %c0_104] : memref<1x32xf32, #tpu.memory_space<vmem>>, vector<1x32xf32>
      %cst_105 = arith.constant dense<0.000000e+00> : vector<16xf32>
      %239 = vector.multi_reduction <add>, %230, %cst_105 [1] : vector<16x32xf32> to vector<16xf32>
      %240 = vector.shape_cast %239 : vector<16xf32> to vector<16x1xf32>
      %cst_106 = arith.constant 3.200000e+01 : f32
      %241 = vector.broadcast %cst_106 : f32 to vector<16x1xf32>
      %242 = arith.divf %240, %241 : vector<16x1xf32>
      %243 = arith.mulf %230, %230 : vector<16x32xf32>
      %cst_107 = arith.constant dense<0.000000e+00> : vector<16xf32>
      %244 = vector.multi_reduction <add>, %243, %cst_107 [1] : vector<16x32xf32> to vector<16xf32>
      %245 = vector.shape_cast %244 : vector<16xf32> to vector<16x1xf32>
      %cst_108 = arith.constant 3.200000e+01 : f32
      %246 = vector.broadcast %cst_108 : f32 to vector<16x1xf32>
      %247 = arith.divf %245, %246 : vector<16x1xf32>
      %248 = arith.mulf %242, %242 : vector<16x1xf32>
      %249 = arith.subf %247, %248 : vector<16x1xf32>
      %250 = vector.broadcast %242 : vector<16x1xf32> to vector<16x32xf32>
      %251 = arith.subf %230, %250 : vector<16x32xf32>
      %cst_109 = arith.constant 9.99999974E-6 : f32
      %252 = vector.broadcast %cst_109 : f32 to vector<16x1xf32>
      %253 = arith.addf %249, %252 : vector<16x1xf32>
      %254 = math.rsqrt %253 : vector<16x1xf32>
      %255 = vector.broadcast %254 : vector<16x1xf32> to vector<16x32xf32>
      %256 = arith.mulf %251, %255 : vector<16x32xf32>
      %257 = vector.broadcast %237 : vector<1x32xf32> to vector<16x32xf32>
      %258 = arith.mulf %256, %257 : vector<16x32xf32>
      %259 = vector.broadcast %238 : vector<1x32xf32> to vector<16x32xf32>
      %260 = arith.addf %258, %259 : vector<16x32xf32>
      %c0_110 = arith.constant 0 : index
      %c0_111 = arith.constant 0 : index
      %261 = vector.load %arg21[%c0_110, %c0_111] : memref<16x32xf32, #tpu.memory_space<vmem>>, vector<16x32xf32>
      tpu.vector_store %arg21[%c0_110, %c0_111], %260 {strides = array<i32>} : memref<16x32xf32, #tpu.memory_space<vmem>>, vector<16x32xf32>,
    } else {
    }
    return
  }
  func.func @transform_0(%arg0: i32, %arg1: i32) -> (i32, i32) {
    %c0_i32 = arith.constant 0 : i32
    %c0_i32_0 = arith.constant 0 : i32
    return %arg0, %c0_i32 : i32, i32
  }
  func.func @transform_1(%arg0: i32, %arg1: i32) -> (i32, i32, i32) {
    %c0_i32 = arith.constant 0 : i32
    %c0_i32_0 = arith.constant 0 : i32
    %c0_i32_1 = arith.constant 0 : i32
    return %arg1, %c0_i32, %c0_i32_0 : i32, i32, i32
  }
  func.func @transform_2(%arg0: i32, %arg1: i32) -> (i32, i32, i32) {
    %c0_i32 = arith.constant 0 : i32
    %c0_i32_0 = arith.constant 0 : i32
    %c0_i32_1 = arith.constant 0 : i32
    return %arg1, %c0_i32, %c0_i32_0 : i32, i32, i32
  }
  func.func @transform_3(%arg0: i32, %arg1: i32) -> (i32, i32, i32) {
    %c0_i32 = arith.constant 0 : i32
    %c0_i32_0 = arith.constant 0 : i32
    %c0_i32_1 = arith.constant 0 : i32
    return %arg1, %c0_i32, %c0_i32_0 : i32, i32, i32
  }
  func.func @transform_4(%arg0: i32, %arg1: i32) -> (i32, i32, i32) {
    %c0_i32 = arith.constant 0 : i32
    %c0_i32_0 = arith.constant 0 : i32
    %c0_i32_1 = arith.constant 0 : i32
    return %arg1, %c0_i32, %c0_i32_0 : i32, i32, i32
  }
  func.func @transform_5(%arg0: i32, %arg1: i32) -> (i32, i32, i32) {
    %c0_i32 = arith.constant 0 : i32
    %c0_i32_0 = arith.constant 0 : i32
    %c0_i32_1 = arith.constant 0 : i32
    return %arg1, %c0_i32, %c0_i32_0 : i32, i32, i32
  }
  func.func @transform_6(%arg0: i32, %arg1: i32) -> (i32, i32, i32) {
    %c0_i32 = arith.constant 0 : i32
    %c0_i32_0 = arith.constant 0 : i32
    %c0_i32_1 = arith.constant 0 : i32
    return %arg1, %c0_i32, %c0_i32_0 : i32, i32, i32
  }
  func.func @transform_7(%arg0: i32, %arg1: i32) -> (i32, i32, i32) {
    %c0_i32 = arith.constant 0 : i32
    %c0_i32_0 = arith.constant 0 : i32
    %c0_i32_1 = arith.constant 0 : i32
    return %arg1, %c0_i32, %c0_i32_0 : i32, i32, i32
  }
  func.func @transform_8(%arg0: i32, %arg1: i32) -> (i32, i32, i32) {
    %c0_i32 = arith.constant 0 : i32
    %c0_i32_0 = arith.constant 0 : i32
    %c0_i32_1 = arith.constant 0 : i32
    return %arg1, %c0_i32, %c0_i32_0 : i32, i32, i32
  }
  func.func @transform_9(%arg0: i32, %arg1: i32) -> (i32, i32, i32) {
    %c0_i32 = arith.constant 0 : i32
    %c0_i32_0 = arith.constant 0 : i32
    %c0_i32_1 = arith.constant 0 : i32
    return %arg1, %c0_i32, %c0_i32_0 : i32, i32, i32
  }
  func.func @transform_10(%arg0: i32, %arg1: i32) -> (i32, i32, i32) {
    %c0_i32 = arith.constant 0 : i32
    %c0_i32_0 = arith.constant 0 : i32
    %c0_i32_1 = arith.constant 0 : i32
    return %arg1, %c0_i32, %c0_i32_0 : i32, i32, i32
  }
  func.func @transform_11(%arg0: i32, %arg1: i32) -> (i32, i32, i32) {
    %c0_i32 = arith.constant 0 : i32
    %c0_i32_0 = arith.constant 0 : i32
    %c0_i32_1 = arith.constant 0 : i32
    return %arg1, %c0_i32, %c0_i32_0 : i32, i32, i32
  }
  func.func @transform_12(%arg0: i32, %arg1: i32) -> (i32, i32, i32) {
    %c0_i32 = arith.constant 0 : i32
    %c0_i32_0 = arith.constant 0 : i32
    %c0_i32_1 = arith.constant 0 : i32
    return %arg1, %c0_i32, %c0_i32_0 : i32, i32, i32
  }
  func.func @transform_13(%arg0: i32, %arg1: i32) -> (i32, i32, i32) {
    %c0_i32 = arith.constant 0 : i32
    %c0_i32_0 = arith.constant 0 : i32
    %c0_i32_1 = arith.constant 0 : i32
    return %arg1, %c0_i32, %c0_i32_0 : i32, i32, i32
  }
  func.func @transform_14(%arg0: i32, %arg1: i32) -> (i32, i32, i32) {
    %c0_i32 = arith.constant 0 : i32
    %c0_i32_0 = arith.constant 0 : i32
    %c0_i32_1 = arith.constant 0 : i32
    return %arg1, %c0_i32, %c0_i32_0 : i32, i32, i32
  }
  func.func @transform_15(%arg0: i32, %arg1: i32) -> (i32, i32, i32) {
    %c0_i32 = arith.constant 0 : i32
    %c0_i32_0 = arith.constant 0 : i32
    %c0_i32_1 = arith.constant 0 : i32
    return %arg1, %c0_i32, %c0_i32_0 : i32, i32, i32
  }
  func.func @transform_16(%arg0: i32, %arg1: i32) -> (i32, i32, i32) {
    %c0_i32 = arith.constant 0 : i32
    %c0_i32_0 = arith.constant 0 : i32
    %c0_i32_1 = arith.constant 0 : i32
    return %arg1, %c0_i32, %c0_i32_0 : i32, i32, i32
  }
  func.func @transform_17(%arg0: i32, %arg1: i32) -> (i32, i32) {
    %c0_i32 = arith.constant 0 : i32
    %c0_i32_0 = arith.constant 0 : i32
    %c0_i32_1 = arith.constant 0 : i32
    return %c0_i32, %c0_i32_0 : i32, i32
  }
  func.func @transform_18(%arg0: i32, %arg1: i32) -> (i32, i32) {
    %c0_i32 = arith.constant 0 : i32
    %c0_i32_0 = arith.constant 0 : i32
    %c0_i32_1 = arith.constant 0 : i32
    return %c0_i32, %c0_i32_0 : i32, i32
  }
  func.func @transform_19(%arg0: i32, %arg1: i32) -> (i32, i32) {
    %c0_i32 = arith.constant 0 : i32
    %c0_i32_0 = arith.constant 0 : i32
    return %arg0, %c0_i32 : i32, i32
  }
}

</mosaic_0001>

<llo_original>
// kernel: tpu_custom_call.1
$region0: #{tpu_custom_call.1}
  #allocation0 [shape = 'u32[]', space=smem, size = 0x4, offset = 0x4, fixed_abs, tag = 'smem constant byte address 0x4 - core index']
  #allocation1 [shape = 'u32[144,128]{1,0:T(1,128)}', space=vmem, size = 0x12000, scoped, tag = 'internal scratch']
  %s0 = inlined_call_operand.hbm [shape: f32[16,32], index: 0, kind: input, shape index: {}]
  %s1 = inlined_call_operand.hbm [shape: f32[2,1,32], index: 1, kind: input, shape index: {}]
  %s2 = inlined_call_operand.vmem [shape: f32[2,1,32], index: 2, kind: input, shape index: {}]
  %s3 = inlined_call_operand.vmem [shape: f32[2,32,32], index: 3, kind: input, shape index: {}]
  %s4 = inlined_call_operand.vmem [shape: f32[2,1,32], index: 4, kind: input, shape index: {}]
  %s5 = inlined_call_operand.vmem [shape: f32[2,32,32], index: 5, kind: input, shape index: {}]
  %s6 = inlined_call_operand.vmem [shape: f32[2,1,32], index: 6, kind: input, shape index: {}]
  %s7 = inlined_call_operand.vmem [shape: f32[2,32,32], index: 7, kind: input, shape index: {}]
  %s8 = inlined_call_operand.vmem [shape: f32[2,1,32], index: 8, kind: input, shape index: {}]
  %s9 = inlined_call_operand.hbm [shape: f32[2,32,32], index: 9, kind: input, shape index: {}]
  %s10 = inlined_call_operand.vmem [shape: f32[2,1,32], index: 10, kind: input, shape index: {}]
  %s11 = inlined_call_operand.vmem [shape: f32[2,1,32], index: 11, kind: input, shape index: {}]
  %s12 = inlined_call_operand.vmem [shape: f32[2,1,32], index: 12, kind: input, shape index: {}]
  %s13 = inlined_call_operand.hbm [shape: f32[2,32,64], index: 13, kind: input, shape index: {}]
  %s14 = inlined_call_operand.vmem [shape: f32[2,1,64], index: 14, kind: input, shape index: {}]
  %s15 = inlined_call_operand.vmem [shape: f32[2,64,32], index: 15, kind: input, shape index: {}]
  %s16 = inlined_call_operand.vmem [shape: f32[2,1,32], index: 16, kind: input, shape index: {}]
  %s17 = inlined_call_operand.vmem [shape: f32[1,32], index: 17, kind: input, shape index: {}]
  %s18 = inlined_call_operand.vmem [shape: f32[1,32], index: 18, kind: input, shape index: {}]
  %s19 = inlined_call_operand.hbm [shape: f32[16,32], index: 19, kind: output, shape index: {}]
  %s20 = sld [smem:[#allocation0]]
  $region137: #{tpu_custom_call.1} parent=0
    _
  %s22 = ssub.s32 1, %s20
  %s23 = scalar_select 0, %s22, %s20
  $region1: #{tpu_custom_call.1} parent=0
    #allocation2 [shape = 'u8[8192]{0}', space=vmem, size = 0x2000, scoped, tag = 'input window, operand 0, single buffered']
    #allocation3 [shape = 's32[2]{0}', space=sflag, size = 0x8, scoped, tag = 'scoped memory for tpu_custom_call.1']
    #allocation4 [shape = 's32[2]{0}', space=sflag, size = 0x8, scoped, tag = 'scoped memory for tpu_custom_call.1']
    #allocation5 [shape = 'u8[1024]{0}', space=vmem, size = 0x400, scoped, tag = 'input window, operand 1']
    #allocation6 [shape = 's32[2]{0}', space=sflag, size = 0x8, scoped, tag = 'scoped memory for tpu_custom_call.1']
    #allocation7 [shape = 'u8[32768]{0}', space=vmem, size = 0x8000, scoped, tag = 'input window, operand 9']
    #allocation8 [shape = 'u8[32768]{0}', space=vmem, size = 0x8000, scoped, tag = 'input window, operand 13']
    #allocation9 [shape = 's32[2]{0}', space=sflag, size = 0x8, scoped, tag = 'scoped memory for tpu_custom_call.1']
    #allocation10 [shape = 'u8[8192]{0}', space=vmem, size = 0x2000, scoped, tag = 'output window, operand 0, single buffered']
    %24 = vsyncpa [#allocation3], 0
    %25 = vsyncpa [#allocation6], 0
    %s26 = scalar_lea.sflag [#allocation6], 1
    %27 = vsyncpa %s26, 0
    %28 = vsyncpa [#allocation9], 0
    %s29 = scalar_lea.sflag [#allocation9], 1
    %30 = vsyncpa %s29, 0
    %31 = vsyncpa [#allocation4], 0
    loop: start=0, step=1, limit=4
    $region2: #{tpu_custom_call.1} parent=1 // loop_pre_header
      _
    $region3: #{tpu_custom_call.1} parent=1 // loop_header
      %s33 = sphi 0, %s37
      %p34 = scmp.ge.s32.totalorder %s33, 4
      %s40 = sphi 0, %s52
      %s41 = sphi 0, %s48
      %s42 = sphi 0, %s40
      %s43 = sphi 0, %s41
      %s44 = sphi 0, %s42
      %s45 = sphi 0, %s43
      %s55 = sphi 0, %s57
      %s58 = sphi 0, %s55
      %s59 = sphi 0, %s58
      %s75 = sphi 0, %s59
      %s81 = sphi 0, %s83
      %s84 = sphi 0, %s81
      %s85 = sphi 0, %s84
      %s101 = sphi 0, %s85
      %s107 = sphi 0, %s109
      %s110 = sphi 0, %s107
      %s111 = sphi 0, %s110
      %s127 = sphi 0, %s111
      %s133 = sphi 0, %s135
      %s136 = sphi 0, %s133
      %s137 = sphi 0, %s136
      %s153 = sphi 0, %s137
      %s159 = sphi 0, %s161
      %s162 = sphi 0, %s159
      %s163 = sphi 0, %s162
      %s179 = sphi 0, %s163
      %s185 = sphi 0, %s187
      %s188 = sphi 0, %s185
      %s189 = sphi 0, %s188
      %s205 = sphi 0, %s189
      %s211 = sphi 0, %s213
      %s214 = sphi 0, %s211
      %s215 = sphi 0, %s214
      %s231 = sphi 0, %s215
      %s237 = sphi 0, %s239
      %s240 = sphi 0, %s237
      %s241 = sphi 0, %s240
      %s257 = sphi 0, %s241
      %s263 = sphi 0, %s265
      %s266 = sphi 0, %s263
      %s267 = sphi 0, %s266
      %s283 = sphi 0, %s267
      %s289 = sphi 0, %s291
      %s292 = sphi 0, %s289
      %s293 = sphi 0, %s292
      %s309 = sphi 0, %s293
      %s315 = sphi 0, %s317
      %s318 = sphi 0, %s315
      %s319 = sphi 0, %s318
      %s335 = sphi 0, %s319
      %s341 = sphi 0, %s343
      %s344 = sphi 0, %s341
      %s345 = sphi 0, %s344
      %s361 = sphi 0, %s345
      %s367 = sphi 0, %s369
      %s370 = sphi 0, %s367
      %s371 = sphi 0, %s370
      %s387 = sphi 0, %s371
      %s393 = sphi 0, %s395
      %s396 = sphi 0, %s393
      %s397 = sphi 0, %s396
      %s413 = sphi 0, %s397
      %s419 = sphi 0, %s421
      %s422 = sphi 0, %s419
      %s423 = sphi 0, %s422
      %s439 = sphi 0, %s423
      %s445 = sphi 0, %s447
      %s448 = sphi 0, %s445
      %s449 = sphi 0, %s448
      %s465 = sphi 0, %s449
      %s471 = sphi 0, %s473
      %s474 = sphi 0, %s471
      %s475 = sphi 0, %s474
      %s491 = sphi 0, %s475
      %s495 = sphi 0, %s495
      %s497 = sphi 0, %s495
      %s498 = sphi 0, %s497
      %s512 = sphi 0, %s498
      %s516 = sphi 0, %s516
      %s518 = sphi 0, %s516
      %s519 = sphi 0, %s518
      %s533 = sphi 0, %s519
      %s539 = sphi 0, %s541
      %s542 = sphi 0, %s539
      %s543 = sphi 0, %s542
      %s559 = sphi 0, %s543
    $region4: #{tpu_custom_call.1} parent=1 // loop_header_branch
      %36 = sbr.rel (%p34) target = $region8
    $region5: #{tpu_custom_call.1} parent=1 // loop_body
      %s38 = ssub.s32 %s33, 1
      %s39 = ssub.s32 %s33, 2
      %s46 = sadd.s32 1, %s41
      %p47 = scmp.ge.s32.totalorder %s46, 2
      %s48 = scalar_select %p47, 0, %s46
      %s49 = sadd.s32 1, %s40
      %s50 = scalar_select %p47, %s49, %s40
      %p51 = scmp.ge.s32.totalorder %s50, 1
      %s52 = scalar_select %p51, 0, %s50
      %s53 = ssub.s32 %s40, %s52
      %p54 = scmp.eq.s32.totalorder %s53, 0
      %s56 = sadd.s32 %s55, 1
      %s57 = scalar_select %p54, %s55, %s56
      %p60 = pneg %p54
      %p61 = scmp.eq.s32.totalorder %s33, 1
      %p62 = por %p60, %p61
      %p63 = scmp.ne.s32.totalorder %s55, %s58
      %p64 = scmp.eq.s32.totalorder %s33, 0
      %p65 = por %p63, %p64
      %p66 = scmp.ne.s32.totalorder %s55, %s58
      %p67 = scmp.eq.s32.totalorder %s38, 1
      %p68 = por %p66, %p67
      %p69 = scmp.ne.s32.totalorder %s58, %s59
      %p70 = scmp.eq.s32.totalorder %s38, 0
      %p71 = por %p69, %p70
      %p72 = scmp.ne.s32.totalorder %s58, %s59
      %p73 = scmp.eq.s32.totalorder %s39, 1
      %p74 = por %p72, %p73
      %p76 = scmp.ne.s32.totalorder %s59, %s75
      %p77 = scmp.eq.s32.totalorder %s39, 0
      %p78 = por %p76, %p77
      %s79 = ssub.s32 %s41, %s48
      %p80 = scmp.eq.s32.totalorder %s79, 0
      %s82 = sadd.s32 %s81, 1
      %s83 = scalar_select %p80, %s81, %s82
      %p86 = pneg %p80
      %p87 = scmp.eq.s32.totalorder %s33, 1
      %p88 = por %p86, %p87
      %p89 = scmp.ne.s32.totalorder %s81, %s84
      %p90 = scmp.eq.s32.totalorder %s33, 0
      %p91 = por %p89, %p90
      %p92 = scmp.ne.s32.totalorder %s81, %s84
      %p93 = scmp.eq.s32.totalorder %s38, 1
      %p94 = por %p92, %p93
      %p95 = scmp.ne.s32.totalorder %s84, %s85
      %p96 = scmp.eq.s32.totalorder %s38, 0
      %p97 = por %p95, %p96
      %p98 = scmp.ne.s32.totalorder %s84, %s85
      %p99 = scmp.eq.s32.totalorder %s39, 1
      %p100 = por %p98, %p99
      %p102 = scmp.ne.s32.totalorder %s85, %s101
      %p103 = scmp.eq.s32.totalorder %s39, 0
      %p104 = por %p102, %p103
      %s105 = ssub.s32 %s41, %s48
      %p106 = scmp.eq.s32.totalorder %s105, 0
      %s108 = sadd.s32 %s107, 1
      %s109 = scalar_select %p106, %s107, %s108
      %p112 = pneg %p106
      %p113 = scmp.eq.s32.totalorder %s33, 1
      %p114 = por %p112, %p113
      %p115 = scmp.ne.s32.totalorder %s107, %s110
      %p116 = scmp.eq.s32.totalorder %s33, 0
      %p117 = por %p115, %p116
      %p118 = scmp.ne.s32.totalorder %s107, %s110
      %p119 = scmp.eq.s32.totalorder %s38, 1
      %p120 = por %p118, %p119
      %p121 = scmp.ne.s32.totalorder %s110, %s111
      %p122 = scmp.eq.s32.totalorder %s38, 0
      %p123 = por %p121, %p122
      %p124 = scmp.ne.s32.totalorder %s110, %s111
      %p125 = scmp.eq.s32.totalorder %s39, 1
      %p126 = por %p124, %p125
      %p128 = scmp.ne.s32.totalorder %s111, %s127
      %p129 = scmp.eq.s32.totalorder %s39, 0
      %p130 = por %p128, %p129
      %s131 = ssub.s32 %s41, %s48
      %p132 = scmp.eq.s32.totalorder %s131, 0
      %s134 = sadd.s32 %s133, 1
      %s135 = scalar_select %p132, %s133, %s134
      %p138 = pneg %p132
      %p139 = scmp.eq.s32.totalorder %s33, 1
      %p140 = por %p138, %p139
      %p141 = scmp.ne.s32.totalorder %s133, %s136
      %p142 = scmp.eq.s32.totalorder %s33, 0
      %p143 = por %p141, %p142
      %p144 = scmp.ne.s32.totalorder %s133, %s136
      %p145 = scmp.eq.s32.totalorder %s38, 1
      %p146 = por %p144, %p145
      %p147 = scmp.ne.s32.totalorder %s136, %s137
      %p148 = scmp.eq.s32.totalorder %s38, 0
      %p149 = por %p147, %p148
      %p150 = scmp.ne.s32.totalorder %s136, %s137
      %p151 = scmp.eq.s32.totalorder %s39, 1
      %p152 = por %p150, %p151
      %p154 = scmp.ne.s32.totalorder %s137, %s153
      %p155 = scmp.eq.s32.totalorder %s39, 0
      %p156 = por %p154, %p155
      %s157 = ssub.s32 %s41, %s48
      %p158 = scmp.eq.s32.totalorder %s157, 0
      %s160 = sadd.s32 %s159, 1
      %s161 = scalar_select %p158, %s159, %s160
      %p164 = pneg %p158
      %p165 = scmp.eq.s32.totalorder %s33, 1
      %p166 = por %p164, %p165
      %p167 = scmp.ne.s32.totalorder %s159, %s162
      %p168 = scmp.eq.s32.totalorder %s33, 0
      %p169 = por %p167, %p168
      %p170 = scmp.ne.s32.totalorder %s159, %s162
      %p171 = scmp.eq.s32.totalorder %s38, 1
      %p172 = por %p170, %p171
      %p173 = scmp.ne.s32.totalorder %s162, %s163
      %p174 = scmp.eq.s32.totalorder %s38, 0
      %p175 = por %p173, %p174
      %p176 = scmp.ne.s32.totalorder %s162, %s163
      %p177 = scmp.eq.s32.totalorder %s39, 1
      %p178 = por %p176, %p177
      %p180 = scmp.ne.s32.totalorder %s163, %s179
      %p181 = scmp.eq.s32.totalorder %s39, 0
      %p182 = por %p180, %p181
      %s183 = ssub.s32 %s41, %s48
      %p184 = scmp.eq.s32.totalorder %s183, 0
      %s186 = sadd.s32 %s185, 1
      %s187 = scalar_select %p184, %s185, %s186
      %p190 = pneg %p184
      %p191 = scmp.eq.s32.totalorder %s33, 1
      %p192 = por %p190, %p191
      %p193 = scmp.ne.s32.totalorder %s185, %s188
      %p194 = scmp.eq.s32.totalorder %s33, 0
      %p195 = por %p193, %p194
      %p196 = scmp.ne.s32.totalorder %s185, %s188
      %p197 = scmp.eq.s32.totalorder %s38, 1
      %p198 = por %p196, %p197
      %p199 = scmp.ne.s32.totalorder %s188, %s189
      %p200 = scmp.eq.s32.totalorder %s38, 0
      %p201 = por %p199, %p200
      %p202 = scmp.ne.s32.totalorder %s188, %s189
      %p203 = scmp.eq.s32.totalorder %s39, 1
      %p204 = por %p202, %p203
      %p206 = scmp.ne.s32.totalorder %s189, %s205
      %p207 = scmp.eq.s32.totalorder %s39, 0
      %p208 = por %p206, %p207
      %s209 = ssub.s32 %s41, %s48
      %p210 = scmp.eq.s32.totalorder %s209, 0
      %s212 = sadd.s32 %s211, 1
      %s213 = scalar_select %p210, %s211, %s212
      %p216 = pneg %p210
      %p217 = scmp.eq.s32.totalorder %s33, 1
      %p218 = por %p216, %p217
      %p219 = scmp.ne.s32.totalorder %s211, %s214
      %p220 = scmp.eq.s32.totalorder %s33, 0
      %p221 = por %p219, %p220
      %p222 = scmp.ne.s32.totalorder %s211, %s214
      %p223 = scmp.eq.s32.totalorder %s38, 1
      %p224 = por %p222, %p223
      %p225 = scmp.ne.s32.totalorder %s214, %s215
      %p226 = scmp.eq.s32.totalorder %s38, 0
      %p227 = por %p225, %p226
      %p228 = scmp.ne.s32.totalorder %s214, %s215
      %p229 = scmp.eq.s32.totalorder %s39, 1
      %p230 = por %p228, %p229
      %p232 = scmp.ne.s32.totalorder %s215, %s231
      %p233 = scmp.eq.s32.totalorder %s39, 0
      %p234 = por %p232, %p233
      %s235 = ssub.s32 %s41, %s48
      %p236 = scmp.eq.s32.totalorder %s235, 0
      %s238 = sadd.s32 %s237, 1
      %s239 = scalar_select %p236, %s237, %s238
      %p242 = pneg %p236
      %p243 = scmp.eq.s32.totalorder %s33, 1
      %p244 = por %p242, %p243
      %p245 = scmp.ne.s32.totalorder %s237, %s240
      %p246 = scmp.eq.s32.totalorder %s33, 0
      %p247 = por %p245, %p246
      %p248 = scmp.ne.s32.totalorder %s237, %s240
      %p249 = scmp.eq.s32.totalorder %s38, 1
      %p250 = por %p248, %p249
      %p251 = scmp.ne.s32.totalorder %s240, %s241
      %p252 = scmp.eq.s32.totalorder %s38, 0
      %p253 = por %p251, %p252
      %p254 = scmp.ne.s32.totalorder %s240, %s241
      %p255 = scmp.eq.s32.totalorder %s39, 1
      %p256 = por %p254, %p255
      %p258 = scmp.ne.s32.totalorder %s241, %s257
      %p259 = scmp.eq.s32.totalorder %s39, 0
      %p260 = por %p258, %p259
      %s261 = ssub.s32 %s41, %s48
      %p262 = scmp.eq.s32.totalorder %s261, 0
      %s264 = sadd.s32 %s263, 1
      %s265 = scalar_select %p262, %s263, %s264
      %p268 = pneg %p262
      %p269 = scmp.eq.s32.totalorder %s33, 1
      %p270 = por %p268, %p269
      %p271 = scmp.ne.s32.totalorder %s263, %s266
      %p272 = scmp.eq.s32.totalorder %s33, 0
      %p273 = por %p271, %p272
      %p274 = scmp.ne.s32.totalorder %s263, %s266
      %p275 = scmp.eq.s32.totalorder %s38, 1
      %p276 = por %p274, %p275
      %p277 = scmp.ne.s32.totalorder %s266, %s267
      %p278 = scmp.eq.s32.totalorder %s38, 0
      %p279 = por %p277, %p278
      %p280 = scmp.ne.s32.totalorder %s266, %s267
      %p281 = scmp.eq.s32.totalorder %s39, 1
      %p282 = por %p280, %p281
      %p284 = scmp.ne.s32.totalorder %s267, %s283
      %p285 = scmp.eq.s32.totalorder %s39, 0
      %p286 = por %p284, %p285
      %s287 = ssub.s32 %s41, %s48
      %p288 = scmp.eq.s32.totalorder %s287, 0
      %s290 = sadd.s32 %s289, 1
      %s291 = scalar_select %p288, %s289, %s290
      %p294 = pneg %p288
      %p295 = scmp.eq.s32.totalorder %s33, 1
      %p296 = por %p294, %p295
      %p297 = scmp.ne.s32.totalorder %s289, %s292
      %p298 = scmp.eq.s32.totalorder %s33, 0
      %p299 = por %p297, %p298
      %p300 = scmp.ne.s32.totalorder %s289, %s292
      %p301 = scmp.eq.s32.totalorder %s38, 1
      %p302 = por %p300, %p301
      %p303 = scmp.ne.s32.totalorder %s292, %s293
      %p304 = scmp.eq.s32.totalorder %s38, 0
      %p305 = por %p303, %p304
      %p306 = scmp.ne.s32.totalorder %s292, %s293
      %p307 = scmp.eq.s32.totalorder %s39, 1
      %p308 = por %p306, %p307
      %p310 = scmp.ne.s32.totalorder %s293, %s309
      %p311 = scmp.eq.s32.totalorder %s39, 0
      %p312 = por %p310, %p311
      %s313 = ssub.s32 %s41, %s48
      %p314 = scmp.eq.s32.totalorder %s313, 0
      %s316 = sadd.s32 %s315, 1
      %s317 = scalar_select %p314, %s315, %s316
      %p320 = pneg %p314
      %p321 = scmp.eq.s32.totalorder %s33, 1
      %p322 = por %p320, %p321
      %p323 = scmp.ne.s32.totalorder %s315, %s318
      %p324 = scmp.eq.s32.totalorder %s33, 0
      %p325 = por %p323, %p324
      %p326 = scmp.ne.s32.totalorder %s315, %s318
      %p327 = scmp.eq.s32.totalorder %s38, 1
      %p328 = por %p326, %p327
      %p329 = scmp.ne.s32.totalorder %s318, %s319
      %p330 = scmp.eq.s32.totalorder %s38, 0
      %p331 = por %p329, %p330
      %p332 = scmp.ne.s32.totalorder %s318, %s319
      %p333 = scmp.eq.s32.totalorder %s39, 1
      %p334 = por %p332, %p333
      %p336 = scmp.ne.s32.totalorder %s319, %s335
      %p337 = scmp.eq.s32.totalorder %s39, 0
      %p338 = por %p336, %p337
      %s339 = ssub.s32 %s41, %s48
      %p340 = scmp.eq.s32.totalorder %s339, 0
      %s342 = sadd.s32 %s341, 1
      %s343 = scalar_select %p340, %s341, %s342
      %p346 = pneg %p340
      %p347 = scmp.eq.s32.totalorder %s33, 1
      %p348 = por %p346, %p347
      %p349 = scmp.ne.s32.totalorder %s341, %s344
      %p350 = scmp.eq.s32.totalorder %s33, 0
      %p351 = por %p349, %p350
      %p352 = scmp.ne.s32.totalorder %s341, %s344
      %p353 = scmp.eq.s32.totalorder %s38, 1
      %p354 = por %p352, %p353
      %p355 = scmp.ne.s32.totalorder %s344, %s345
      %p356 = scmp.eq.s32.totalorder %s38, 0
      %p357 = por %p355, %p356
      %p358 = scmp.ne.s32.totalorder %s344, %s345
      %p359 = scmp.eq.s32.totalorder %s39, 1
      %p360 = por %p358, %p359
      %p362 = scmp.ne.s32.totalorder %s345, %s361
      %p363 = scmp.eq.s32.totalorder %s39, 0
      %p364 = por %p362, %p363
      %s365 = ssub.s32 %s41, %s48
      %p366 = scmp.eq.s32.totalorder %s365, 0
      %s368 = sadd.s32 %s367, 1
      %s369 = scalar_select %p366, %s367, %s368
      %p372 = pneg %p366
      %p373 = scmp.eq.s32.totalorder %s33, 1
      %p374 = por %p372, %p373
      %p375 = scmp.ne.s32.totalorder %s367, %s370
      %p376 = scmp.eq.s32.totalorder %s33, 0
      %p377 = por %p375, %p376
      %p378 = scmp.ne.s32.totalorder %s367, %s370
      %p379 = scmp.eq.s32.totalorder %s38, 1
      %p380 = por %p378, %p379
      %p381 = scmp.ne.s32.totalorder %s370, %s371
      %p382 = scmp.eq.s32.totalorder %s38, 0
      %p383 = por %p381, %p382
      %p384 = scmp.ne.s32.totalorder %s370, %s371
      %p385 = scmp.eq.s32.totalorder %s39, 1
      %p386 = por %p384, %p385
      %p388 = scmp.ne.s32.totalorder %s371, %s387
      %p389 = scmp.eq.s32.totalorder %s39, 0
      %p390 = por %p388, %p389
      %s391 = ssub.s32 %s41, %s48
      %p392 = scmp.eq.s32.totalorder %s391, 0
      %s394 = sadd.s32 %s393, 1
      %s395 = scalar_select %p392, %s393, %s394
      %p398 = pneg %p392
      %p399 = scmp.eq.s32.totalorder %s33, 1
      %p400 = por %p398, %p399
      %p401 = scmp.ne.s32.totalorder %s393, %s396
      %p402 = scmp.eq.s32.totalorder %s33, 0
      %p403 = por %p401, %p402
      %p404 = scmp.ne.s32.totalorder %s393, %s396
      %p405 = scmp.eq.s32.totalorder %s38, 1
      %p406 = por %p404, %p405
      %p407 = scmp.ne.s32.totalorder %s396, %s397
      %p408 = scmp.eq.s32.totalorder %s38, 0
      %p409 = por %p407, %p408
      %p410 = scmp.ne.s32.totalorder %s396, %s397
      %p411 = scmp.eq.s32.totalorder %s39, 1
      %p412 = por %p410, %p411
      %p414 = scmp.ne.s32.totalorder %s397, %s413
      %p415 = scmp.eq.s32.totalorder %s39, 0
      %p416 = por %p414, %p415
      %s417 = ssub.s32 %s41, %s48
      %p418 = scmp.eq.s32.totalorder %s417, 0
      %s420 = sadd.s32 %s419, 1
      %s421 = scalar_select %p418, %s419, %s420
      %p424 = pneg %p418
      %p425 = scmp.eq.s32.totalorder %s33, 1
      %p426 = por %p424, %p425
      %p427 = scmp.ne.s32.totalorder %s419, %s422
      %p428 = scmp.eq.s32.totalorder %s33, 0
      %p429 = por %p427, %p428
      %p430 = scmp.ne.s32.totalorder %s419, %s422
      %p431 = scmp.eq.s32.totalorder %s38, 1
      %p432 = por %p430, %p431
      %p433 = scmp.ne.s32.totalorder %s422, %s423
      %p434 = scmp.eq.s32.totalorder %s38, 0
      %p435 = por %p433, %p434
      %p436 = scmp.ne.s32.totalorder %s422, %s423
      %p437 = scmp.eq.s32.totalorder %s39, 1
      %p438 = por %p436, %p437
      %p440 = scmp.ne.s32.totalorder %s423, %s439
      %p441 = scmp.eq.s32.totalorder %s39, 0
      %p442 = por %p440, %p441
      %s443 = ssub.s32 %s41, %s48
      %p444 = scmp.eq.s32.totalorder %s443, 0
      %s446 = sadd.s32 %s445, 1
      %s447 = scalar_select %p444, %s445, %s446
      %p450 = pneg %p444
      %p451 = scmp.eq.s32.totalorder %s33, 1
      %p452 = por %p450, %p451
      %p453 = scmp.ne.s32.totalorder %s445, %s448
      %p454 = scmp.eq.s32.totalorder %s33, 0
      %p455 = por %p453, %p454
      %p456 = scmp.ne.s32.totalorder %s445, %s448
      %p457 = scmp.eq.s32.totalorder %s38, 1
      %p458 = por %p456, %p457
      %p459 = scmp.ne.s32.totalorder %s448, %s449
      %p460 = scmp.eq.s32.totalorder %s38, 0
      %p461 = por %p459, %p460
      %p462 = scmp.ne.s32.totalorder %s448, %s449
      %p463 = scmp.eq.s32.totalorder %s39, 1
      %p464 = por %p462, %p463
      %p466 = scmp.ne.s32.totalorder %s449, %s465
      %p467 = scmp.eq.s32.totalorder %s39, 0
      %p468 = por %p466, %p467
      %s469 = ssub.s32 %s41, %s48
      %p470 = scmp.eq.s32.totalorder %s469, 0
      %s472 = sadd.s32 %s471, 1
      %s473 = scalar_select %p470, %s471, %s472
      %p476 = pneg %p470
      %p477 = scmp.eq.s32.totalorder %s33, 1
      %p478 = por %p476, %p477
      %p479 = scmp.ne.s32.totalorder %s471, %s474
      %p480 = scmp.eq.s32.totalorder %s33, 0
      %p481 = por %p479, %p480
      %p482 = scmp.ne.s32.totalorder %s471, %s474
      %p483 = scmp.eq.s32.totalorder %s38, 1
      %p484 = por %p482, %p483
      %p485 = scmp.ne.s32.totalorder %s474, %s475
      %p486 = scmp.eq.s32.totalorder %s38, 0
      %p487 = por %p485, %p486
      %p488 = scmp.ne.s32.totalorder %s474, %s475
      %p489 = scmp.eq.s32.totalorder %s39, 1
      %p490 = por %p488, %p489
      %p492 = scmp.ne.s32.totalorder %s475, %s491
      %p493 = scmp.eq.s32.totalorder %s39, 0
      %p494 = por %p492, %p493
      %s496 = sadd.s32 %s495, 1
      %p499 = scmp.eq.s32.totalorder %s33, 1
      %p500 = scmp.ne.s32.totalorder %s495, %s497
      %p501 = scmp.eq.s32.totalorder %s33, 0
      %p502 = por %p500, %p501
      %p503 = scmp.ne.s32.totalorder %s495, %s497
      %p504 = scmp.eq.s32.totalorder %s38, 1
      %p505 = por %p503, %p504
      %p506 = scmp.ne.s32.totalorder %s497, %s498
      %p507 = scmp.eq.s32.totalorder %s38, 0
      %p508 = por %p506, %p507
      %p509 = scmp.ne.s32.totalorder %s497, %s498
      %p510 = scmp.eq.s32.totalorder %s39, 1
      %p511 = por %p509, %p510
      %p513 = scmp.ne.s32.totalorder %s498, %s512
      %p514 = scmp.eq.s32.totalorder %s39, 0
      %p515 = por %p513, %p514
      %s517 = sadd.s32 %s516, 1
      %p520 = scmp.eq.s32.totalorder %s33, 1
      %p521 = scmp.ne.s32.totalorder %s516, %s518
      %p522 = scmp.eq.s32.totalorder %s33, 0
      %p523 = por %p521, %p522
      %p524 = scmp.ne.s32.totalorder %s516, %s518
      %p525 = scmp.eq.s32.totalorder %s38, 1
      %p526 = por %p524, %p525
      %p527 = scmp.ne.s32.totalorder %s518, %s519
      %p528 = scmp.eq.s32.totalorder %s38, 0
      %p529 = por %p527, %p528
      %p530 = scmp.ne.s32.totalorder %s518, %s519
      %p531 = scmp.eq.s32.totalorder %s39, 1
      %p532 = por %p530, %p531
      %p534 = scmp.ne.s32.totalorder %s519, %s533
      %p535 = scmp.eq.s32.totalorder %s39, 0
      %p536 = por %p534, %p535
      %s537 = ssub.s32 %s40, %s52
      %p538 = scmp.eq.s32.totalorder %s537, 0
      %s540 = sadd.s32 %s539, 1
      %s541 = scalar_select %p538, %s539, %s540
      %p544 = pneg %p538
      %p545 = scmp.eq.s32.totalorder %s33, 1
      %p546 = por %p544, %p545
      %p547 = scmp.ne.s32.totalorder %s539, %s542
      %p548 = scmp.eq.s32.totalorder %s33, 0
      %p549 = por %p547, %p548
      %p550 = scmp.ne.s32.totalorder %s539, %s542
      %p551 = scmp.eq.s32.totalorder %s38, 1
      %p552 = por %p550, %p551
      %p553 = scmp.ne.s32.totalorder %s542, %s543
      %p554 = scmp.eq.s32.totalorder %s38, 0
      %p555 = por %p553, %p554
      %p556 = scmp.ne.s32.totalorder %s542, %s543
      %p557 = scmp.eq.s32.totalorder %s39, 1
      %p558 = por %p556, %p557
      %p560 = scmp.ne.s32.totalorder %s543, %s559
      %p561 = scmp.eq.s32.totalorder %s39, 0
      %p562 = por %p560, %p561
      %p563 = scmp.le.s32.totalorder 1, %s33
      %p564 = scmp.lt.s32.totalorder %s33, 3
      %p565 = pnand %p563, %p564
      %p566 = pneg %p565
      // Predicated region
      $region9: #{tpu_custom_call.1} parent=5 // pred_check
        _
      $region10: #{tpu_custom_call.1} parent=5 // pred_check_branch
        %568 = sbr.rel (%p565) target = $region12
      $region11: #{tpu_custom_call.1} parent=5 // pred_region
        %s569 = ssub.s32 %s33, 1
        // Predicated region
        $region13: #{tpu_custom_call.1} parent=11 // pred_check
          %p570 = pneg %p71
        $region14: #{tpu_custom_call.1} parent=11 // pred_check_branch
          %572 = sbr.rel (%p570) target = $region16
        $region15: #{tpu_custom_call.1} parent=11 // pred_region
          %s573 = smul.u32 2, %s42
          %s575 = ssub.s32 256, 256
          %576 = vsyncadd [#allocation3], %s575
          %s577 = smul.addr %s573, 128
          %s578 = scalar_lea.hbm %s0, %s577
          %s579 = sshll.u32 [#allocation2], 4
          %s580 = int_to_ptr.vmem [resolvable:$true] %s579
          %585 = dma.hbm_to_vmem [thread:$0]  %s578, 256, %s580, [#allocation3], 128, 128, 8
        $region16: #{tpu_custom_call.1} parent=11 // pred_fallthru
          _
        // Predicated region
        $region17: #{tpu_custom_call.1} parent=11 // pred_check
          %p586 = pneg %p508
        $region18: #{tpu_custom_call.1} parent=11 // pred_check_branch
          %588 = sbr.rel (%p586) target = $region20
        $region19: #{tpu_custom_call.1} parent=11 // pred_region
          _
        $region20: #{tpu_custom_call.1} parent=11 // pred_fallthru
          _
        // Predicated region
        $region21: #{tpu_custom_call.1} parent=11 // pred_check
          %p589 = pneg %p529
        $region22: #{tpu_custom_call.1} parent=11 // pred_check_branch
          %591 = sbr.rel (%p589) target = $region24
        $region23: #{tpu_custom_call.1} parent=11 // pred_region
          _
        $region24: #{tpu_custom_call.1} parent=11 // pred_fallthru
          _
      $region12: #{tpu_custom_call.1} parent=5 // pred_fallthru
        _
      %p592 = scmp.lt.s32.totalorder %s33, 2
      // Predicated region
      $region25: #{tpu_custom_call.1} parent=5 // pred_check
        %p593 = pneg %p592
      $region26: #{tpu_custom_call.1} parent=5 // pred_check_branch
        %595 = sbr.rel (%p593) target = $region28
      $region27: #{tpu_custom_call.1} parent=5 // pred_region
        // Predicated region
        $region29: #{tpu_custom_call.1} parent=27 // pred_check
          %p596 = pneg %p91
        $region30: #{tpu_custom_call.1} parent=27 // pred_check_branch
          %598 = sbr.rel (%p596) target = $region32
        $region31: #{tpu_custom_call.1} parent=27 // pred_region
          %s599 = sand.u32 %s33, 1
          %s600 = scalar_lea.sflag [#allocation6], %s599
          %s601 = sand.u32 %s81, 1
          %s602 = scalar_lea.vmem [#allocation5], %s601
          %s604 = ssub.s32 16, 16
          %605 = vsyncadd %s600, %s604
          %s606 = smul.addr %s41, 16
          %s607 = scalar_lea.hbm %s1, %s606
          %s609 = sshll.u32 %s602, 4
          %s610 = int_to_ptr.vmem [resolvable:$true] %s609
          %612 = dma.hbm_to_vmem [thread:$0]  %s607, 16, %s610, %s600
        $region32: #{tpu_custom_call.1} parent=27 // pred_fallthru
          _
        // Predicated region
        $region33: #{tpu_custom_call.1} parent=27 // pred_check
          %p613 = pneg %p117
        $region34: #{tpu_custom_call.1} parent=27 // pred_check_branch
          %615 = sbr.rel (%p613) target = $region36
        $region35: #{tpu_custom_call.1} parent=27 // pred_region
          %p616 = scmp.lt.s32.totalorder %s41, 1
          %s617 = scalar_select %p616, %s41, 1
          %s618 = scalar_lea.vmem %s2, %s617
        $region36: #{tpu_custom_call.1} parent=27 // pred_fallthru
          _
        // Predicated region
        $region37: #{tpu_custom_call.1} parent=27 // pred_check
          %p619 = pneg %p143
        $region38: #{tpu_custom_call.1} parent=27 // pred_check_branch
          %621 = sbr.rel (%p619) target = $region40
        $region39: #{tpu_custom_call.1} parent=27 // pred_region
          %p622 = scmp.lt.s32.totalorder %s41, 1
          %s623 = scalar_select %p622, %s41, 1
          %s624 = smul.addr %s623, 4
          %s625 = smul.addr %s624, 8
          %s626 = scalar_lea.vmem %s3, %s625
        $region40: #{tpu_custom_call.1} parent=27 // pred_fallthru
          _
        // Predicated region
        $region41: #{tpu_custom_call.1} parent=27 // pred_check
          %p627 = pneg %p169
        $region42: #{tpu_custom_call.1} parent=27 // pred_check_branch
          %629 = sbr.rel (%p627) target = $region44
        $region43: #{tpu_custom_call.1} parent=27 // pred_region
          %p630 = scmp.lt.s32.totalorder %s41, 1
          %s631 = scalar_select %p630, %s41, 1
          %s632 = scalar_lea.vmem %s4, %s631
        $region44: #{tpu_custom_call.1} parent=27 // pred_fallthru
          _
        // Predicated region
        $region45: #{tpu_custom_call.1} parent=27 // pred_check
          %p633 = pneg %p195
        $region46: #{tpu_custom_call.1} parent=27 // pred_check_branch
          %635 = sbr.rel (%p633) target = $region48
        $region47: #{tpu_custom_call.1} parent=27 // pred_region
          %p636 = scmp.lt.s32.totalorder %s41, 1
          %s637 = scalar_select %p636, %s41, 1
          %s638 = smul.addr %s637, 4
          %s639 = smul.addr %s638, 8
          %s640 = scalar_lea.vmem %s5, %s639
        $region48: #{tpu_custom_call.1} parent=27 // pred_fallthru
          _
        // Predicated region
        $region49: #{tpu_custom_call.1} parent=27 // pred_check
          %p641 = pneg %p221
        $region50: #{tpu_custom_call.1} parent=27 // pred_check_branch
          %643 = sbr.rel (%p641) target = $region52
        $region51: #{tpu_custom_call.1} parent=27 // pred_region
          %p644 = scmp.lt.s32.totalorder %s41, 1
          %s645 = scalar_select %p644, %s41, 1
          %s646 = scalar_lea.vmem %s6, %s645
        $region52: #{tpu_custom_call.1} parent=27 // pred_fallthru
          _
        // Predicated region
        $region53: #{tpu_custom_call.1} parent=27 // pred_check
          %p647 = pneg %p247
        $region54: #{tpu_custom_call.1} parent=27 // pred_check_branch
          %649 = sbr.rel (%p647) target = $region56
        $region55: #{tpu_custom_call.1} parent=27 // pred_region
          %p650 = scmp.lt.s32.totalorder %s41, 1
          %s651 = scalar_select %p650, %s41, 1
          %s652 = smul.addr %s651, 4
          %s653 = smul.addr %s652, 8
          %s654 = scalar_lea.vmem %s7, %s653
        $region56: #{tpu_custom_call.1} parent=27 // pred_fallthru
          _
        // Predicated region
        $region57: #{tpu_custom_call.1} parent=27 // pred_check
          %p655 = pneg %p273
        $region58: #{tpu_custom_call.1} parent=27 // pred_check_branch
          %657 = sbr.rel (%p655) target = $region60
        $region59: #{tpu_custom_call.1} parent=27 // pred_region
          %p658 = scmp.lt.s32.totalorder %s41, 1
          %s659 = scalar_select %p658, %s41, 1
          %s660 = scalar_lea.vmem %s8, %s659
        $region60: #{tpu_custom_call.1} parent=27 // pred_fallthru
          _
        // Predicated region
        $region61: #{tpu_custom_call.1} parent=27 // pred_check
          %p661 = pneg %p299
        $region62: #{tpu_custom_call.1} parent=27 // pred_check_branch
          %663 = sbr.rel (%p661) target = $region64
        $region63: #{tpu_custom_call.1} parent=27 // pred_region
          %s664 = sand.u32 %s33, 1
          %s665 = scalar_lea.sflag [#allocation6], %s664
          %s666 = sand.u32 %s289, 1
          %s667 = smul.addr %s666, 32
          %s668 = scalar_lea.vmem [#allocation7], %s667
          %s670 = ssub.s32 512, 512
          %671 = vsyncadd %s665, %s670
          %s672 = smul.addr %s41, 4
          %s673 = smul.addr %s672, 128
          %s674 = scalar_lea.hbm %s9, %s673
          %s675 = sshll.u32 %s668, 4
          %s676 = int_to_ptr.vmem [resolvable:$true] %s675
          %681 = dma.hbm_to_vmem [thread:$0]  %s674, 512, %s676, %s665, 128, 128, 8
        $region64: #{tpu_custom_call.1} parent=27 // pred_fallthru
          _
        // Predicated region
        $region65: #{tpu_custom_call.1} parent=27 // pred_check
          %p682 = pneg %p325
        $region66: #{tpu_custom_call.1} parent=27 // pred_check_branch
          %684 = sbr.rel (%p682) target = $region68
        $region67: #{tpu_custom_call.1} parent=27 // pred_region
          %p685 = scmp.lt.s32.totalorder %s41, 1
          %s686 = scalar_select %p685, %s41, 1
          %s687 = scalar_lea.vmem %s10, %s686
        $region68: #{tpu_custom_call.1} parent=27 // pred_fallthru
          _
        // Predicated region
        $region69: #{tpu_custom_call.1} parent=27 // pred_check
          %p688 = pneg %p351
        $region70: #{tpu_custom_call.1} parent=27 // pred_check_branch
          %690 = sbr.rel (%p688) target = $region72
        $region71: #{tpu_custom_call.1} parent=27 // pred_region
          %p691 = scmp.lt.s32.totalorder %s41, 1
          %s692 = scalar_select %p691, %s41, 1
          %s693 = scalar_lea.vmem %s11, %s692
        $region72: #{tpu_custom_call.1} parent=27 // pred_fallthru
          _
        // Predicated region
        $region73: #{tpu_custom_call.1} parent=27 // pred_check
          %p694 = pneg %p377
        $region74: #{tpu_custom_call.1} parent=27 // pred_check_branch
          %696 = sbr.rel (%p694) target = $region76
        $region75: #{tpu_custom_call.1} parent=27 // pred_region
          %p697 = scmp.lt.s32.totalorder %s41, 1
          %s698 = scalar_select %p697, %s41, 1
          %s699 = scalar_lea.vmem %s12, %s698
        $region76: #{tpu_custom_call.1} parent=27 // pred_fallthru
          _
        // Predicated region
        $region77: #{tpu_custom_call.1} parent=27 // pred_check
          %p700 = pneg %p403
        $region78: #{tpu_custom_call.1} parent=27 // pred_check_branch
          %702 = sbr.rel (%p700) target = $region80
        $region79: #{tpu_custom_call.1} parent=27 // pred_region
          %s703 = sand.u32 %s393, 1
          %s704 = scalar_lea.sflag [#allocation9], %s703
          %s705 = sand.u32 %s393, 1
          %s706 = smul.addr %s705, 32
          %s707 = scalar_lea.vmem [#allocation8], %s706
          %s709 = ssub.s32 512, 512
          %710 = vsyncadd %s704, %s709
          %s711 = smul.addr %s41, 4
          %s712 = smul.addr %s711, 128
          %s713 = scalar_lea.hbm %s13, %s712
          %s714 = sshll.u32 %s707, 4
          %s715 = int_to_ptr.vmem [resolvable:$true] %s714
          %720 = dma.hbm_to_vmem [thread:$0]  %s713, 512, %s715, %s704, 128, 128, 8
        $region80: #{tpu_custom_call.1} parent=27 // pred_fallthru
          _
        // Predicated region
        $region81: #{tpu_custom_call.1} parent=27 // pred_check
          %p721 = pneg %p429
        $region82: #{tpu_custom_call.1} parent=27 // pred_check_branch
          %723 = sbr.rel (%p721) target = $region84
        $region83: #{tpu_custom_call.1} parent=27 // pred_region
          %p724 = scmp.lt.s32.totalorder %s41, 1
          %s725 = scalar_select %p724, %s41, 1
          %s726 = scalar_lea.vmem %s14, %s725
        $region84: #{tpu_custom_call.1} parent=27 // pred_fallthru
          _
        // Predicated region
        $region85: #{tpu_custom_call.1} parent=27 // pred_check
          %p727 = pneg %p455
        $region86: #{tpu_custom_call.1} parent=27 // pred_check_branch
          %729 = sbr.rel (%p727) target = $region88
        $region87: #{tpu_custom_call.1} parent=27 // pred_region
          %p730 = scmp.lt.s32.totalorder %s41, 1
          %s731 = scalar_select %p730, %s41, 1
          %s732 = smul.addr %s731, 8
          %s733 = smul.addr %s732, 8
          %s734 = scalar_lea.vmem %s15, %s733
        $region88: #{tpu_custom_call.1} parent=27 // pred_fallthru
          _
        // Predicated region
        $region89: #{tpu_custom_call.1} parent=27 // pred_check
          %p735 = pneg %p481
        $region90: #{tpu_custom_call.1} parent=27 // pred_check_branch
          %737 = sbr.rel (%p735) target = $region92
        $region91: #{tpu_custom_call.1} parent=27 // pred_region
          %p738 = scmp.lt.s32.totalorder %s41, 1
          %s739 = scalar_select %p738, %s41, 1
          %s740 = scalar_lea.vmem %s16, %s739
        $region92: #{tpu_custom_call.1} parent=27 // pred_fallthru
          _
      $region28: #{tpu_custom_call.1} parent=5 // pred_fallthru
        _
      %p741 = scmp.le.s32.totalorder 1, %s33
      %p742 = scmp.lt.s32.totalorder %s33, 3
      %p743 = pnand %p741, %p742
      %p744 = pneg %p743
      // Predicated region
      $region93: #{tpu_custom_call.1} parent=5 // pred_check
        _
      $region94: #{tpu_custom_call.1} parent=5 // pred_check_branch
        %746 = sbr.rel (%p743) target = $region96
      $region95: #{tpu_custom_call.1} parent=5 // pred_region
        %s747 = ssub.s32 %s33, 1
        // Predicated region
        $region97: #{tpu_custom_call.1} parent=95 // pred_check
          %p748 = pneg %p71
        $region98: #{tpu_custom_call.1} parent=95 // pred_check_branch
          %750 = sbr.rel (%p748) target = $region100
        $region99: #{tpu_custom_call.1} parent=95 // pred_region
          %751 = dma.done [#allocation3], 256
        $region100: #{tpu_custom_call.1} parent=95 // pred_fallthru
          _
        %s752 = sand.u32 %s38, 1
        %s753 = scalar_lea.sflag [#allocation6], %s752
        %s754 = sand.u32 %s84, 1
        %s755 = scalar_lea.vmem [#allocation5], %s754
        // Predicated region
        $region101: #{tpu_custom_call.1} parent=95 // pred_check
          %p756 = pneg %p97
        $region102: #{tpu_custom_call.1} parent=95 // pred_check_branch
          %758 = sbr.rel (%p756) target = $region104
        $region103: #{tpu_custom_call.1} parent=95 // pred_region
          %759 = dma.done %s753, 16
        $region104: #{tpu_custom_call.1} parent=95 // pred_fallthru
          _
        %s760 = sand.u32 %s38, 1
        %s761 = scalar_lea.sflag [#allocation6], %s760
        %s762 = sand.u32 %s292, 1
        %s763 = smul.addr %s762, 32
        %s764 = scalar_lea.vmem [#allocation7], %s763
        // Predicated region
        $region105: #{tpu_custom_call.1} parent=95 // pred_check
          %p765 = pneg %p305
        $region106: #{tpu_custom_call.1} parent=95 // pred_check_branch
          %767 = sbr.rel (%p765) target = $region108
        $region107: #{tpu_custom_call.1} parent=95 // pred_region
          %768 = dma.done %s761, 512
        $region108: #{tpu_custom_call.1} parent=95 // pred_fallthru
          _
        %s769 = sand.u32 %s396, 1
        %s770 = scalar_lea.sflag [#allocation9], %s769
        %s771 = sand.u32 %s396, 1
        %s772 = smul.addr %s771, 32
        %s773 = scalar_lea.vmem [#allocation8], %s772
        // Predicated region
        $region109: #{tpu_custom_call.1} parent=95 // pred_check
          %p774 = pneg %p409
        $region110: #{tpu_custom_call.1} parent=95 // pred_check_branch
          %776 = sbr.rel (%p774) target = $region112
        $region111: #{tpu_custom_call.1} parent=95 // pred_region
          %777 = dma.done %s770, 512
        $region112: #{tpu_custom_call.1} parent=95 // pred_fallthru
          _
        %p778 = pneg %p71
        %p779 = pneg %p68
        %s780 = sand.u32 %s38, 1
        %s781 = scalar_lea.sflag [#allocation6], %s780
        %s782 = sand.u32 %s84, 1
        %s783 = scalar_lea.vmem [#allocation5], %s782
        %p784 = pneg %p97
        %p785 = pneg %p94
        %p786 = scmp.lt.s32.totalorder %s43, 1
        %s787 = scalar_select %p786, %s43, 1
        %s788 = scalar_lea.vmem %s2, %s787
        %p789 = pneg %p123
        %p790 = pneg %p120
        %p791 = scmp.lt.s32.totalorder %s43, 1
        %s792 = scalar_select %p791, %s43, 1
        %s793 = smul.addr %s792, 4
        %s794 = smul.addr %s793, 8
        %s795 = scalar_lea.vmem %s3, %s794
        %p796 = pneg %p149
        %p797 = pneg %p146
        %p798 = scmp.lt.s32.totalorder %s43, 1
        %s799 = scalar_select %p798, %s43, 1
        %s800 = scalar_lea.vmem %s4, %s799
        %p801 = pneg %p175
        %p802 = pneg %p172
        %p803 = scmp.lt.s32.totalorder %s43, 1
        %s804 = scalar_select %p803, %s43, 1
        %s805 = smul.addr %s804, 4
        %s806 = smul.addr %s805, 8
        %s807 = scalar_lea.vmem %s5, %s806
        %p808 = pneg %p201
        %p809 = pneg %p198
        %p810 = scmp.lt.s32.totalorder %s43, 1
        %s811 = scalar_select %p810, %s43, 1
        %s812 = scalar_lea.vmem %s6, %s811
        %p813 = pneg %p227
        %p814 = pneg %p224
        %p815 = scmp.lt.s32.totalorder %s43, 1
        %s816 = scalar_select %p815, %s43, 1
        %s817 = smul.addr %s816, 4
        %s818 = smul.addr %s817, 8
        %s819 = scalar_lea.vmem %s7, %s818
        %p820 = pneg %p253
        %p821 = pneg %p250
        %p822 = scmp.lt.s32.totalorder %s43, 1
        %s823 = scalar_select %p822, %s43, 1
        %s824 = scalar_lea.vmem %s8, %s823
        %p825 = pneg %p279
        %p826 = pneg %p276
        %s827 = sand.u32 %s38, 1
        %s828 = scalar_lea.sflag [#allocation6], %s827
        %s829 = sand.u32 %s292, 1
        %s830 = smul.addr %s829, 32
        %s831 = scalar_lea.vmem [#allocation7], %s830
        %p832 = pneg %p305
        %p833 = pneg %p302
        %p834 = scmp.lt.s32.totalorder %s43, 1
        %s835 = scalar_select %p834, %s43, 1
        %s836 = scalar_lea.vmem %s10, %s835
        %p837 = pneg %p331
        %p838 = pneg %p328
        %p839 = scmp.lt.s32.totalorder %s43, 1
        %s840 = scalar_select %p839, %s43, 1
        %s841 = scalar_lea.vmem %s11, %s840
        %p842 = pneg %p357
        %p843 = pneg %p354
        %p844 = scmp.lt.s32.totalorder %s43, 1
        %s845 = scalar_select %p844, %s43, 1
        %s846 = scalar_lea.vmem %s12, %s845
        %p847 = pneg %p383
        %p848 = pneg %p380
        %s849 = sand.u32 %s396, 1
        %s850 = scalar_lea.sflag [#allocation9], %s849
        %s851 = sand.u32 %s396, 1
        %s852 = smul.addr %s851, 32
        %s853 = scalar_lea.vmem [#allocation8], %s852
        %p854 = pneg %p409
        %p855 = pneg %p406
        %p856 = scmp.lt.s32.totalorder %s43, 1
        %s857 = scalar_select %p856, %s43, 1
        %s858 = scalar_lea.vmem %s14, %s857
        %p859 = pneg %p435
        %p860 = pneg %p432
        %p861 = scmp.lt.s32.totalorder %s43, 1
        %s862 = scalar_select %p861, %s43, 1
        %s863 = smul.addr %s862, 8
        %s864 = smul.addr %s863, 8
        %s865 = scalar_lea.vmem %s15, %s864
        %p866 = pneg %p461
        %p867 = pneg %p458
        %p868 = scmp.lt.s32.totalorder %s43, 1
        %s869 = scalar_select %p868, %s43, 1
        %s870 = scalar_lea.vmem %s16, %s869
        %p871 = pneg %p487
        %p872 = pneg %p484
        %p873 = pneg %p508
        %p874 = pneg %p505
        %p875 = pneg %p529
        %p876 = pneg %p526
        %p877 = pneg %p555
        %p878 = pneg %p552
        %s879 = smul.u32 2, %s42
        %p880 = scmp.lt.s32.totalorder %s43, 1
        %s881 = scalar_select %p880, %s43, 1
        %s882 = scalar_lea.vmem %s2, %s881
        %p883 = scmp.lt.s32.totalorder %s43, 1
        %s884 = scalar_select %p883, %s43, 1
        %s885 = smul.addr %s884, 4
        %s886 = smul.addr %s885, 8
        %s887 = scalar_lea.vmem %s3, %s886
        %p888 = scmp.lt.s32.totalorder %s43, 1
        %s889 = scalar_select %p888, %s43, 1
        %s890 = scalar_lea.vmem %s4, %s889
        %p891 = scmp.lt.s32.totalorder %s43, 1
        %s892 = scalar_select %p891, %s43, 1
        %s893 = smul.addr %s892, 4
        %s894 = smul.addr %s893, 8
        %s895 = scalar_lea.vmem %s5, %s894
        %p896 = scmp.lt.s32.totalorder %s43, 1
        %s897 = scalar_select %p896, %s43, 1
        %s898 = scalar_lea.vmem %s6, %s897
        %p899 = scmp.lt.s32.totalorder %s43, 1
        %s900 = scalar_select %p899, %s43, 1
        %s901 = smul.addr %s900, 4
        %s902 = smul.addr %s901, 8
        %s903 = scalar_lea.vmem %s7, %s902
        %p904 = scmp.lt.s32.totalorder %s43, 1
        %s905 = scalar_select %p904, %s43, 1
        %s906 = scalar_lea.vmem %s8, %s905
        %p907 = scmp.lt.s32.totalorder %s43, 1
        %s908 = scalar_select %p907, %s43, 1
        %s909 = scalar_lea.vmem %s10, %s908
        %p910 = scmp.lt.s32.totalorder %s43, 1
        %s911 = scalar_select %p910, %s43, 1
        %s912 = scalar_lea.vmem %s11, %s911
        %p913 = scmp.lt.s32.totalorder %s43, 1
        %s914 = scalar_select %p913, %s43, 1
        %s915 = scalar_lea.vmem %s12, %s914
        %p916 = scmp.lt.s32.totalorder %s43, 1
        %s917 = scalar_select %p916, %s43, 1
        %s918 = scalar_lea.vmem %s14, %s917
        %p919 = scmp.lt.s32.totalorder %s43, 1
        %s920 = scalar_select %p919, %s43, 1
        %s921 = smul.addr %s920, 8
        %s922 = smul.addr %s921, 8
        %s923 = scalar_lea.vmem %s15, %s922
        %p924 = scmp.lt.s32.totalorder %s43, 1
        %s925 = scalar_select %p924, %s43, 1
        %s926 = scalar_lea.vmem %s16, %s925
        %s927 = smul.u32 2, %s42
        %p928 = scmp.eq.s32.totalorder %s43, 0
        // Predicated region
        $region113: #{tpu_custom_call.1} parent=95 // pred_check
          %p929 = pneg %p928
        $region114: #{tpu_custom_call.1} parent=95 // pred_check_branch
          %931 = sbr.rel (%p929) target = $region116
        $region115: #{tpu_custom_call.1} parent=95 // pred_region
          %v932 = vld [vmem:[#allocation2] sm:$0xff]
          %v933 = vld [vmem:[#allocation2 + $0x8] sm:$0xff]
          %vm934 = vcmask 261120
          %935 = vst.msk [vmem:[#allocation10] sm:$0xff] %vm934, %v932
          %936 = vst.msk [vmem:[#allocation10 + $0x8] sm:$0xff] %vm934, %v933
        $region116: #{tpu_custom_call.1} parent=95 // pred_fallthru
          _
        %v937 = vld [vmem:[#allocation10] sm:$0xff]
        %v938 = vld [vmem:[#allocation10 + $0x8] sm:$0xff]
        %v939 = vld [vmem:[%s755] sm:$0x1]
        %v940 = vld [vmem:[%s882] sm:$0x1]
        %vm941 = vcmask 261120
        %v942 = vsel %vm941, %v937, 0.0
        %943 = vadd.xlane.f32.xlu0 %v942
        %v944 = vpop.xlane.xlu0 %943
        %v945 = vsel %vm941, %v938, 0.0
        %946 = vadd.xlane.f32.xlu0 %v945
        %v947 = vpop.xlane.xlu0 %946
        %v948 = vrcp.pop 32.0
        %v949 = vmul.f32 %v944, %v948
        %v950 = vmul.f32 %v947, %v948
        %v951 = vmul.f32 %v937, %v937
        %v952 = vmul.f32 %v938, %v938
        %v953 = vsel %vm941, %v951, 0.0
        %954 = vadd.xlane.f32.xlu0 %v953
        %v955 = vpop.xlane.xlu0 %954
        %v956 = vsel %vm941, %v952, 0.0
        %957 = vadd.xlane.f32.xlu0 %v956
        %v958 = vpop.xlane.xlu0 %957
        %v959 = vmul.f32 %v955, %v948
        %v960 = vmul.f32 %v958, %v948
        %v961 = vmul.f32 %v949, %v949
        %v962 = vmul.f32 %v950, %v950
        %v963 = vsub.f32 %v959, %v961
        %v964 = vsub.f32 %v960, %v962
        %v965 = vsub.f32 %v937, %v949
        %v966 = vsub.f32 %v938, %v950
        %v967 = vadd.f32 %v963, 1e-05
        %v968 = vadd.f32 %v964, 1e-05
        %v969 = vrsqrt.pop %v967
        %v970 = vrsqrt.pop %v968
        %v971 = vmul.f32 %v965, %v969
        %v972 = vmul.f32 %v966, %v970
        %v974 = vlaneseq
        %v975 = vshrl.u32 %v974, 7
        %v976 = vsub.s32 0, %v975
        %v977 = vrot.slane %v939, %v976
        %v979 = vmul.f32 %v971, %v977
        %v980 = vmul.f32 %v972, %v977
        %v982 = vlaneseq
        %v983 = vshrl.u32 %v982, 7
        %v984 = vsub.s32 0, %v983
        %v985 = vrot.slane %v940, %v984
        %v987 = vadd.f32 %v979, %v985
        %v988 = vadd.f32 %v980, %v985
        %v989 = vld [vmem:[%s887] sm:$0xff]
        %v990 = vld [vmem:[%s887 + $0x8] sm:$0xff]
        %v991 = vld [vmem:[%s887 + $0x10] sm:$0xff]
        %v992 = vld [vmem:[%s887 + $0x18] sm:$0xff]
        %v993 = vld [vmem:[%s895] sm:$0xff]
        %v994 = vld [vmem:[%s895 + $0x8] sm:$0xff]
        %v995 = vld [vmem:[%s895 + $0x10] sm:$0xff]
        %v996 = vld [vmem:[%s895 + $0x18] sm:$0xff]
        %v997 = vld [vmem:[%s903] sm:$0xff]
        %v998 = vld [vmem:[%s903 + $0x8] sm:$0xff]
        %v999 = vld [vmem:[%s903 + $0x10] sm:$0xff]
        %v1000 = vld [vmem:[%s903 + $0x18] sm:$0xff]
        %v1001 = vld [vmem:[%s764] sm:$0xff]
        %v1002 = vld [vmem:[%s764 + $0x8] sm:$0xff]
        %v1003 = vld [vmem:[%s764 + $0x10] sm:$0xff]
        %v1004 = vld [vmem:[%s764 + $0x18] sm:$0xff]
        %v1005 = vld [vmem:[%s890] sm:$0x1]
        %v1006 = vld [vmem:[%s898] sm:$0x1]
        %v1007 = vld [vmem:[%s906] sm:$0x1]
        %v1008 = vld [vmem:[%s909] sm:$0x1]
        %v1010 = vlaneseq
        %v1011 = vshrl.u32 %v1010, 7
        %v1012 = vsub.s32 0, %v1011
        %v1013 = vrot.slane %v1008, %v1012
        %v1015 = vadd.f32 %v937, %v1013
        %v1016 = vadd.f32 %v938, %v1013
        %v1018 = vlaneseq
        %v1019 = vshrl.u32 %v1018, 7
        %v1020 = vsub.s32 0, %v1019
        %v1021 = vrot.slane %v1005, %v1020
        %v1024 = vsel %vm941, %v987, 0
        %v1027 = vsel %vm941, %v988, 0
        %1029 = vmatprep.subr.mxu0 0.0
        %1030 = vmatpush1.msra.mxu0 0.0
        %1031 = vmatprep.subr.mxu0 0.0
        %1032 = vmatpush1.msra.mxu0 0.0
        %1033 = vmatprep.subr.mxu0 0.0
        %1034 = vmatpush1.msra.mxu0 0.0
        %1035 = vmatprep.subr.mxu0 0.0
        %1036 = vmatpush1.msra.mxu0 0.0
        %1037 = vmatprep.subr.mxu0 0.0
        %1038 = vmatpush1.msra.mxu0 0.0
        %1039 = vmatprep.subr.mxu0 0.0
        %1040 = vmatpush1.msra.mxu0 0.0
        %1041 = vmatprep.subr.mxu0 0.0
        %1042 = vmatpush1.msra.mxu0 0.0
        %1043 = vmatprep.subr.mxu0 0.0
        %1044 = vmatpush1.msra.mxu0 0.0
        %1045 = vmatprep.subr.mxu0 0.0
        %1046 = vmatpush1.msra.mxu0 0.0
        %1047 = vmatprep.subr.mxu0 0.0
        %1048 = vmatpush1.msra.mxu0 0.0
        %1049 = vmatprep.subr.mxu0 0.0
        %1050 = vmatpush1.msra.mxu0 0.0
        %1051 = vmatprep.subr.mxu0 0.0
        %1052 = vmatpush1.msra.mxu0 0.0
        %1053 = vmatprep.subr.mxu0 0.0
        %1054 = vmatpush1.msra.mxu0 %v992
        %1055 = vmatprep.subr.mxu0 0.0
        %1056 = vmatpush1.msra.mxu0 %v991
        %1057 = vmatprep.subr.mxu0 0.0
        %1058 = vmatpush1.msra.mxu0 %v990
        %1059 = vmatprep.subr.mxu0 0.0
        %1060 = vmatpush1.msra.mxu0 %v989
        %1061 = vmatprep.subr.mxu0 0.0
        %1062 = vmatpush2.msra.mxu0 0.0
        %1063 = vmatprep.subr.mxu0 0.0
        %1064 = vmatpush2.msra.mxu0 0.0
        %1065 = vmatprep.subr.mxu0 0.0
        %1066 = vmatpush2.msra.mxu0 0.0
        %1067 = vmatprep.subr.mxu0 0.0
        %1068 = vmatpush2.msra.mxu0 0.0
        %1069 = vmatprep.subr.mxu0 0.0
        %1070 = vmatpush2.msra.mxu0 0.0
        %1071 = vmatprep.subr.mxu0 0.0
        %1072 = vmatpush2.msra.mxu0 0.0
        %1073 = vmatprep.subr.mxu0 0.0
        %1074 = vmatpush2.msra.mxu0 0.0
        %1075 = vmatprep.subr.mxu0 0.0
        %1076 = vmatpush2.msra.mxu0 0.0
        %1077 = vmatprep.subr.mxu0 0.0
        %1078 = vmatpush2.msra.mxu0 0.0
        %1079 = vmatprep.subr.mxu0 0.0
        %1080 = vmatpush2.msra.mxu0 0.0
        %1081 = vmatprep.subr.mxu0 0.0
        %1082 = vmatpush2.msra.mxu0 0.0
        %1083 = vmatprep.subr.mxu0 0.0
        %1084 = vmatpush2.msra.mxu0 0.0
        %1085 = vmatprep.subr.mxu0 0.0
        %1086 = vmatpush2.msra.mxu0 0.0
        %1087 = vmatprep.subr.mxu0 0.0
        %1088 = vmatpush2.msra.mxu0 0.0
        %1089 = vmatprep.subr.mxu0 0.0
        %1090 = vmatpush2.msra.mxu0 0.0
        %1091 = vmatprep.subr.mxu0 0.0
        %1092 = vmatpush2.msra.mxu0 0.0
        %1093 = vmatprep.mubr.f32.mxu0 0.0
        %1094 = vmatmul.mubr.f32.gmra.mxu0 %v1024
        %v1095 = vpop.f32.mrf.mxu0
        %v1096 = vadd.f32 %v1021, %v1095
        %v1097 = vpop.f32.mrf.mxu0
        %1098 = vmatprep.mubr.f32.mxu0 0.0
        %1099 = vmatmul.mubr.f32.gmra.mxu0 %v1027
        %v1100 = vpop.f32.mrf.mxu0
        %v1101 = vadd.f32 %v1021, %v1100
        %v1102 = vpop.f32.mrf.mxu0
        %1103 = vdwg.mxu0
        %v1105 = vlaneseq
        %v1106 = vshrl.u32 %v1105, 7
        %v1107 = vsub.s32 0, %v1106
        %v1108 = vrot.slane %v1006, %v1107
        %1110 = vmatprep.subr.mxu0 0.0
        %1111 = vmatpush1.msra.mxu0 0.0
        %1112 = vmatprep.subr.mxu0 0.0
        %1113 = vmatpush1.msra.mxu0 0.0
        %1114 = vmatprep.subr.mxu0 0.0
        %1115 = vmatpush1.msra.mxu0 0.0
        %1116 = vmatprep.subr.mxu0 0.0
        %1117 = vmatpush1.msra.mxu0 0.0
        %1118 = vmatprep.subr.mxu0 0.0
        %1119 = vmatpush1.msra.mxu0 0.0
        %1120 = vmatprep.subr.mxu0 0.0
        %1121 = vmatpush1.msra.mxu0 0.0
        %1122 = vmatprep.subr.mxu0 0.0
        %1123 = vmatpush1.msra.mxu0 0.0
        %1124 = vmatprep.subr.mxu0 0.0
        %1125 = vmatpush1.msra.mxu0 0.0
        %1126 = vmatprep.subr.mxu0 0.0
        %1127 = vmatpush1.msra.mxu0 0.0
        %1128 = vmatprep.subr.mxu0 0.0
        %1129 = vmatpush1.msra.mxu0 0.0
        %1130 = vmatprep.subr.mxu0 0.0
        %1131 = vmatpush1.msra.mxu0 0.0
        %1132 = vmatprep.subr.mxu0 0.0
        %1133 = vmatpush1.msra.mxu0 0.0
        %1134 = vmatprep.subr.mxu0 0.0
        %1135 = vmatpush1.msra.mxu0 %v996
        %1136 = vmatprep.subr.mxu0 0.0
        %1137 = vmatpush1.msra.mxu0 %v995
        %1138 = vmatprep.subr.mxu0 0.0
        %1139 = vmatpush1.msra.mxu0 %v994
        %1140 = vmatprep.subr.mxu0 0.0
        %1141 = vmatpush1.msra.mxu0 %v993
        %1142 = vmatprep.subr.mxu0 0.0
        %1143 = vmatpush2.msra.mxu0 0.0
        %1144 = vmatprep.subr.mxu0 0.0
        %1145 = vmatpush2.msra.mxu0 0.0
        %1146 = vmatprep.subr.mxu0 0.0
        %1147 = vmatpush2.msra.mxu0 0.0
        %1148 = vmatprep.subr.mxu0 0.0
        %1149 = vmatpush2.msra.mxu0 0.0
        %1150 = vmatprep.subr.mxu0 0.0
        %1151 = vmatpush2.msra.mxu0 0.0
        %1152 = vmatprep.subr.mxu0 0.0
        %1153 = vmatpush2.msra.mxu0 0.0
        %1154 = vmatprep.subr.mxu0 0.0
        %1155 = vmatpush2.msra.mxu0 0.0
        %1156 = vmatprep.subr.mxu0 0.0
        %1157 = vmatpush2.msra.mxu0 0.0
        %1158 = vmatprep.subr.mxu0 0.0
        %1159 = vmatpush2.msra.mxu0 0.0
        %1160 = vmatprep.subr.mxu0 0.0
        %1161 = vmatpush2.msra.mxu0 0.0
        %1162 = vmatprep.subr.mxu0 0.0
        %1163 = vmatpush2.msra.mxu0 0.0
        %1164 = vmatprep.subr.mxu0 0.0
        %1165 = vmatpush2.msra.mxu0 0.0
        %1166 = vmatprep.subr.mxu0 0.0
        %1167 = vmatpush2.msra.mxu0 0.0
        %1168 = vmatprep.subr.mxu0 0.0
        %1169 = vmatpush2.msra.mxu0 0.0
        %1170 = vmatprep.subr.mxu0 0.0
        %1171 = vmatpush2.msra.mxu0 0.0
        %1172 = vmatprep.subr.mxu0 0.0
        %1173 = vmatpush2.msra.mxu0 0.0
        %1174 = vmatprep.mubr.f32.mxu0 0.0
        %1175 = vmatmul.mubr.f32.gmra.mxu0 %v1024
        %v1176 = vpop.f32.mrf.mxu0
        %v1177 = vadd.f32 %v1108, %v1176
        %v1178 = vpop.f32.mrf.mxu0
        %1179 = vmatprep.mubr.f32.mxu0 0.0
        %1180 = vmatmul.mubr.f32.gmra.mxu0 %v1027
        %v1181 = vpop.f32.mrf.mxu0
        %v1182 = vadd.f32 %v1108, %v1181
        %v1183 = vpop.f32.mrf.mxu0
        %1184 = vdwg.mxu0
        %v1186 = vlaneseq
        %v1187 = vshrl.u32 %v1186, 7
        %v1188 = vsub.s32 0, %v1187
        %v1189 = vrot.slane %v1007, %v1188
        %1191 = vmatprep.subr.mxu0 0.0
        %1192 = vmatpush1.msra.mxu0 0.0
        %1193 = vmatprep.subr.mxu0 0.0
        %1194 = vmatpush1.msra.mxu0 0.0
        %1195 = vmatprep.subr.mxu0 0.0
        %1196 = vmatpush1.msra.mxu0 0.0
        %1197 = vmatprep.subr.mxu0 0.0
        %1198 = vmatpush1.msra.mxu0 0.0
        %1199 = vmatprep.subr.mxu0 0.0
        %1200 = vmatpush1.msra.mxu0 0.0
        %1201 = vmatprep.subr.mxu0 0.0
        %1202 = vmatpush1.msra.mxu0 0.0
        %1203 = vmatprep.subr.mxu0 0.0
        %1204 = vmatpush1.msra.mxu0 0.0
        %1205 = vmatprep.subr.mxu0 0.0
        %1206 = vmatpush1.msra.mxu0 0.0
        %1207 = vmatprep.subr.mxu0 0.0
        %1208 = vmatpush1.msra.mxu0 0.0
        %1209 = vmatprep.subr.mxu0 0.0
        %1210 = vmatpush1.msra.mxu0 0.0
        %1211 = vmatprep.subr.mxu0 0.0
        %1212 = vmatpush1.msra.mxu0 0.0
        %1213 = vmatprep.subr.mxu0 0.0
        %1214 = vmatpush1.msra.mxu0 0.0
        %1215 = vmatprep.subr.mxu0 0.0
        %1216 = vmatpush1.msra.mxu0 %v1000
        %1217 = vmatprep.subr.mxu0 0.0
        %1218 = vmatpush1.msra.mxu0 %v999
        %1219 = vmatprep.subr.mxu0 0.0
        %1220 = vmatpush1.msra.mxu0 %v998
        %1221 = vmatprep.subr.mxu0 0.0
        %1222 = vmatpush1.msra.mxu0 %v997
        %1223 = vmatprep.subr.mxu0 0.0
        %1224 = vmatpush2.msra.mxu0 0.0
        %1225 = vmatprep.subr.mxu0 0.0
        %1226 = vmatpush2.msra.mxu0 0.0
        %1227 = vmatprep.subr.mxu0 0.0
        %1228 = vmatpush2.msra.mxu0 0.0
        %1229 = vmatprep.subr.mxu0 0.0
        %1230 = vmatpush2.msra.mxu0 0.0
        %1231 = vmatprep.subr.mxu0 0.0
        %1232 = vmatpush2.msra.mxu0 0.0
        %1233 = vmatprep.subr.mxu0 0.0
        %1234 = vmatpush2.msra.mxu0 0.0
        %1235 = vmatprep.subr.mxu0 0.0
        %1236 = vmatpush2.msra.mxu0 0.0
        %1237 = vmatprep.subr.mxu0 0.0
        %1238 = vmatpush2.msra.mxu0 0.0
        %1239 = vmatprep.subr.mxu0 0.0
        %1240 = vmatpush2.msra.mxu0 0.0
        %1241 = vmatprep.subr.mxu0 0.0
        %1242 = vmatpush2.msra.mxu0 0.0
        %1243 = vmatprep.subr.mxu0 0.0
        %1244 = vmatpush2.msra.mxu0 0.0
        %1245 = vmatprep.subr.mxu0 0.0
        %1246 = vmatpush2.msra.mxu0 0.0
        %1247 = vmatprep.subr.mxu0 0.0
        %1248 = vmatpush2.msra.mxu0 0.0
        %1249 = vmatprep.subr.mxu0 0.0
        %1250 = vmatpush2.msra.mxu0 0.0
        %1251 = vmatprep.subr.mxu0 0.0
        %1252 = vmatpush2.msra.mxu0 0.0
        %1253 = vmatprep.subr.mxu0 0.0
        %1254 = vmatpush2.msra.mxu0 0.0
        %1255 = vmatprep.mubr.f32.mxu0 0.0
        %1256 = vmatmul.mubr.f32.gmra.mxu0 %v1024
        %v1257 = vpop.f32.mrf.mxu0
        %v1258 = vadd.f32 %v1189, %v1257
        %v1259 = vpop.f32.mrf.mxu0
        %1260 = vmatprep.mubr.f32.mxu0 0.0
        %1261 = vmatmul.mubr.f32.gmra.mxu0 %v1027
        %v1262 = vpop.f32.mrf.mxu0
        %v1263 = vadd.f32 %v1189, %v1262
        %v1264 = vpop.f32.mrf.mxu0
        %1265 = vdwg.mxu0
        %v1266 = vmul.f32 %v1096, 0.35355338
        %v1267 = vmul.f32 %v1101, 0.35355338
        %vm1268 = vcmask 64512
        %v1270 = vsel %vm1268, %v1266, 0
        %v1273 = vsel %vm1268, %v1177, 0
        %1275 = vmatprep.subr.mxu0 0.0
        %1276 = vmatpush1.xpose.msra.mxu0 0.0
        %1277 = vmatprep.subr.mxu0 0.0
        %1278 = vmatpush1.xpose.msra.mxu0 0.0
        %1279 = vmatprep.subr.mxu0 0.0
        %1280 = vmatpush1.xpose.msra.mxu0 0.0
        %1281 = vmatprep.subr.mxu0 0.0
        %1282 = vmatpush1.xpose.msra.mxu0 0.0
        %1283 = vmatprep.subr.mxu0 0.0
        %1284 = vmatpush1.xpose.msra.mxu0 0.0
        %1285 = vmatprep.subr.mxu0 0.0
        %1286 = vmatpush1.xpose.msra.mxu0 0.0
        %1287 = vmatprep.subr.mxu0 0.0
        %1288 = vmatpush1.xpose.msra.mxu0 0.0
        %1289 = vmatprep.subr.mxu0 0.0
        %1290 = vmatpush1.xpose.msra.mxu0 0.0
        %1291 = vmatprep.subr.mxu0 0.0
        %1292 = vmatpush1.xpose.msra.mxu0 0.0
        %1293 = vmatprep.subr.mxu0 0.0
        %1294 = vmatpush1.xpose.msra.mxu0 0.0
        %1295 = vmatprep.subr.mxu0 0.0
        %1296 = vmatpush1.xpose.msra.mxu0 0.0
        %1297 = vmatprep.subr.mxu0 0.0
        %1298 = vmatpush1.xpose.msra.mxu0 0.0
        %1299 = vmatprep.subr.mxu0 0.0
        %1300 = vmatpush1.xpose.msra.mxu0 0.0
        %1301 = vmatprep.subr.mxu0 0.0
        %1302 = vmatpush1.xpose.msra.mxu0 0.0
        %1303 = vmatprep.subr.mxu0 0.0
        %1304 = vmatpush1.xpose.msra.mxu0 0.0
        %1305 = vmatprep.subr.mxu0 0.0
        %1306 = vmatpush1.xpose.msra.mxu0 %v1273
        %1307 = vmatprep.subr.mxu0 0.0
        %1308 = vmatpush2.xpose.msra.mxu0 0.0
        %1309 = vmatprep.subr.mxu0 0.0
        %1310 = vmatpush2.xpose.msra.mxu0 0.0
        %1311 = vmatprep.subr.mxu0 0.0
        %1312 = vmatpush2.xpose.msra.mxu0 0.0
        %1313 = vmatprep.subr.mxu0 0.0
        %1314 = vmatpush2.xpose.msra.mxu0 0.0
        %1315 = vmatprep.subr.mxu0 0.0
        %1316 = vmatpush2.xpose.msra.mxu0 0.0
        %1317 = vmatprep.subr.mxu0 0.0
        %1318 = vmatpush2.xpose.msra.mxu0 0.0
        %1319 = vmatprep.subr.mxu0 0.0
        %1320 = vmatpush2.xpose.msra.mxu0 0.0
        %1321 = vmatprep.subr.mxu0 0.0
        %1322 = vmatpush2.xpose.msra.mxu0 0.0
        %1323 = vmatprep.subr.mxu0 0.0
        %1324 = vmatpush2.xpose.msra.mxu0 0.0
        %1325 = vmatprep.subr.mxu0 0.0
        %1326 = vmatpush2.xpose.msra.mxu0 0.0
        %1327 = vmatprep.subr.mxu0 0.0
        %1328 = vmatpush2.xpose.msra.mxu0 0.0
        %1329 = vmatprep.subr.mxu0 0.0
        %1330 = vmatpush2.xpose.msra.mxu0 0.0
        %1331 = vmatprep.subr.mxu0 0.0
        %1332 = vmatpush2.xpose.msra.mxu0 0.0
        %1333 = vmatprep.subr.mxu0 0.0
        %1334 = vmatpush2.xpose.msra.mxu0 0.0
        %1335 = vmatprep.subr.mxu0 0.0
        %1336 = vmatpush2.xpose.msra.mxu0 0.0
        %1337 = vmatprep.subr.mxu0 0.0
        %1338 = vmatpush2.xpose.msra.mxu0 0.0
        %1339 = vmatprep.mubr.f32.mxu0 0.0
        %1340 = vmatmul.mubr.f32.gmra.mxu0 %v1270
        %v1341 = vpop.f32.mrf.mxu0
        %v1342 = vadd.f32 0.0, %v1341
        %v1343 = vpop.f32.mrf.mxu0
        %1344 = vdwg.mxu0
        %v1346 = vsel %vm1268, %v1267, 0
        %v1349 = vsel %vm1268, %v1182, 0
        %1351 = vmatprep.subr.mxu0 0.0
        %1352 = vmatpush1.xpose.msra.mxu0 0.0
        %1353 = vmatprep.subr.mxu0 0.0
        %1354 = vmatpush1.xpose.msra.mxu0 0.0
        %1355 = vmatprep.subr.mxu0 0.0
        %1356 = vmatpush1.xpose.msra.mxu0 0.0
        %1357 = vmatprep.subr.mxu0 0.0
        %1358 = vmatpush1.xpose.msra.mxu0 0.0
        %1359 = vmatprep.subr.mxu0 0.0
        %1360 = vmatpush1.xpose.msra.mxu0 0.0
        %1361 = vmatprep.subr.mxu0 0.0
        %1362 = vmatpush1.xpose.msra.mxu0 0.0
        %1363 = vmatprep.subr.mxu0 0.0
        %1364 = vmatpush1.xpose.msra.mxu0 0.0
        %1365 = vmatprep.subr.mxu0 0.0
        %1366 = vmatpush1.xpose.msra.mxu0 0.0
        %1367 = vmatprep.subr.mxu0 0.0
        %1368 = vmatpush1.xpose.msra.mxu0 0.0
        %1369 = vmatprep.subr.mxu0 0.0
        %1370 = vmatpush1.xpose.msra.mxu0 0.0
        %1371 = vmatprep.subr.mxu0 0.0
        %1372 = vmatpush1.xpose.msra.mxu0 0.0
        %1373 = vmatprep.subr.mxu0 0.0
        %1374 = vmatpush1.xpose.msra.mxu0 0.0
        %1375 = vmatprep.subr.mxu0 0.0
        %1376 = vmatpush1.xpose.msra.mxu0 0.0
        %1377 = vmatprep.subr.mxu0 0.0
        %1378 = vmatpush1.xpose.msra.mxu0 0.0
        %1379 = vmatprep.subr.mxu0 0.0
        %1380 = vmatpush1.xpose.msra.mxu0 0.0
        %1381 = vmatprep.subr.mxu0 0.0
        %1382 = vmatpush1.xpose.msra.mxu0 %v1349
        %1383 = vmatprep.subr.mxu0 0.0
        %1384 = vmatpush2.xpose.msra.mxu0 0.0
        %1385 = vmatprep.subr.mxu0 0.0
        %1386 = vmatpush2.xpose.msra.mxu0 0.0
        %1387 = vmatprep.subr.mxu0 0.0
        %1388 = vmatpush2.xpose.msra.mxu0 0.0
        %1389 = vmatprep.subr.mxu0 0.0
        %1390 = vmatpush2.xpose.msra.mxu0 0.0
        %1391 = vmatprep.subr.mxu0 0.0
        %1392 = vmatpush2.xpose.msra.mxu0 0.0
        %1393 = vmatprep.subr.mxu0 0.0
        %1394 = vmatpush2.xpose.msra.mxu0 0.0
        %1395 = vmatprep.subr.mxu0 0.0
        %1396 = vmatpush2.xpose.msra.mxu0 0.0
        %1397 = vmatprep.subr.mxu0 0.0
        %1398 = vmatpush2.xpose.msra.mxu0 0.0
        %1399 = vmatprep.subr.mxu0 0.0
        %1400 = vmatpush2.xpose.msra.mxu0 0.0
        %1401 = vmatprep.subr.mxu0 0.0
        %1402 = vmatpush2.xpose.msra.mxu0 0.0
        %1403 = vmatprep.subr.mxu0 0.0
        %1404 = vmatpush2.xpose.msra.mxu0 0.0
        %1405 = vmatprep.subr.mxu0 0.0
        %1406 = vmatpush2.xpose.msra.mxu0 0.0
        %1407 = vmatprep.subr.mxu0 0.0
        %1408 = vmatpush2.xpose.msra.mxu0 0.0
        %1409 = vmatprep.subr.mxu0 0.0
        %1410 = vmatpush2.xpose.msra.mxu0 0.0
        %1411 = vmatprep.subr.mxu0 0.0
        %1412 = vmatpush2.xpose.msra.mxu0 0.0
        %1413 = vmatprep.subr.mxu0 0.0
        %1414 = vmatpush2.xpose.msra.mxu0 0.0
        %1415 = vmatprep.mubr.f32.mxu0 0.0
        %1416 = vmatmul.mubr.f32.gmra.mxu0 %v1346
        %v1417 = vpop.f32.mrf.mxu0
        %v1418 = vadd.f32 0.0, %v1417
        %v1419 = vpop.f32.mrf.mxu0
        %1420 = vdwg.mxu0
        %v1421 = vsel %vm1268, %v1342, -inf
        %1422 = vmax.xlane.f32.xlu0 %v1421
        %v1423 = vpop.xlane.xlu0 %1422
        %v1424 = vsel %vm1268, %v1418, -inf
        %1425 = vmax.xlane.f32.xlu0 %v1424
        %v1426 = vpop.xlane.xlu0 %1425
        %v1427 = vsub.f32 %v1342, %v1423
        %v1428 = vsub.f32 %v1418, %v1426
        %v1429 = vmul.f32 %v1427, 1.442695
        %v1430 = vpow.pop %v1429
        %v1431 = vmul.f32 %v1428, 1.442695
        %v1432 = vpow.pop %v1431
        %v1433 = vsel %vm1268, %v1430, 0.0
        %1434 = vadd.xlane.f32.xlu0 %v1433
        %v1435 = vpop.xlane.xlu0 %1434
        %v1436 = vsel %vm1268, %v1432, 0.0
        %1437 = vadd.xlane.f32.xlu0 %v1436
        %v1438 = vpop.xlane.xlu0 %1437
        %v1439 = vrcp.pop %v1435
        %v1440 = vmul.f32 %v1430, %v1439
        %v1441 = vrcp.pop %v1438
        %v1442 = vmul.f32 %v1432, %v1441
        %v1444 = vsel %vm1268, %v1440, 0
        %1446 = vmatprep.subr.mxu0 0.0
        %1447 = vmatpush1.msra.mxu0 0.0
        %1448 = vmatprep.subr.mxu0 0.0
        %1449 = vmatpush1.msra.mxu0 0.0
        %1450 = vmatprep.subr.mxu0 0.0
        %1451 = vmatpush1.msra.mxu0 0.0
        %1452 = vmatprep.subr.mxu0 0.0
        %1453 = vmatpush1.msra.mxu0 0.0
        %1454 = vmatprep.subr.mxu0 0.0
        %1455 = vmatpush1.msra.mxu0 0.0
        %1456 = vmatprep.subr.mxu0 0.0
        %1457 = vmatpush1.msra.mxu0 0.0
        %1458 = vmatprep.subr.mxu0 0.0
        %1459 = vmatpush1.msra.mxu0 0.0
        %1460 = vmatprep.subr.mxu0 0.0
        %1461 = vmatpush1.msra.mxu0 0.0
        %1462 = vmatprep.subr.mxu0 0.0
        %1463 = vmatpush1.msra.mxu0 0.0
        %1464 = vmatprep.subr.mxu0 0.0
        %1465 = vmatpush1.msra.mxu0 0.0
        %1466 = vmatprep.subr.mxu0 0.0
        %1467 = vmatpush1.msra.mxu0 0.0
        %1468 = vmatprep.subr.mxu0 0.0
        %1469 = vmatpush1.msra.mxu0 0.0
        %1470 = vmatprep.subr.mxu0 0.0
        %1471 = vmatpush1.msra.mxu0 0.0
        %1472 = vmatprep.subr.mxu0 0.0
        %1473 = vmatpush1.msra.mxu0 0.0
        %1474 = vmatprep.subr.mxu0 0.0
        %1475 = vmatpush1.msra.mxu0 0.0
        %1476 = vmatprep.subr.mxu0 0.0
        %1477 = vmatpush1.msra.mxu0 %v1258
        %1478 = vmatprep.subr.mxu0 0.0
        %1479 = vmatpush2.msra.mxu0 0.0
        %1480 = vmatprep.subr.mxu0 0.0
        %1481 = vmatpush2.msra.mxu0 0.0
        %1482 = vmatprep.subr.mxu0 0.0
        %1483 = vmatpush2.msra.mxu0 0.0
        %1484 = vmatprep.subr.mxu0 0.0
        %1485 = vmatpush2.msra.mxu0 0.0
        %1486 = vmatprep.subr.mxu0 0.0
        %1487 = vmatpush2.msra.mxu0 0.0
        %1488 = vmatprep.subr.mxu0 0.0
        %1489 = vmatpush2.msra.mxu0 0.0
        %1490 = vmatprep.subr.mxu0 0.0
        %1491 = vmatpush2.msra.mxu0 0.0
        %1492 = vmatprep.subr.mxu0 0.0
        %1493 = vmatpush2.msra.mxu0 0.0
        %1494 = vmatprep.subr.mxu0 0.0
        %1495 = vmatpush2.msra.mxu0 0.0
        %1496 = vmatprep.subr.mxu0 0.0
        %1497 = vmatpush2.msra.mxu0 0.0
        %1498 = vmatprep.subr.mxu0 0.0
        %1499 = vmatpush2.msra.mxu0 0.0
        %1500 = vmatprep.subr.mxu0 0.0
        %1501 = vmatpush2.msra.mxu0 0.0
        %1502 = vmatprep.subr.mxu0 0.0
        %1503 = vmatpush2.msra.mxu0 0.0
        %1504 = vmatprep.subr.mxu0 0.0
        %1505 = vmatpush2.msra.mxu0 0.0
        %1506 = vmatprep.subr.mxu0 0.0
        %1507 = vmatpush2.msra.mxu0 0.0
        %1508 = vmatprep.subr.mxu0 0.0
        %1509 = vmatpush2.msra.mxu0 0.0
        %1510 = vmatprep.mubr.f32.mxu0 0.0
        %1511 = vmatmul.mubr.f32.gmra.mxu0 %v1444
        %v1512 = vpop.f32.mrf.mxu0
        %v1513 = vadd.f32 0.0, %v1512
        %v1514 = vpop.f32.mrf.mxu0
        %1515 = vdwg.mxu0
        %v1517 = vsel %vm1268, %v1442, 0
        %1519 = vmatprep.subr.mxu0 0.0
        %1520 = vmatpush1.msra.mxu0 0.0
        %1521 = vmatprep.subr.mxu0 0.0
        %1522 = vmatpush1.msra.mxu0 0.0
        %1523 = vmatprep.subr.mxu0 0.0
        %1524 = vmatpush1.msra.mxu0 0.0
        %1525 = vmatprep.subr.mxu0 0.0
        %1526 = vmatpush1.msra.mxu0 0.0
        %1527 = vmatprep.subr.mxu0 0.0
        %1528 = vmatpush1.msra.mxu0 0.0
        %1529 = vmatprep.subr.mxu0 0.0
        %1530 = vmatpush1.msra.mxu0 0.0
        %1531 = vmatprep.subr.mxu0 0.0
        %1532 = vmatpush1.msra.mxu0 0.0
        %1533 = vmatprep.subr.mxu0 0.0
        %1534 = vmatpush1.msra.mxu0 0.0
        %1535 = vmatprep.subr.mxu0 0.0
        %1536 = vmatpush1.msra.mxu0 0.0
        %1537 = vmatprep.subr.mxu0 0.0
        %1538 = vmatpush1.msra.mxu0 0.0
        %1539 = vmatprep.subr.mxu0 0.0
        %1540 = vmatpush1.msra.mxu0 0.0
        %1541 = vmatprep.subr.mxu0 0.0
        %1542 = vmatpush1.msra.mxu0 0.0
        %1543 = vmatprep.subr.mxu0 0.0
        %1544 = vmatpush1.msra.mxu0 0.0
        %1545 = vmatprep.subr.mxu0 0.0
        %1546 = vmatpush1.msra.mxu0 0.0
        %1547 = vmatprep.subr.mxu0 0.0
        %1548 = vmatpush1.msra.mxu0 0.0
        %1549 = vmatprep.subr.mxu0 0.0
        %1550 = vmatpush1.msra.mxu0 %v1263
        %1551 = vmatprep.subr.mxu0 0.0
        %1552 = vmatpush2.msra.mxu0 0.0
        %1553 = vmatprep.subr.mxu0 0.0
        %1554 = vmatpush2.msra.mxu0 0.0
        %1555 = vmatprep.subr.mxu0 0.0
        %1556 = vmatpush2.msra.mxu0 0.0
        %1557 = vmatprep.subr.mxu0 0.0
        %1558 = vmatpush2.msra.mxu0 0.0
        %1559 = vmatprep.subr.mxu0 0.0
        %1560 = vmatpush2.msra.mxu0 0.0
        %1561 = vmatprep.subr.mxu0 0.0
        %1562 = vmatpush2.msra.mxu0 0.0
        %1563 = vmatprep.subr.mxu0 0.0
        %1564 = vmatpush2.msra.mxu0 0.0
        %1565 = vmatprep.subr.mxu0 0.0
        %1566 = vmatpush2.msra.mxu0 0.0
        %1567 = vmatprep.subr.mxu0 0.0
        %1568 = vmatpush2.msra.mxu0 0.0
        %1569 = vmatprep.subr.mxu0 0.0
        %1570 = vmatpush2.msra.mxu0 0.0
        %1571 = vmatprep.subr.mxu0 0.0
        %1572 = vmatpush2.msra.mxu0 0.0
        %1573 = vmatprep.subr.mxu0 0.0
        %1574 = vmatpush2.msra.mxu0 0.0
        %1575 = vmatprep.subr.mxu0 0.0
        %1576 = vmatpush2.msra.mxu0 0.0
        %1577 = vmatprep.subr.mxu0 0.0
        %1578 = vmatpush2.msra.mxu0 0.0
        %1579 = vmatprep.subr.mxu0 0.0
        %1580 = vmatpush2.msra.mxu0 0.0
        %1581 = vmatprep.subr.mxu0 0.0
        %1582 = vmatpush2.msra.mxu0 0.0
        %1583 = vmatprep.mubr.f32.mxu0 0.0
        %1584 = vmatmul.mubr.f32.gmra.mxu0 %v1517
        %v1585 = vpop.f32.mrf.mxu0
        %v1586 = vadd.f32 0.0, %v1585
        %v1587 = vpop.f32.mrf.mxu0
        %1588 = vdwg.mxu0
        %v1590 = vsel %vm1268, %v1513, 0
        %v1593 = vsel %vm1268, %v1586, 0
        %1595 = vmatprep.subr.mxu0 0.0
        %1596 = vmatpush1.msra.mxu0 0.0
        %1597 = vmatprep.subr.mxu0 0.0
        %1598 = vmatpush1.msra.mxu0 0.0
        %1599 = vmatprep.subr.mxu0 0.0
        %1600 = vmatpush1.msra.mxu0 0.0
        %1601 = vmatprep.subr.mxu0 0.0
        %1602 = vmatpush1.msra.mxu0 0.0
        %1603 = vmatprep.subr.mxu0 0.0
        %1604 = vmatpush1.msra.mxu0 0.0
        %1605 = vmatprep.subr.mxu0 0.0
        %1606 = vmatpush1.msra.mxu0 0.0
        %1607 = vmatprep.subr.mxu0 0.0
        %1608 = vmatpush1.msra.mxu0 0.0
        %1609 = vmatprep.subr.mxu0 0.0
        %1610 = vmatpush1.msra.mxu0 0.0
        %1611 = vmatprep.subr.mxu0 0.0
        %1612 = vmatpush1.msra.mxu0 0.0
        %1613 = vmatprep.subr.mxu0 0.0
        %1614 = vmatpush1.msra.mxu0 0.0
        %1615 = vmatprep.subr.mxu0 0.0
        %1616 = vmatpush1.msra.mxu0 0.0
        %1617 = vmatprep.subr.mxu0 0.0
        %1618 = vmatpush1.msra.mxu0 0.0
        %1619 = vmatprep.subr.mxu0 0.0
        %1620 = vmatpush1.msra.mxu0 0.0
        %1621 = vmatprep.subr.mxu0 0.0
        %1622 = vmatpush1.msra.mxu0 0.0
        %1623 = vmatprep.subr.mxu0 0.0
        %1624 = vmatpush1.msra.mxu0 0.0
        %1625 = vmatprep.subr.mxu0 0.0
        %1626 = vmatpush1.msra.mxu0 %v1001
        %1627 = vmatprep.subr.mxu0 0.0
        %1628 = vmatpush2.msra.mxu0 0.0
        %1629 = vmatprep.subr.mxu0 0.0
        %1630 = vmatpush2.msra.mxu0 0.0
        %1631 = vmatprep.subr.mxu0 0.0
        %1632 = vmatpush2.msra.mxu0 0.0
        %1633 = vmatprep.subr.mxu0 0.0
        %1634 = vmatpush2.msra.mxu0 0.0
        %1635 = vmatprep.subr.mxu0 0.0
        %1636 = vmatpush2.msra.mxu0 0.0
        %1637 = vmatprep.subr.mxu0 0.0
        %1638 = vmatpush2.msra.mxu0 0.0
        %1639 = vmatprep.subr.mxu0 0.0
        %1640 = vmatpush2.msra.mxu0 0.0
        %1641 = vmatprep.subr.mxu0 0.0
        %1642 = vmatpush2.msra.mxu0 0.0
        %1643 = vmatprep.subr.mxu0 0.0
        %1644 = vmatpush2.msra.mxu0 0.0
        %1645 = vmatprep.subr.mxu0 0.0
        %1646 = vmatpush2.msra.mxu0 0.0
        %1647 = vmatprep.subr.mxu0 0.0
        %1648 = vmatpush2.msra.mxu0 0.0
        %1649 = vmatprep.subr.mxu0 0.0
        %1650 = vmatpush2.msra.mxu0 0.0
        %1651 = vmatprep.subr.mxu0 0.0
        %1652 = vmatpush2.msra.mxu0 0.0
        %1653 = vmatprep.subr.mxu0 0.0
        %1654 = vmatpush2.msra.mxu0 0.0
        %1655 = vmatprep.subr.mxu0 0.0
        %1656 = vmatpush2.msra.mxu0 0.0
        %1657 = vmatprep.subr.mxu0 0.0
        %1658 = vmatpush2.msra.mxu0 0.0
        %1659 = vmatprep.mubr.f32.mxu0 0.0
        %1660 = vmatmul.mubr.f32.gmra.mxu0 %v1590
        %v1661 = vpop.f32.mrf.mxu0
        %v1662 = vadd.f32 0.0, %v1661
        %v1663 = vpop.f32.mrf.mxu0
        %1664 = vmatprep.mubr.f32.mxu0 0.0
        %1665 = vmatmul.mubr.f32.gmra.mxu0 %v1593
        %v1666 = vpop.f32.mrf.mxu0
        %v1667 = vadd.f32 0.0, %v1666
        %v1668 = vpop.f32.mrf.mxu0
        %1669 = vdwg.mxu0
        %v1670 = vadd.f32 %v1015, %v1662
        %v1671 = vadd.f32 %v1016, %v1667
        %1676 = vrot.lane.b32.xlu0 %v989, 120
        %v1677 = vpop.permute.xlu0 %1676
        %1678 = vrot.lane.b32.xlu0 %v990, 120
        %v1679 = vpop.permute.xlu0 %1678
        %1680 = vrot.lane.b32.xlu0 %v991, 120
        %v1681 = vpop.permute.xlu0 %1680
        %1682 = vrot.lane.b32.xlu0 %v992, 120
        %v1683 = vpop.permute.xlu0 %1682
        %1688 = vrot.lane.b32.xlu0 %v1021, 120
        %v1689 = vpop.permute.xlu0 %1688
        %1691 = vmatprep.subr.mxu0 0.0
        %1692 = vmatpush1.msra.mxu0 0.0
        %1693 = vmatprep.subr.mxu0 0.0
        %1694 = vmatpush1.msra.mxu0 0.0
        %1695 = vmatprep.subr.mxu0 0.0
        %1696 = vmatpush1.msra.mxu0 0.0
        %1697 = vmatprep.subr.mxu0 0.0
        %1698 = vmatpush1.msra.mxu0 0.0
        %1699 = vmatprep.subr.mxu0 0.0
        %1700 = vmatpush1.msra.mxu0 0.0
        %1701 = vmatprep.subr.mxu0 0.0
        %1702 = vmatpush1.msra.mxu0 0.0
        %1703 = vmatprep.subr.mxu0 0.0
        %1704 = vmatpush1.msra.mxu0 0.0
        %1705 = vmatprep.subr.mxu0 0.0
        %1706 = vmatpush1.msra.mxu0 0.0
        %1707 = vmatprep.subr.mxu0 0.0
        %1708 = vmatpush1.msra.mxu0 0.0
        %1709 = vmatprep.subr.mxu0 0.0
        %1710 = vmatpush1.msra.mxu0 0.0
        %1711 = vmatprep.subr.mxu0 0.0
        %1712 = vmatpush1.msra.mxu0 0.0
        %1713 = vmatprep.subr.mxu0 0.0
        %1714 = vmatpush1.msra.mxu0 0.0
        %1715 = vmatprep.subr.mxu0 0.0
        %1716 = vmatpush1.msra.mxu0 %v1683
        %1717 = vmatprep.subr.mxu0 0.0
        %1718 = vmatpush1.msra.mxu0 %v1681
        %1719 = vmatprep.subr.mxu0 0.0
        %1720 = vmatpush1.msra.mxu0 %v1679
        %1721 = vmatprep.subr.mxu0 0.0
        %1722 = vmatpush1.msra.mxu0 %v1677
        %1723 = vmatprep.subr.mxu0 0.0
        %1724 = vmatpush2.msra.mxu0 0.0
        %1725 = vmatprep.subr.mxu0 0.0
        %1726 = vmatpush2.msra.mxu0 0.0
        %1727 = vmatprep.subr.mxu0 0.0
        %1728 = vmatpush2.msra.mxu0 0.0
        %1729 = vmatprep.subr.mxu0 0.0
        %1730 = vmatpush2.msra.mxu0 0.0
        %1731 = vmatprep.subr.mxu0 0.0
        %1732 = vmatpush2.msra.mxu0 0.0
        %1733 = vmatprep.subr.mxu0 0.0
        %1734 = vmatpush2.msra.mxu0 0.0
        %1735 = vmatprep.subr.mxu0 0.0
        %1736 = vmatpush2.msra.mxu0 0.0
        %1737 = vmatprep.subr.mxu0 0.0
        %1738 = vmatpush2.msra.mxu0 0.0
        %1739 = vmatprep.subr.mxu0 0.0
        %1740 = vmatpush2.msra.mxu0 0.0
        %1741 = vmatprep.subr.mxu0 0.0
        %1742 = vmatpush2.msra.mxu0 0.0
        %1743 = vmatprep.subr.mxu0 0.0
        %1744 = vmatpush2.msra.mxu0 0.0
        %1745 = vmatprep.subr.mxu0 0.0
        %1746 = vmatpush2.msra.mxu0 0.0
        %1747 = vmatprep.subr.mxu0 0.0
        %1748 = vmatpush2.msra.mxu0 0.0
        %1749 = vmatprep.subr.mxu0 0.0
        %1750 = vmatpush2.msra.mxu0 0.0
        %1751 = vmatprep.subr.mxu0 0.0
        %1752 = vmatpush2.msra.mxu0 0.0
        %1753 = vmatprep.subr.mxu0 0.0
        %1754 = vmatpush2.msra.mxu0 0.0
        %1755 = vmatprep.mubr.f32.mxu0 0.0
        %1756 = vmatmul.mubr.f32.gmra.mxu0 %v1024
        %v1757 = vpop.f32.mrf.mxu0
        %v1758 = vadd.f32 %v1689, %v1757
        %v1759 = vpop.f32.mrf.mxu0
        %1760 = vmatprep.mubr.f32.mxu0 0.0
        %1761 = vmatmul.mubr.f32.gmra.mxu0 %v1027
        %v1762 = vpop.f32.mrf.mxu0
        %v1763 = vadd.f32 %v1689, %v1762
        %v1764 = vpop.f32.mrf.mxu0
        %1765 = vdwg.mxu0
        %1770 = vrot.lane.b32.xlu0 %v993, 120
        %v1771 = vpop.permute.xlu0 %1770
        %1772 = vrot.lane.b32.xlu0 %v994, 120
        %v1773 = vpop.permute.xlu0 %1772
        %1774 = vrot.lane.b32.xlu0 %v995, 120
        %v1775 = vpop.permute.xlu0 %1774
        %1776 = vrot.lane.b32.xlu0 %v996, 120
        %v1777 = vpop.permute.xlu0 %1776
        %1782 = vrot.lane.b32.xlu0 %v1108, 120
        %v1783 = vpop.permute.xlu0 %1782
        %1785 = vmatprep.subr.mxu0 0.0
        %1786 = vmatpush1.msra.mxu0 0.0
        %1787 = vmatprep.subr.mxu0 0.0
        %1788 = vmatpush1.msra.mxu0 0.0
        %1789 = vmatprep.subr.mxu0 0.0
        %1790 = vmatpush1.msra.mxu0 0.0
        %1791 = vmatprep.subr.mxu0 0.0
        %1792 = vmatpush1.msra.mxu0 0.0
        %1793 = vmatprep.subr.mxu0 0.0
        %1794 = vmatpush1.msra.mxu0 0.0
        %1795 = vmatprep.subr.mxu0 0.0
        %1796 = vmatpush1.msra.mxu0 0.0
        %1797 = vmatprep.subr.mxu0 0.0
        %1798 = vmatpush1.msra.mxu0 0.0
        %1799 = vmatprep.subr.mxu0 0.0
        %1800 = vmatpush1.msra.mxu0 0.0
        %1801 = vmatprep.subr.mxu0 0.0
        %1802 = vmatpush1.msra.mxu0 0.0
        %1803 = vmatprep.subr.mxu0 0.0
        %1804 = vmatpush1.msra.mxu0 0.0
        %1805 = vmatprep.subr.mxu0 0.0
        %1806 = vmatpush1.msra.mxu0 0.0
        %1807 = vmatprep.subr.mxu0 0.0
        %1808 = vmatpush1.msra.mxu0 0.0
        %1809 = vmatprep.subr.mxu0 0.0
        %1810 = vmatpush1.msra.mxu0 %v1777
        %1811 = vmatprep.subr.mxu0 0.0
        %1812 = vmatpush1.msra.mxu0 %v1775
        %1813 = vmatprep.subr.mxu0 0.0
        %1814 = vmatpush1.msra.mxu0 %v1773
        %1815 = vmatprep.subr.mxu0 0.0
        %1816 = vmatpush1.msra.mxu0 %v1771
        %1817 = vmatprep.subr.mxu0 0.0
        %1818 = vmatpush2.msra.mxu0 0.0
        %1819 = vmatprep.subr.mxu0 0.0
        %1820 = vmatpush2.msra.mxu0 0.0
        %1821 = vmatprep.subr.mxu0 0.0
        %1822 = vmatpush2.msra.mxu0 0.0
        %1823 = vmatprep.subr.mxu0 0.0
        %1824 = vmatpush2.msra.mxu0 0.0
        %1825 = vmatprep.subr.mxu0 0.0
        %1826 = vmatpush2.msra.mxu0 0.0
        %1827 = vmatprep.subr.mxu0 0.0
        %1828 = vmatpush2.msra.mxu0 0.0
        %1829 = vmatprep.subr.mxu0 0.0
        %1830 = vmatpush2.msra.mxu0 0.0
        %1831 = vmatprep.subr.mxu0 0.0
        %1832 = vmatpush2.msra.mxu0 0.0
        %1833 = vmatprep.subr.mxu0 0.0
        %1834 = vmatpush2.msra.mxu0 0.0
        %1835 = vmatprep.subr.mxu0 0.0
        %1836 = vmatpush2.msra.mxu0 0.0
        %1837 = vmatprep.subr.mxu0 0.0
        %1838 = vmatpush2.msra.mxu0 0.0
        %1839 = vmatprep.subr.mxu0 0.0
        %1840 = vmatpush2.msra.mxu0 0.0
        %1841 = vmatprep.subr.mxu0 0.0
        %1842 = vmatpush2.msra.mxu0 0.0
        %1843 = vmatprep.subr.mxu0 0.0
        %1844 = vmatpush2.msra.mxu0 0.0
        %1845 = vmatprep.subr.mxu0 0.0
        %1846 = vmatpush2.msra.mxu0 0.0
        %1847 = vmatprep.subr.mxu0 0.0
        %1848 = vmatpush2.msra.mxu0 0.0
        %1849 = vmatprep.mubr.f32.mxu0 0.0
        %1850 = vmatmul.mubr.f32.gmra.mxu0 %v1024
        %v1851 = vpop.f32.mrf.mxu0
        %v1852 = vadd.f32 %v1783, %v1851
        %v1853 = vpop.f32.mrf.mxu0
        %1854 = vmatprep.mubr.f32.mxu0 0.0
        %1855 = vmatmul.mubr.f32.gmra.mxu0 %v1027
        %v1856 = vpop.f32.mrf.mxu0
        %v1857 = vadd.f32 %v1783, %v1856
        %v1858 = vpop.f32.mrf.mxu0
        %1859 = vdwg.mxu0
        %1864 = vrot.lane.b32.xlu0 %v997, 120
        %v1865 = vpop.permute.xlu0 %1864
        %1866 = vrot.lane.b32.xlu0 %v998, 120
        %v1867 = vpop.permute.xlu0 %1866
        %1868 = vrot.lane.b32.xlu0 %v999, 120
        %v1869 = vpop.permute.xlu0 %1868
        %1870 = vrot.lane.b32.xlu0 %v1000, 120
        %v1871 = vpop.permute.xlu0 %1870
        %1876 = vrot.lane.b32.xlu0 %v1189, 120
        %v1877 = vpop.permute.xlu0 %1876
        %1879 = vmatprep.subr.mxu0 0.0
        %1880 = vmatpush1.msra.mxu0 0.0
        %1881 = vmatprep.subr.mxu0 0.0
        %1882 = vmatpush1.msra.mxu0 0.0
        %1883 = vmatprep.subr.mxu0 0.0
        %1884 = vmatpush1.msra.mxu0 0.0
        %1885 = vmatprep.subr.mxu0 0.0
        %1886 = vmatpush1.msra.mxu0 0.0
        %1887 = vmatprep.subr.mxu0 0.0
        %1888 = vmatpush1.msra.mxu0 0.0
        %1889 = vmatprep.subr.mxu0 0.0
        %1890 = vmatpush1.msra.mxu0 0.0
        %1891 = vmatprep.subr.mxu0 0.0
        %1892 = vmatpush1.msra.mxu0 0.0
        %1893 = vmatprep.subr.mxu0 0.0
        %1894 = vmatpush1.msra.mxu0 0.0
        %1895 = vmatprep.subr.mxu0 0.0
        %1896 = vmatpush1.msra.mxu0 0.0
        %1897 = vmatprep.subr.mxu0 0.0
        %1898 = vmatpush1.msra.mxu0 0.0
        %1899 = vmatprep.subr.mxu0 0.0
        %1900 = vmatpush1.msra.mxu0 0.0
        %1901 = vmatprep.subr.mxu0 0.0
        %1902 = vmatpush1.msra.mxu0 0.0
        %1903 = vmatprep.subr.mxu0 0.0
        %1904 = vmatpush1.msra.mxu0 %v1871
        %1905 = vmatprep.subr.mxu0 0.0
        %1906 = vmatpush1.msra.mxu0 %v1869
        %1907 = vmatprep.subr.mxu0 0.0
        %1908 = vmatpush1.msra.mxu0 %v1867
        %1909 = vmatprep.subr.mxu0 0.0
        %1910 = vmatpush1.msra.mxu0 %v1865
        %1911 = vmatprep.subr.mxu0 0.0
        %1912 = vmatpush2.msra.mxu0 0.0
        %1913 = vmatprep.subr.mxu0 0.0
        %1914 = vmatpush2.msra.mxu0 0.0
        %1915 = vmatprep.subr.mxu0 0.0
        %1916 = vmatpush2.msra.mxu0 0.0
        %1917 = vmatprep.subr.mxu0 0.0
        %1918 = vmatpush2.msra.mxu0 0.0
        %1919 = vmatprep.subr.mxu0 0.0
        %1920 = vmatpush2.msra.mxu0 0.0
        %1921 = vmatprep.subr.mxu0 0.0
        %1922 = vmatpush2.msra.mxu0 0.0
        %1923 = vmatprep.subr.mxu0 0.0
        %1924 = vmatpush2.msra.mxu0 0.0
        %1925 = vmatprep.subr.mxu0 0.0
        %1926 = vmatpush2.msra.mxu0 0.0
        %1927 = vmatprep.subr.mxu0 0.0
        %1928 = vmatpush2.msra.mxu0 0.0
        %1929 = vmatprep.subr.mxu0 0.0
        %1930 = vmatpush2.msra.mxu0 0.0
        %1931 = vmatprep.subr.mxu0 0.0
        %1932 = vmatpush2.msra.mxu0 0.0
        %1933 = vmatprep.subr.mxu0 0.0
        %1934 = vmatpush2.msra.mxu0 0.0
        %1935 = vmatprep.subr.mxu0 0.0
        %1936 = vmatpush2.msra.mxu0 0.0
        %1937 = vmatprep.subr.mxu0 0.0
        %1938 = vmatpush2.msra.mxu0 0.0
        %1939 = vmatprep.subr.mxu0 0.0
        %1940 = vmatpush2.msra.mxu0 0.0
        %1941 = vmatprep.subr.mxu0 0.0
        %1942 = vmatpush2.msra.mxu0 0.0
        %1943 = vmatprep.mubr.f32.mxu0 0.0
        %1944 = vmatmul.mubr.f32.gmra.mxu0 %v1024
        %v1945 = vpop.f32.mrf.mxu0
        %v1946 = vadd.f32 %v1877, %v1945
        %v1947 = vpop.f32.mrf.mxu0
        %1948 = vmatprep.mubr.f32.mxu0 0.0
        %1949 = vmatmul.mubr.f32.gmra.mxu0 %v1027
        %v1950 = vpop.f32.mrf.mxu0
        %v1951 = vadd.f32 %v1877, %v1950
        %v1952 = vpop.f32.mrf.mxu0
        %1953 = vdwg.mxu0
        %v1954 = vmul.f32 %v1758, 0.35355338
        %v1955 = vmul.f32 %v1763, 0.35355338
        %v1957 = vsel %vm1268, %v1954, 0
        %v1960 = vsel %vm1268, %v1852, 0
        %1962 = vmatprep.subr.mxu0 0.0
        %1963 = vmatpush1.xpose.msra.mxu0 0.0
        %1964 = vmatprep.subr.mxu0 0.0
        %1965 = vmatpush1.xpose.msra.mxu0 0.0
        %1966 = vmatprep.subr.mxu0 0.0
        %1967 = vmatpush1.xpose.msra.mxu0 0.0
        %1968 = vmatprep.subr.mxu0 0.0
        %1969 = vmatpush1.xpose.msra.mxu0 0.0
        %1970 = vmatprep.subr.mxu0 0.0
        %1971 = vmatpush1.xpose.msra.mxu0 0.0
        %1972 = vmatprep.subr.mxu0 0.0
        %1973 = vmatpush1.xpose.msra.mxu0 0.0
        %1974 = vmatprep.subr.mxu0 0.0
        %1975 = vmatpush1.xpose.msra.mxu0 0.0
        %1976 = vmatprep.subr.mxu0 0.0
        %1977 = vmatpush1.xpose.msra.mxu0 0.0
        %1978 = vmatprep.subr.mxu0 0.0
        %1979 = vmatpush1.xpose.msra.mxu0 0.0
        %1980 = vmatprep.subr.mxu0 0.0
        %1981 = vmatpush1.xpose.msra.mxu0 0.0
        %1982 = vmatprep.subr.mxu0 0.0
        %1983 = vmatpush1.xpose.msra.mxu0 0.0
        %1984 = vmatprep.subr.mxu0 0.0
        %1985 = vmatpush1.xpose.msra.mxu0 0.0
        %1986 = vmatprep.subr.mxu0 0.0
        %1987 = vmatpush1.xpose.msra.mxu0 0.0
        %1988 = vmatprep.subr.mxu0 0.0
        %1989 = vmatpush1.xpose.msra.mxu0 0.0
        %1990 = vmatprep.subr.mxu0 0.0
        %1991 = vmatpush1.xpose.msra.mxu0 0.0
        %1992 = vmatprep.subr.mxu0 0.0
        %1993 = vmatpush1.xpose.msra.mxu0 %v1960
        %1994 = vmatprep.subr.mxu0 0.0
        %1995 = vmatpush2.xpose.msra.mxu0 0.0
        %1996 = vmatprep.subr.mxu0 0.0
        %1997 = vmatpush2.xpose.msra.mxu0 0.0
        %1998 = vmatprep.subr.mxu0 0.0
        %1999 = vmatpush2.xpose.msra.mxu0 0.0
        %2000 = vmatprep.subr.mxu0 0.0
        %2001 = vmatpush2.xpose.msra.mxu0 0.0
        %2002 = vmatprep.subr.mxu0 0.0
        %2003 = vmatpush2.xpose.msra.mxu0 0.0
        %2004 = vmatprep.subr.mxu0 0.0
        %2005 = vmatpush2.xpose.msra.mxu0 0.0
        %2006 = vmatprep.subr.mxu0 0.0
        %2007 = vmatpush2.xpose.msra.mxu0 0.0
        %2008 = vmatprep.subr.mxu0 0.0
        %2009 = vmatpush2.xpose.msra.mxu0 0.0
        %2010 = vmatprep.subr.mxu0 0.0
        %2011 = vmatpush2.xpose.msra.mxu0 0.0
        %2012 = vmatprep.subr.mxu0 0.0
        %2013 = vmatpush2.xpose.msra.mxu0 0.0
        %2014 = vmatprep.subr.mxu0 0.0
        %2015 = vmatpush2.xpose.msra.mxu0 0.0
        %2016 = vmatprep.subr.mxu0 0.0
        %2017 = vmatpush2.xpose.msra.mxu0 0.0
        %2018 = vmatprep.subr.mxu0 0.0
        %2019 = vmatpush2.xpose.msra.mxu0 0.0
        %2020 = vmatprep.subr.mxu0 0.0
        %2021 = vmatpush2.xpose.msra.mxu0 0.0
        %2022 = vmatprep.subr.mxu0 0.0
        %2023 = vmatpush2.xpose.msra.mxu0 0.0
        %2024 = vmatprep.subr.mxu0 0.0
        %2025 = vmatpush2.xpose.msra.mxu0 0.0
        %2026 = vmatprep.mubr.f32.mxu0 0.0
        %2027 = vmatmul.mubr.f32.gmra.mxu0 %v1957
        %v2028 = vpop.f32.mrf.mxu0
        %v2029 = vadd.f32 0.0, %v2028
        %v2030 = vpop.f32.mrf.mxu0
        %2031 = vdwg.mxu0
        %v2033 = vsel %vm1268, %v1955, 0
        %v2036 = vsel %vm1268, %v1857, 0
        %2038 = vmatprep.subr.mxu0 0.0
        %2039 = vmatpush1.xpose.msra.mxu0 0.0
        %2040 = vmatprep.subr.mxu0 0.0
        %2041 = vmatpush1.xpose.msra.mxu0 0.0
        %2042 = vmatprep.subr.mxu0 0.0
        %2043 = vmatpush1.xpose.msra.mxu0 0.0
        %2044 = vmatprep.subr.mxu0 0.0
        %2045 = vmatpush1.xpose.msra.mxu0 0.0
        %2046 = vmatprep.subr.mxu0 0.0
        %2047 = vmatpush1.xpose.msra.mxu0 0.0
        %2048 = vmatprep.subr.mxu0 0.0
        %2049 = vmatpush1.xpose.msra.mxu0 0.0
        %2050 = vmatprep.subr.mxu0 0.0
        %2051 = vmatpush1.xpose.msra.mxu0 0.0
        %2052 = vmatprep.subr.mxu0 0.0
        %2053 = vmatpush1.xpose.msra.mxu0 0.0
        %2054 = vmatprep.subr.mxu0 0.0
        %2055 = vmatpush1.xpose.msra.mxu0 0.0
        %2056 = vmatprep.subr.mxu0 0.0
        %2057 = vmatpush1.xpose.msra.mxu0 0.0
        %2058 = vmatprep.subr.mxu0 0.0
        %2059 = vmatpush1.xpose.msra.mxu0 0.0
        %2060 = vmatprep.subr.mxu0 0.0
        %2061 = vmatpush1.xpose.msra.mxu0 0.0
        %2062 = vmatprep.subr.mxu0 0.0
        %2063 = vmatpush1.xpose.msra.mxu0 0.0
        %2064 = vmatprep.subr.mxu0 0.0
        %2065 = vmatpush1.xpose.msra.mxu0 0.0
        %2066 = vmatprep.subr.mxu0 0.0
        %2067 = vmatpush1.xpose.msra.mxu0 0.0
        %2068 = vmatprep.subr.mxu0 0.0
        %2069 = vmatpush1.xpose.msra.mxu0 %v2036
        %2070 = vmatprep.subr.mxu0 0.0
        %2071 = vmatpush2.xpose.msra.mxu0 0.0
        %2072 = vmatprep.subr.mxu0 0.0
        %2073 = vmatpush2.xpose.msra.mxu0 0.0
        %2074 = vmatprep.subr.mxu0 0.0
        %2075 = vmatpush2.xpose.msra.mxu0 0.0
        %2076 = vmatprep.subr.mxu0 0.0
        %2077 = vmatpush2.xpose.msra.mxu0 0.0
        %2078 = vmatprep.subr.mxu0 0.0
        %2079 = vmatpush2.xpose.msra.mxu0 0.0
        %2080 = vmatprep.subr.mxu0 0.0
        %2081 = vmatpush2.xpose.msra.mxu0 0.0
        %2082 = vmatprep.subr.mxu0 0.0
        %2083 = vmatpush2.xpose.msra.mxu0 0.0
        %2084 = vmatprep.subr.mxu0 0.0
        %2085 = vmatpush2.xpose.msra.mxu0 0.0
        %2086 = vmatprep.subr.mxu0 0.0
        %2087 = vmatpush2.xpose.msra.mxu0 0.0
        %2088 = vmatprep.subr.mxu0 0.0
        %2089 = vmatpush2.xpose.msra.mxu0 0.0
        %2090 = vmatprep.subr.mxu0 0.0
        %2091 = vmatpush2.xpose.msra.mxu0 0.0
        %2092 = vmatprep.subr.mxu0 0.0
        %2093 = vmatpush2.xpose.msra.mxu0 0.0
        %2094 = vmatprep.subr.mxu0 0.0
        %2095 = vmatpush2.xpose.msra.mxu0 0.0
        %2096 = vmatprep.subr.mxu0 0.0
        %2097 = vmatpush2.xpose.msra.mxu0 0.0
        %2098 = vmatprep.subr.mxu0 0.0
        %2099 = vmatpush2.xpose.msra.mxu0 0.0
        %2100 = vmatprep.subr.mxu0 0.0
        %2101 = vmatpush2.xpose.msra.mxu0 0.0
        %2102 = vmatprep.mubr.f32.mxu0 0.0
        %2103 = vmatmul.mubr.f32.gmra.mxu0 %v2033
        %v2104 = vpop.f32.mrf.mxu0
        %v2105 = vadd.f32 0.0, %v2104
        %v2106 = vpop.f32.mrf.mxu0
        %2107 = vdwg.mxu0
        %v2108 = vsel %vm1268, %v2029, -inf
        %2109 = vmax.xlane.f32.xlu0 %v2108
        %v2110 = vpop.xlane.xlu0 %2109
        %v2111 = vsel %vm1268, %v2105, -inf
        %2112 = vmax.xlane.f32.xlu0 %v2111
        %v2113 = vpop.xlane.xlu0 %2112
        %v2114 = vsub.f32 %v2029, %v2110
        %v2115 = vsub.f32 %v2105, %v2113
        %v2116 = vmul.f32 %v2114, 1.442695
        %v2117 = vpow.pop %v2116
        %v2118 = vmul.f32 %v2115, 1.442695
        %v2119 = vpow.pop %v2118
        %v2120 = vsel %vm1268, %v2117, 0.0
        %2121 = vadd.xlane.f32.xlu0 %v2120
        %v2122 = vpop.xlane.xlu0 %2121
        %v2123 = vsel %vm1268, %v2119, 0.0
        %2124 = vadd.xlane.f32.xlu0 %v2123
        %v2125 = vpop.xlane.xlu0 %2124
        %v2126 = vrcp.pop %v2122
        %v2127 = vmul.f32 %v2117, %v2126
        %v2128 = vrcp.pop %v2125
        %v2129 = vmul.f32 %v2119, %v2128
        %v2131 = vsel %vm1268, %v2127, 0
        %2133 = vmatprep.subr.mxu0 0.0
        %2134 = vmatpush1.msra.mxu0 0.0
        %2135 = vmatprep.subr.mxu0 0.0
        %2136 = vmatpush1.msra.mxu0 0.0
        %2137 = vmatprep.subr.mxu0 0.0
        %2138 = vmatpush1.msra.mxu0 0.0
        %2139 = vmatprep.subr.mxu0 0.0
        %2140 = vmatpush1.msra.mxu0 0.0
        %2141 = vmatprep.subr.mxu0 0.0
        %2142 = vmatpush1.msra.mxu0 0.0
        %2143 = vmatprep.subr.mxu0 0.0
        %2144 = vmatpush1.msra.mxu0 0.0
        %2145 = vmatprep.subr.mxu0 0.0
        %2146 = vmatpush1.msra.mxu0 0.0
        %2147 = vmatprep.subr.mxu0 0.0
        %2148 = vmatpush1.msra.mxu0 0.0
        %2149 = vmatprep.subr.mxu0 0.0
        %2150 = vmatpush1.msra.mxu0 0.0
        %2151 = vmatprep.subr.mxu0 0.0
        %2152 = vmatpush1.msra.mxu0 0.0
        %2153 = vmatprep.subr.mxu0 0.0
        %2154 = vmatpush1.msra.mxu0 0.0
        %2155 = vmatprep.subr.mxu0 0.0
        %2156 = vmatpush1.msra.mxu0 0.0
        %2157 = vmatprep.subr.mxu0 0.0
        %2158 = vmatpush1.msra.mxu0 0.0
        %2159 = vmatprep.subr.mxu0 0.0
        %2160 = vmatpush1.msra.mxu0 0.0
        %2161 = vmatprep.subr.mxu0 0.0
        %2162 = vmatpush1.msra.mxu0 0.0
        %2163 = vmatprep.subr.mxu0 0.0
        %2164 = vmatpush1.msra.mxu0 %v1946
        %2165 = vmatprep.subr.mxu0 0.0
        %2166 = vmatpush2.msra.mxu0 0.0
        %2167 = vmatprep.subr.mxu0 0.0
        %2168 = vmatpush2.msra.mxu0 0.0
        %2169 = vmatprep.subr.mxu0 0.0
        %2170 = vmatpush2.msra.mxu0 0.0
        %2171 = vmatprep.subr.mxu0 0.0
        %2172 = vmatpush2.msra.mxu0 0.0
        %2173 = vmatprep.subr.mxu0 0.0
        %2174 = vmatpush2.msra.mxu0 0.0
        %2175 = vmatprep.subr.mxu0 0.0
        %2176 = vmatpush2.msra.mxu0 0.0
        %2177 = vmatprep.subr.mxu0 0.0
        %2178 = vmatpush2.msra.mxu0 0.0
        %2179 = vmatprep.subr.mxu0 0.0
        %2180 = vmatpush2.msra.mxu0 0.0
        %2181 = vmatprep.subr.mxu0 0.0
        %2182 = vmatpush2.msra.mxu0 0.0
        %2183 = vmatprep.subr.mxu0 0.0
        %2184 = vmatpush2.msra.mxu0 0.0
        %2185 = vmatprep.subr.mxu0 0.0
        %2186 = vmatpush2.msra.mxu0 0.0
        %2187 = vmatprep.subr.mxu0 0.0
        %2188 = vmatpush2.msra.mxu0 0.0
        %2189 = vmatprep.subr.mxu0 0.0
        %2190 = vmatpush2.msra.mxu0 0.0
        %2191 = vmatprep.subr.mxu0 0.0
        %2192 = vmatpush2.msra.mxu0 0.0
        %2193 = vmatprep.subr.mxu0 0.0
        %2194 = vmatpush2.msra.mxu0 0.0
        %2195 = vmatprep.subr.mxu0 0.0
        %2196 = vmatpush2.msra.mxu0 0.0
        %2197 = vmatprep.mubr.f32.mxu0 0.0
        %2198 = vmatmul.mubr.f32.gmra.mxu0 %v2131
        %v2199 = vpop.f32.mrf.mxu0
        %v2200 = vadd.f32 0.0, %v2199
        %v2201 = vpop.f32.mrf.mxu0
        %2202 = vdwg.mxu0
        %v2204 = vsel %vm1268, %v2129, 0
        %2206 = vmatprep.subr.mxu0 0.0
        %2207 = vmatpush1.msra.mxu0 0.0
        %2208 = vmatprep.subr.mxu0 0.0
        %2209 = vmatpush1.msra.mxu0 0.0
        %2210 = vmatprep.subr.mxu0 0.0
        %2211 = vmatpush1.msra.mxu0 0.0
        %2212 = vmatprep.subr.mxu0 0.0
        %2213 = vmatpush1.msra.mxu0 0.0
        %2214 = vmatprep.subr.mxu0 0.0
        %2215 = vmatpush1.msra.mxu0 0.0
        %2216 = vmatprep.subr.mxu0 0.0
        %2217 = vmatpush1.msra.mxu0 0.0
        %2218 = vmatprep.subr.mxu0 0.0
        %2219 = vmatpush1.msra.mxu0 0.0
        %2220 = vmatprep.subr.mxu0 0.0
        %2221 = vmatpush1.msra.mxu0 0.0
        %2222 = vmatprep.subr.mxu0 0.0
        %2223 = vmatpush1.msra.mxu0 0.0
        %2224 = vmatprep.subr.mxu0 0.0
        %2225 = vmatpush1.msra.mxu0 0.0
        %2226 = vmatprep.subr.mxu0 0.0
        %2227 = vmatpush1.msra.mxu0 0.0
        %2228 = vmatprep.subr.mxu0 0.0
        %2229 = vmatpush1.msra.mxu0 0.0
        %2230 = vmatprep.subr.mxu0 0.0
        %2231 = vmatpush1.msra.mxu0 0.0
        %2232 = vmatprep.subr.mxu0 0.0
        %2233 = vmatpush1.msra.mxu0 0.0
        %2234 = vmatprep.subr.mxu0 0.0
        %2235 = vmatpush1.msra.mxu0 0.0
        %2236 = vmatprep.subr.mxu0 0.0
        %2237 = vmatpush1.msra.mxu0 %v1951
        %2238 = vmatprep.subr.mxu0 0.0
        %2239 = vmatpush2.msra.mxu0 0.0
        %2240 = vmatprep.subr.mxu0 0.0
        %2241 = vmatpush2.msra.mxu0 0.0
        %2242 = vmatprep.subr.mxu0 0.0
        %2243 = vmatpush2.msra.mxu0 0.0
        %2244 = vmatprep.subr.mxu0 0.0
        %2245 = vmatpush2.msra.mxu0 0.0
        %2246 = vmatprep.subr.mxu0 0.0
        %2247 = vmatpush2.msra.mxu0 0.0
        %2248 = vmatprep.subr.mxu0 0.0
        %2249 = vmatpush2.msra.mxu0 0.0
        %2250 = vmatprep.subr.mxu0 0.0
        %2251 = vmatpush2.msra.mxu0 0.0
        %2252 = vmatprep.subr.mxu0 0.0
        %2253 = vmatpush2.msra.mxu0 0.0
        %2254 = vmatprep.subr.mxu0 0.0
        %2255 = vmatpush2.msra.mxu0 0.0
        %2256 = vmatprep.subr.mxu0 0.0
        %2257 = vmatpush2.msra.mxu0 0.0
        %2258 = vmatprep.subr.mxu0 0.0
        %2259 = vmatpush2.msra.mxu0 0.0
        %2260 = vmatprep.subr.mxu0 0.0
        %2261 = vmatpush2.msra.mxu0 0.0
        %2262 = vmatprep.subr.mxu0 0.0
        %2263 = vmatpush2.msra.mxu0 0.0
        %2264 = vmatprep.subr.mxu0 0.0
        %2265 = vmatpush2.msra.mxu0 0.0
        %2266 = vmatprep.subr.mxu0 0.0
        %2267 = vmatpush2.msra.mxu0 0.0
        %2268 = vmatprep.subr.mxu0 0.0
        %2269 = vmatpush2.msra.mxu0 0.0
        %2270 = vmatprep.mubr.f32.mxu0 0.0
        %2271 = vmatmul.mubr.f32.gmra.mxu0 %v2204
        %v2272 = vpop.f32.mrf.mxu0
        %v2273 = vadd.f32 0.0, %v2272
        %v2274 = vpop.f32.mrf.mxu0
        %2275 = vdwg.mxu0
        %v2277 = vsel %vm1268, %v2200, 0
        %v2280 = vsel %vm1268, %v2273, 0
        %2282 = vmatprep.subr.mxu0 0.0
        %2283 = vmatpush1.msra.mxu0 0.0
        %2284 = vmatprep.subr.mxu0 0.0
        %2285 = vmatpush1.msra.mxu0 0.0
        %2286 = vmatprep.subr.mxu0 0.0
        %2287 = vmatpush1.msra.mxu0 0.0
        %2288 = vmatprep.subr.mxu0 0.0
        %2289 = vmatpush1.msra.mxu0 0.0
        %2290 = vmatprep.subr.mxu0 0.0
        %2291 = vmatpush1.msra.mxu0 0.0
        %2292 = vmatprep.subr.mxu0 0.0
        %2293 = vmatpush1.msra.mxu0 0.0
        %2294 = vmatprep.subr.mxu0 0.0
        %2295 = vmatpush1.msra.mxu0 0.0
        %2296 = vmatprep.subr.mxu0 0.0
        %2297 = vmatpush1.msra.mxu0 0.0
        %2298 = vmatprep.subr.mxu0 0.0
        %2299 = vmatpush1.msra.mxu0 0.0
        %2300 = vmatprep.subr.mxu0 0.0
        %2301 = vmatpush1.msra.mxu0 0.0
        %2302 = vmatprep.subr.mxu0 0.0
        %2303 = vmatpush1.msra.mxu0 0.0
        %2304 = vmatprep.subr.mxu0 0.0
        %2305 = vmatpush1.msra.mxu0 0.0
        %2306 = vmatprep.subr.mxu0 0.0
        %2307 = vmatpush1.msra.mxu0 0.0
        %2308 = vmatprep.subr.mxu0 0.0
        %2309 = vmatpush1.msra.mxu0 0.0
        %2310 = vmatprep.subr.mxu0 0.0
        %2311 = vmatpush1.msra.mxu0 0.0
        %2312 = vmatprep.subr.mxu0 0.0
        %2313 = vmatpush1.msra.mxu0 %v1002
        %2314 = vmatprep.subr.mxu0 0.0
        %2315 = vmatpush2.msra.mxu0 0.0
        %2316 = vmatprep.subr.mxu0 0.0
        %2317 = vmatpush2.msra.mxu0 0.0
        %2318 = vmatprep.subr.mxu0 0.0
        %2319 = vmatpush2.msra.mxu0 0.0
        %2320 = vmatprep.subr.mxu0 0.0
        %2321 = vmatpush2.msra.mxu0 0.0
        %2322 = vmatprep.subr.mxu0 0.0
        %2323 = vmatpush2.msra.mxu0 0.0
        %2324 = vmatprep.subr.mxu0 0.0
        %2325 = vmatpush2.msra.mxu0 0.0
        %2326 = vmatprep.subr.mxu0 0.0
        %2327 = vmatpush2.msra.mxu0 0.0
        %2328 = vmatprep.subr.mxu0 0.0
        %2329 = vmatpush2.msra.mxu0 0.0
        %2330 = vmatprep.subr.mxu0 0.0
        %2331 = vmatpush2.msra.mxu0 0.0
        %2332 = vmatprep.subr.mxu0 0.0
        %2333 = vmatpush2.msra.mxu0 0.0
        %2334 = vmatprep.subr.mxu0 0.0
        %2335 = vmatpush2.msra.mxu0 0.0
        %2336 = vmatprep.subr.mxu0 0.0
        %2337 = vmatpush2.msra.mxu0 0.0
        %2338 = vmatprep.subr.mxu0 0.0
        %2339 = vmatpush2.msra.mxu0 0.0
        %2340 = vmatprep.subr.mxu0 0.0
        %2341 = vmatpush2.msra.mxu0 0.0
        %2342 = vmatprep.subr.mxu0 0.0
        %2343 = vmatpush2.msra.mxu0 0.0
        %2344 = vmatprep.subr.mxu0 0.0
        %2345 = vmatpush2.msra.mxu0 0.0
        %2346 = vmatprep.mubr.f32.mxu0 0.0
        %2347 = vmatmul.mubr.f32.gmra.mxu0 %v2277
        %v2348 = vpop.f32.mrf.mxu0
        %v2349 = vadd.f32 0.0, %v2348
        %v2350 = vpop.f32.mrf.mxu0
        %2351 = vmatprep.mubr.f32.mxu0 0.0
        %2352 = vmatmul.mubr.f32.gmra.mxu0 %v2280
        %v2353 = vpop.f32.mrf.mxu0
        %v2354 = vadd.f32 0.0, %v2353
        %v2355 = vpop.f32.mrf.mxu0
        %2356 = vdwg.mxu0
        %v2357 = vadd.f32 %v1670, %v2349
        %v2358 = vadd.f32 %v1671, %v2354
        %2359 = vrot.lane.b32.xlu0 %v989, 112
        %v2360 = vpop.permute.xlu0 %2359
        %2361 = vrot.lane.b32.xlu0 %v990, 112
        %v2362 = vpop.permute.xlu0 %2361
        %2363 = vrot.lane.b32.xlu0 %v991, 112
        %v2364 = vpop.permute.xlu0 %2363
        %2365 = vrot.lane.b32.xlu0 %v992, 112
        %v2366 = vpop.permute.xlu0 %2365
        %2371 = vrot.lane.b32.xlu0 %v1021, 112
        %v2372 = vpop.permute.xlu0 %2371
        %2374 = vmatprep.subr.mxu0 0.0
        %2375 = vmatpush1.msra.mxu0 0.0
        %2376 = vmatprep.subr.mxu0 0.0
        %2377 = vmatpush1.msra.mxu0 0.0
        %2378 = vmatprep.subr.mxu0 0.0
        %2379 = vmatpush1.msra.mxu0 0.0
        %2380 = vmatprep.subr.mxu0 0.0
        %2381 = vmatpush1.msra.mxu0 0.0
        %2382 = vmatprep.subr.mxu0 0.0
        %2383 = vmatpush1.msra.mxu0 0.0
        %2384 = vmatprep.subr.mxu0 0.0
        %2385 = vmatpush1.msra.mxu0 0.0
        %2386 = vmatprep.subr.mxu0 0.0
        %2387 = vmatpush1.msra.mxu0 0.0
        %2388 = vmatprep.subr.mxu0 0.0
        %2389 = vmatpush1.msra.mxu0 0.0
        %2390 = vmatprep.subr.mxu0 0.0
        %2391 = vmatpush1.msra.mxu0 0.0
        %2392 = vmatprep.subr.mxu0 0.0
        %2393 = vmatpush1.msra.mxu0 0.0
        %2394 = vmatprep.subr.mxu0 0.0
        %2395 = vmatpush1.msra.mxu0 0.0
        %2396 = vmatprep.subr.mxu0 0.0
        %2397 = vmatpush1.msra.mxu0 0.0
        %2398 = vmatprep.subr.mxu0 0.0
        %2399 = vmatpush1.msra.mxu0 %v2366
        %2400 = vmatprep.subr.mxu0 0.0
        %2401 = vmatpush1.msra.mxu0 %v2364
        %2402 = vmatprep.subr.mxu0 0.0
        %2403 = vmatpush1.msra.mxu0 %v2362
        %2404 = vmatprep.subr.mxu0 0.0
        %2405 = vmatpush1.msra.mxu0 %v2360
        %2406 = vmatprep.subr.mxu0 0.0
        %2407 = vmatpush2.msra.mxu0 0.0
        %2408 = vmatprep.subr.mxu0 0.0
        %2409 = vmatpush2.msra.mxu0 0.0
        %2410 = vmatprep.subr.mxu0 0.0
        %2411 = vmatpush2.msra.mxu0 0.0
        %2412 = vmatprep.subr.mxu0 0.0
        %2413 = vmatpush2.msra.mxu0 0.0
        %2414 = vmatprep.subr.mxu0 0.0
        %2415 = vmatpush2.msra.mxu0 0.0
        %2416 = vmatprep.subr.mxu0 0.0
        %2417 = vmatpush2.msra.mxu0 0.0
        %2418 = vmatprep.subr.mxu0 0.0
        %2419 = vmatpush2.msra.mxu0 0.0
        %2420 = vmatprep.subr.mxu0 0.0
        %2421 = vmatpush2.msra.mxu0 0.0
        %2422 = vmatprep.subr.mxu0 0.0
        %2423 = vmatpush2.msra.mxu0 0.0
        %2424 = vmatprep.subr.mxu0 0.0
        %2425 = vmatpush2.msra.mxu0 0.0
        %2426 = vmatprep.subr.mxu0 0.0
        %2427 = vmatpush2.msra.mxu0 0.0
        %2428 = vmatprep.subr.mxu0 0.0
        %2429 = vmatpush2.msra.mxu0 0.0
        %2430 = vmatprep.subr.mxu0 0.0
        %2431 = vmatpush2.msra.mxu0 0.0
        %2432 = vmatprep.subr.mxu0 0.0
        %2433 = vmatpush2.msra.mxu0 0.0
        %2434 = vmatprep.subr.mxu0 0.0
        %2435 = vmatpush2.msra.mxu0 0.0
        %2436 = vmatprep.subr.mxu0 0.0
        %2437 = vmatpush2.msra.mxu0 0.0
        %2438 = vmatprep.mubr.f32.mxu0 0.0
        %2439 = vmatmul.mubr.f32.gmra.mxu0 %v1024
        %v2440 = vpop.f32.mrf.mxu0
        %v2441 = vadd.f32 %v2372, %v2440
        %v2442 = vpop.f32.mrf.mxu0
        %2443 = vmatprep.mubr.f32.mxu0 0.0
        %2444 = vmatmul.mubr.f32.gmra.mxu0 %v1027
        %v2445 = vpop.f32.mrf.mxu0
        %v2446 = vadd.f32 %v2372, %v2445
        %v2447 = vpop.f32.mrf.mxu0
        %2448 = vdwg.mxu0
        %2449 = vrot.lane.b32.xlu0 %v993, 112
        %v2450 = vpop.permute.xlu0 %2449
        %2451 = vrot.lane.b32.xlu0 %v994, 112
        %v2452 = vpop.permute.xlu0 %2451
        %2453 = vrot.lane.b32.xlu0 %v995, 112
        %v2454 = vpop.permute.xlu0 %2453
        %2455 = vrot.lane.b32.xlu0 %v996, 112
        %v2456 = vpop.permute.xlu0 %2455
        %2461 = vrot.lane.b32.xlu0 %v1108, 112
        %v2462 = vpop.permute.xlu0 %2461
        %2464 = vmatprep.subr.mxu0 0.0
        %2465 = vmatpush1.msra.mxu0 0.0
        %2466 = vmatprep.subr.mxu0 0.0
        %2467 = vmatpush1.msra.mxu0 0.0
        %2468 = vmatprep.subr.mxu0 0.0
        %2469 = vmatpush1.msra.mxu0 0.0
        %2470 = vmatprep.subr.mxu0 0.0
        %2471 = vmatpush1.msra.mxu0 0.0
        %2472 = vmatprep.subr.mxu0 0.0
        %2473 = vmatpush1.msra.mxu0 0.0
        %2474 = vmatprep.subr.mxu0 0.0
        %2475 = vmatpush1.msra.mxu0 0.0
        %2476 = vmatprep.subr.mxu0 0.0
        %2477 = vmatpush1.msra.mxu0 0.0
        %2478 = vmatprep.subr.mxu0 0.0
        %2479 = vmatpush1.msra.mxu0 0.0
        %2480 = vmatprep.subr.mxu0 0.0
        %2481 = vmatpush1.msra.mxu0 0.0
        %2482 = vmatprep.subr.mxu0 0.0
        %2483 = vmatpush1.msra.mxu0 0.0
        %2484 = vmatprep.subr.mxu0 0.0
        %2485 = vmatpush1.msra.mxu0 0.0
        %2486 = vmatprep.subr.mxu0 0.0
        %2487 = vmatpush1.msra.mxu0 0.0
        %2488 = vmatprep.subr.mxu0 0.0
        %2489 = vmatpush1.msra.mxu0 %v2456
        %2490 = vmatprep.subr.mxu0 0.0
        %2491 = vmatpush1.msra.mxu0 %v2454
        %2492 = vmatprep.subr.mxu0 0.0
        %2493 = vmatpush1.msra.mxu0 %v2452
        %2494 = vmatprep.subr.mxu0 0.0
        %2495 = vmatpush1.msra.mxu0 %v2450
        %2496 = vmatprep.subr.mxu0 0.0
        %2497 = vmatpush2.msra.mxu0 0.0
        %2498 = vmatprep.subr.mxu0 0.0
        %2499 = vmatpush2.msra.mxu0 0.0
        %2500 = vmatprep.subr.mxu0 0.0
        %2501 = vmatpush2.msra.mxu0 0.0
        %2502 = vmatprep.subr.mxu0 0.0
        %2503 = vmatpush2.msra.mxu0 0.0
        %2504 = vmatprep.subr.mxu0 0.0
        %2505 = vmatpush2.msra.mxu0 0.0
        %2506 = vmatprep.subr.mxu0 0.0
        %2507 = vmatpush2.msra.mxu0 0.0
        %2508 = vmatprep.subr.mxu0 0.0
        %2509 = vmatpush2.msra.mxu0 0.0
        %2510 = vmatprep.subr.mxu0 0.0
        %2511 = vmatpush2.msra.mxu0 0.0
        %2512 = vmatprep.subr.mxu0 0.0
        %2513 = vmatpush2.msra.mxu0 0.0
        %2514 = vmatprep.subr.mxu0 0.0
        %2515 = vmatpush2.msra.mxu0 0.0
        %2516 = vmatprep.subr.mxu0 0.0
        %2517 = vmatpush2.msra.mxu0 0.0
        %2518 = vmatprep.subr.mxu0 0.0
        %2519 = vmatpush2.msra.mxu0 0.0
        %2520 = vmatprep.subr.mxu0 0.0
        %2521 = vmatpush2.msra.mxu0 0.0
        %2522 = vmatprep.subr.mxu0 0.0
        %2523 = vmatpush2.msra.mxu0 0.0
        %2524 = vmatprep.subr.mxu0 0.0
        %2525 = vmatpush2.msra.mxu0 0.0
        %2526 = vmatprep.subr.mxu0 0.0
        %2527 = vmatpush2.msra.mxu0 0.0
        %2528 = vmatprep.mubr.f32.mxu0 0.0
        %2529 = vmatmul.mubr.f32.gmra.mxu0 %v1024
        %v2530 = vpop.f32.mrf.mxu0
        %v2531 = vadd.f32 %v2462, %v2530
        %v2532 = vpop.f32.mrf.mxu0
        %2533 = vmatprep.mubr.f32.mxu0 0.0
        %2534 = vmatmul.mubr.f32.gmra.mxu0 %v1027
        %v2535 = vpop.f32.mrf.mxu0
        %v2536 = vadd.f32 %v2462, %v2535
        %v2537 = vpop.f32.mrf.mxu0
        %2538 = vdwg.mxu0
        %2539 = vrot.lane.b32.xlu0 %v997, 112
        %v2540 = vpop.permute.xlu0 %2539
        %2541 = vrot.lane.b32.xlu0 %v998, 112
        %v2542 = vpop.permute.xlu0 %2541
        %2543 = vrot.lane.b32.xlu0 %v999, 112
        %v2544 = vpop.permute.xlu0 %2543
        %2545 = vrot.lane.b32.xlu0 %v1000, 112
        %v2546 = vpop.permute.xlu0 %2545
        %2551 = vrot.lane.b32.xlu0 %v1189, 112
        %v2552 = vpop.permute.xlu0 %2551
        %2554 = vmatprep.subr.mxu0 0.0
        %2555 = vmatpush1.msra.mxu0 0.0
        %2556 = vmatprep.subr.mxu0 0.0
        %2557 = vmatpush1.msra.mxu0 0.0
        %2558 = vmatprep.subr.mxu0 0.0
        %2559 = vmatpush1.msra.mxu0 0.0
        %2560 = vmatprep.subr.mxu0 0.0
        %2561 = vmatpush1.msra.mxu0 0.0
        %2562 = vmatprep.subr.mxu0 0.0
        %2563 = vmatpush1.msra.mxu0 0.0
        %2564 = vmatprep.subr.mxu0 0.0
        %2565 = vmatpush1.msra.mxu0 0.0
        %2566 = vmatprep.subr.mxu0 0.0
        %2567 = vmatpush1.msra.mxu0 0.0
        %2568 = vmatprep.subr.mxu0 0.0
        %2569 = vmatpush1.msra.mxu0 0.0
        %2570 = vmatprep.subr.mxu0 0.0
        %2571 = vmatpush1.msra.mxu0 0.0
        %2572 = vmatprep.subr.mxu0 0.0
        %2573 = vmatpush1.msra.mxu0 0.0
        %2574 = vmatprep.subr.mxu0 0.0
        %2575 = vmatpush1.msra.mxu0 0.0
        %2576 = vmatprep.subr.mxu0 0.0
        %2577 = vmatpush1.msra.mxu0 0.0
        %2578 = vmatprep.subr.mxu0 0.0
        %2579 = vmatpush1.msra.mxu0 %v2546
        %2580 = vmatprep.subr.mxu0 0.0
        %2581 = vmatpush1.msra.mxu0 %v2544
        %2582 = vmatprep.subr.mxu0 0.0
        %2583 = vmatpush1.msra.mxu0 %v2542
        %2584 = vmatprep.subr.mxu0 0.0
        %2585 = vmatpush1.msra.mxu0 %v2540
        %2586 = vmatprep.subr.mxu0 0.0
        %2587 = vmatpush2.msra.mxu0 0.0
        %2588 = vmatprep.subr.mxu0 0.0
        %2589 = vmatpush2.msra.mxu0 0.0
        %2590 = vmatprep.subr.mxu0 0.0
        %2591 = vmatpush2.msra.mxu0 0.0
        %2592 = vmatprep.subr.mxu0 0.0
        %2593 = vmatpush2.msra.mxu0 0.0
        %2594 = vmatprep.subr.mxu0 0.0
        %2595 = vmatpush2.msra.mxu0 0.0
        %2596 = vmatprep.subr.mxu0 0.0
        %2597 = vmatpush2.msra.mxu0 0.0
        %2598 = vmatprep.subr.mxu0 0.0
        %2599 = vmatpush2.msra.mxu0 0.0
        %2600 = vmatprep.subr.mxu0 0.0
        %2601 = vmatpush2.msra.mxu0 0.0
        %2602 = vmatprep.subr.mxu0 0.0
        %2603 = vmatpush2.msra.mxu0 0.0
        %2604 = vmatprep.subr.mxu0 0.0
        %2605 = vmatpush2.msra.mxu0 0.0
        %2606 = vmatprep.subr.mxu0 0.0
        %2607 = vmatpush2.msra.mxu0 0.0
        %2608 = vmatprep.subr.mxu0 0.0
        %2609 = vmatpush2.msra.mxu0 0.0
        %2610 = vmatprep.subr.mxu0 0.0
        %2611 = vmatpush2.msra.mxu0 0.0
        %2612 = vmatprep.subr.mxu0 0.0
        %2613 = vmatpush2.msra.mxu0 0.0
        %2614 = vmatprep.subr.mxu0 0.0
        %2615 = vmatpush2.msra.mxu0 0.0
        %2616 = vmatprep.subr.mxu0 0.0
        %2617 = vmatpush2.msra.mxu0 0.0
        %2618 = vmatprep.mubr.f32.mxu0 0.0
        %2619 = vmatmul.mubr.f32.gmra.mxu0 %v1024
        %v2620 = vpop.f32.mrf.mxu0
        %v2621 = vadd.f32 %v2552, %v2620
        %v2622 = vpop.f32.mrf.mxu0
        %2623 = vmatprep.mubr.f32.mxu0 0.0
        %2624 = vmatmul.mubr.f32.gmra.mxu0 %v1027
        %v2625 = vpop.f32.mrf.mxu0
        %v2626 = vadd.f32 %v2552, %v2625
        %v2627 = vpop.f32.mrf.mxu0
        %2628 = vdwg.mxu0
        %v2629 = vmul.f32 %v2441, 0.35355338
        %v2630 = vmul.f32 %v2446, 0.35355338
        %v2632 = vsel %vm1268, %v2629, 0
        %v2635 = vsel %vm1268, %v2531, 0
        %2637 = vmatprep.subr.mxu0 0.0
        %2638 = vmatpush1.xpose.msra.mxu0 0.0
        %2639 = vmatprep.subr.mxu0 0.0
        %2640 = vmatpush1.xpose.msra.mxu0 0.0
        %2641 = vmatprep.subr.mxu0 0.0
        %2642 = vmatpush1.xpose.msra.mxu0 0.0
        %2643 = vmatprep.subr.mxu0 0.0
        %2644 = vmatpush1.xpose.msra.mxu0 0.0
        %2645 = vmatprep.subr.mxu0 0.0
        %2646 = vmatpush1.xpose.msra.mxu0 0.0
        %2647 = vmatprep.subr.mxu0 0.0
        %2648 = vmatpush1.xpose.msra.mxu0 0.0
        %2649 = vmatprep.subr.mxu0 0.0
        %2650 = vmatpush1.xpose.msra.mxu0 0.0
        %2651 = vmatprep.subr.mxu0 0.0
        %2652 = vmatpush1.xpose.msra.mxu0 0.0
        %2653 = vmatprep.subr.mxu0 0.0
        %2654 = vmatpush1.xpose.msra.mxu0 0.0
        %2655 = vmatprep.subr.mxu0 0.0
        %2656 = vmatpush1.xpose.msra.mxu0 0.0
        %2657 = vmatprep.subr.mxu0 0.0
        %2658 = vmatpush1.xpose.msra.mxu0 0.0
        %2659 = vmatprep.subr.mxu0 0.0
        %2660 = vmatpush1.xpose.msra.mxu0 0.0
        %2661 = vmatprep.subr.mxu0 0.0
        %2662 = vmatpush1.xpose.msra.mxu0 0.0
        %2663 = vmatprep.subr.mxu0 0.0
        %2664 = vmatpush1.xpose.msra.mxu0 0.0
        %2665 = vmatprep.subr.mxu0 0.0
        %2666 = vmatpush1.xpose.msra.mxu0 0.0
        %2667 = vmatprep.subr.mxu0 0.0
        %2668 = vmatpush1.xpose.msra.mxu0 %v2635
        %2669 = vmatprep.subr.mxu0 0.0
        %2670 = vmatpush2.xpose.msra.mxu0 0.0
        %2671 = vmatprep.subr.mxu0 0.0
        %2672 = vmatpush2.xpose.msra.mxu0 0.0
        %2673 = vmatprep.subr.mxu0 0.0
        %2674 = vmatpush2.xpose.msra.mxu0 0.0
        %2675 = vmatprep.subr.mxu0 0.0
        %2676 = vmatpush2.xpose.msra.mxu0 0.0
        %2677 = vmatprep.subr.mxu0 0.0
        %2678 = vmatpush2.xpose.msra.mxu0 0.0
        %2679 = vmatprep.subr.mxu0 0.0
        %2680 = vmatpush2.xpose.msra.mxu0 0.0
        %2681 = vmatprep.subr.mxu0 0.0
        %2682 = vmatpush2.xpose.msra.mxu0 0.0
        %2683 = vmatprep.subr.mxu0 0.0
        %2684 = vmatpush2.xpose.msra.mxu0 0.0
        %2685 = vmatprep.subr.mxu0 0.0
        %2686 = vmatpush2.xpose.msra.mxu0 0.0
        %2687 = vmatprep.subr.mxu0 0.0
        %2688 = vmatpush2.xpose.msra.mxu0 0.0
        %2689 = vmatprep.subr.mxu0 0.0
        %2690 = vmatpush2.xpose.msra.mxu0 0.0
        %2691 = vmatprep.subr.mxu0 0.0
        %2692 = vmatpush2.xpose.msra.mxu0 0.0
        %2693 = vmatprep.subr.mxu0 0.0
        %2694 = vmatpush2.xpose.msra.mxu0 0.0
        %2695 = vmatprep.subr.mxu0 0.0
        %2696 = vmatpush2.xpose.msra.mxu0 0.0
        %2697 = vmatprep.subr.mxu0 0.0
        %2698 = vmatpush2.xpose.msra.mxu0 0.0
        %2699 = vmatprep.subr.mxu0 0.0
        %2700 = vmatpush2.xpose.msra.mxu0 0.0
        %2701 = vmatprep.mubr.f32.mxu0 0.0
        %2702 = vmatmul.mubr.f32.gmra.mxu0 %v2632
        %v2703 = vpop.f32.mrf.mxu0
        %v2704 = vadd.f32 0.0, %v2703
        %v2705 = vpop.f32.mrf.mxu0
        %2706 = vdwg.mxu0
        %v2708 = vsel %vm1268, %v2630, 0
        %v2711 = vsel %vm1268, %v2536, 0
        %2713 = vmatprep.subr.mxu0 0.0
        %2714 = vmatpush1.xpose.msra.mxu0 0.0
        %2715 = vmatprep.subr.mxu0 0.0
        %2716 = vmatpush1.xpose.msra.mxu0 0.0
        %2717 = vmatprep.subr.mxu0 0.0
        %2718 = vmatpush1.xpose.msra.mxu0 0.0
        %2719 = vmatprep.subr.mxu0 0.0
        %2720 = vmatpush1.xpose.msra.mxu0 0.0
        %2721 = vmatprep.subr.mxu0 0.0
        %2722 = vmatpush1.xpose.msra.mxu0 0.0
        %2723 = vmatprep.subr.mxu0 0.0
        %2724 = vmatpush1.xpose.msra.mxu0 0.0
        %2725 = vmatprep.subr.mxu0 0.0
        %2726 = vmatpush1.xpose.msra.mxu0 0.0
        %2727 = vmatprep.subr.mxu0 0.0
        %2728 = vmatpush1.xpose.msra.mxu0 0.0
        %2729 = vmatprep.subr.mxu0 0.0
        %2730 = vmatpush1.xpose.msra.mxu0 0.0
        %2731 = vmatprep.subr.mxu0 0.0
        %2732 = vmatpush1.xpose.msra.mxu0 0.0
        %2733 = vmatprep.subr.mxu0 0.0
        %2734 = vmatpush1.xpose.msra.mxu0 0.0
        %2735 = vmatprep.subr.mxu0 0.0
        %2736 = vmatpush1.xpose.msra.mxu0 0.0
        %2737 = vmatprep.subr.mxu0 0.0
        %2738 = vmatpush1.xpose.msra.mxu0 0.0
        %2739 = vmatprep.subr.mxu0 0.0
        %2740 = vmatpush1.xpose.msra.mxu0 0.0
        %2741 = vmatprep.subr.mxu0 0.0
        %2742 = vmatpush1.xpose.msra.mxu0 0.0
        %2743 = vmatprep.subr.mxu0 0.0
        %2744 = vmatpush1.xpose.msra.mxu0 %v2711
        %2745 = vmatprep.subr.mxu0 0.0
        %2746 = vmatpush2.xpose.msra.mxu0 0.0
        %2747 = vmatprep.subr.mxu0 0.0
        %2748 = vmatpush2.xpose.msra.mxu0 0.0
        %2749 = vmatprep.subr.mxu0 0.0
        %2750 = vmatpush2.xpose.msra.mxu0 0.0
        %2751 = vmatprep.subr.mxu0 0.0
        %2752 = vmatpush2.xpose.msra.mxu0 0.0
        %2753 = vmatprep.subr.mxu0 0.0
        %2754 = vmatpush2.xpose.msra.mxu0 0.0
        %2755 = vmatprep.subr.mxu0 0.0
        %2756 = vmatpush2.xpose.msra.mxu0 0.0
        %2757 = vmatprep.subr.mxu0 0.0
        %2758 = vmatpush2.xpose.msra.mxu0 0.0
        %2759 = vmatprep.subr.mxu0 0.0
        %2760 = vmatpush2.xpose.msra.mxu0 0.0
        %2761 = vmatprep.subr.mxu0 0.0
        %2762 = vmatpush2.xpose.msra.mxu0 0.0
        %2763 = vmatprep.subr.mxu0 0.0
        %2764 = vmatpush2.xpose.msra.mxu0 0.0
        %2765 = vmatprep.subr.mxu0 0.0
        %2766 = vmatpush2.xpose.msra.mxu0 0.0
        %2767 = vmatprep.subr.mxu0 0.0
        %2768 = vmatpush2.xpose.msra.mxu0 0.0
        %2769 = vmatprep.subr.mxu0 0.0
        %2770 = vmatpush2.xpose.msra.mxu0 0.0
        %2771 = vmatprep.subr.mxu0 0.0
        %2772 = vmatpush2.xpose.msra.mxu0 0.0
        %2773 = vmatprep.subr.mxu0 0.0
        %2774 = vmatpush2.xpose.msra.mxu0 0.0
        %2775 = vmatprep.subr.mxu0 0.0
        %2776 = vmatpush2.xpose.msra.mxu0 0.0
        %2777 = vmatprep.mubr.f32.mxu0 0.0
        %2778 = vmatmul.mubr.f32.gmra.mxu0 %v2708
        %v2779 = vpop.f32.mrf.mxu0
        %v2780 = vadd.f32 0.0, %v2779
        %v2781 = vpop.f32.mrf.mxu0
        %2782 = vdwg.mxu0
        %v2783 = vsel %vm1268, %v2704, -inf
        %2784 = vmax.xlane.f32.xlu0 %v2783
        %v2785 = vpop.xlane.xlu0 %2784
        %v2786 = vsel %vm1268, %v2780, -inf
        %2787 = vmax.xlane.f32.xlu0 %v2786
        %v2788 = vpop.xlane.xlu0 %2787
        %v2789 = vsub.f32 %v2704, %v2785
        %v2790 = vsub.f32 %v2780, %v2788
        %v2791 = vmul.f32 %v2789, 1.442695
        %v2792 = vpow.pop %v2791
        %v2793 = vmul.f32 %v2790, 1.442695
        %v2794 = vpow.pop %v2793
        %v2795 = vsel %vm1268, %v2792, 0.0
        %2796 = vadd.xlane.f32.xlu0 %v2795
        %v2797 = vpop.xlane.xlu0 %2796
        %v2798 = vsel %vm1268, %v2794, 0.0
        %2799 = vadd.xlane.f32.xlu0 %v2798
        %v2800 = vpop.xlane.xlu0 %2799
        %v2801 = vrcp.pop %v2797
        %v2802 = vmul.f32 %v2792, %v2801
        %v2803 = vrcp.pop %v2800
        %v2804 = vmul.f32 %v2794, %v2803
        %v2806 = vsel %vm1268, %v2802, 0
        %2808 = vmatprep.subr.mxu0 0.0
        %2809 = vmatpush1.msra.mxu0 0.0
        %2810 = vmatprep.subr.mxu0 0.0
        %2811 = vmatpush1.msra.mxu0 0.0
        %2812 = vmatprep.subr.mxu0 0.0
        %2813 = vmatpush1.msra.mxu0 0.0
        %2814 = vmatprep.subr.mxu0 0.0
        %2815 = vmatpush1.msra.mxu0 0.0
        %2816 = vmatprep.subr.mxu0 0.0
        %2817 = vmatpush1.msra.mxu0 0.0
        %2818 = vmatprep.subr.mxu0 0.0
        %2819 = vmatpush1.msra.mxu0 0.0
        %2820 = vmatprep.subr.mxu0 0.0
        %2821 = vmatpush1.msra.mxu0 0.0
        %2822 = vmatprep.subr.mxu0 0.0
        %2823 = vmatpush1.msra.mxu0 0.0
        %2824 = vmatprep.subr.mxu0 0.0
        %2825 = vmatpush1.msra.mxu0 0.0
        %2826 = vmatprep.subr.mxu0 0.0
        %2827 = vmatpush1.msra.mxu0 0.0
        %2828 = vmatprep.subr.mxu0 0.0
        %2829 = vmatpush1.msra.mxu0 0.0
        %2830 = vmatprep.subr.mxu0 0.0
        %2831 = vmatpush1.msra.mxu0 0.0
        %2832 = vmatprep.subr.mxu0 0.0
        %2833 = vmatpush1.msra.mxu0 0.0
        %2834 = vmatprep.subr.mxu0 0.0
        %2835 = vmatpush1.msra.mxu0 0.0
        %2836 = vmatprep.subr.mxu0 0.0
        %2837 = vmatpush1.msra.mxu0 0.0
        %2838 = vmatprep.subr.mxu0 0.0
        %2839 = vmatpush1.msra.mxu0 %v2621
        %2840 = vmatprep.subr.mxu0 0.0
        %2841 = vmatpush2.msra.mxu0 0.0
        %2842 = vmatprep.subr.mxu0 0.0
        %2843 = vmatpush2.msra.mxu0 0.0
        %2844 = vmatprep.subr.mxu0 0.0
        %2845 = vmatpush2.msra.mxu0 0.0
        %2846 = vmatprep.subr.mxu0 0.0
        %2847 = vmatpush2.msra.mxu0 0.0
        %2848 = vmatprep.subr.mxu0 0.0
        %2849 = vmatpush2.msra.mxu0 0.0
        %2850 = vmatprep.subr.mxu0 0.0
        %2851 = vmatpush2.msra.mxu0 0.0
        %2852 = vmatprep.subr.mxu0 0.0
        %2853 = vmatpush2.msra.mxu0 0.0
        %2854 = vmatprep.subr.mxu0 0.0
        %2855 = vmatpush2.msra.mxu0 0.0
        %2856 = vmatprep.subr.mxu0 0.0
        %2857 = vmatpush2.msra.mxu0 0.0
        %2858 = vmatprep.subr.mxu0 0.0
        %2859 = vmatpush2.msra.mxu0 0.0
        %2860 = vmatprep.subr.mxu0 0.0
        %2861 = vmatpush2.msra.mxu0 0.0
        %2862 = vmatprep.subr.mxu0 0.0
        %2863 = vmatpush2.msra.mxu0 0.0
        %2864 = vmatprep.subr.mxu0 0.0
        %2865 = vmatpush2.msra.mxu0 0.0
        %2866 = vmatprep.subr.mxu0 0.0
        %2867 = vmatpush2.msra.mxu0 0.0
        %2868 = vmatprep.subr.mxu0 0.0
        %2869 = vmatpush2.msra.mxu0 0.0
        %2870 = vmatprep.subr.mxu0 0.0
        %2871 = vmatpush2.msra.mxu0 0.0
        %2872 = vmatprep.mubr.f32.mxu0 0.0
        %2873 = vmatmul.mubr.f32.gmra.mxu0 %v2806
        %v2874 = vpop.f32.mrf.mxu0
        %v2875 = vadd.f32 0.0, %v2874
        %v2876 = vpop.f32.mrf.mxu0
        %2877 = vdwg.mxu0
        %v2879 = vsel %vm1268, %v2804, 0
        %2881 = vmatprep.subr.mxu0 0.0
        %2882 = vmatpush1.msra.mxu0 0.0
        %2883 = vmatprep.subr.mxu0 0.0
        %2884 = vmatpush1.msra.mxu0 0.0
        %2885 = vmatprep.subr.mxu0 0.0
        %2886 = vmatpush1.msra.mxu0 0.0
        %2887 = vmatprep.subr.mxu0 0.0
        %2888 = vmatpush1.msra.mxu0 0.0
        %2889 = vmatprep.subr.mxu0 0.0
        %2890 = vmatpush1.msra.mxu0 0.0
        %2891 = vmatprep.subr.mxu0 0.0
        %2892 = vmatpush1.msra.mxu0 0.0
        %2893 = vmatprep.subr.mxu0 0.0
        %2894 = vmatpush1.msra.mxu0 0.0
        %2895 = vmatprep.subr.mxu0 0.0
        %2896 = vmatpush1.msra.mxu0 0.0
        %2897 = vmatprep.subr.mxu0 0.0
        %2898 = vmatpush1.msra.mxu0 0.0
        %2899 = vmatprep.subr.mxu0 0.0
        %2900 = vmatpush1.msra.mxu0 0.0
        %2901 = vmatprep.subr.mxu0 0.0
        %2902 = vmatpush1.msra.mxu0 0.0
        %2903 = vmatprep.subr.mxu0 0.0
        %2904 = vmatpush1.msra.mxu0 0.0
        %2905 = vmatprep.subr.mxu0 0.0
        %2906 = vmatpush1.msra.mxu0 0.0
        %2907 = vmatprep.subr.mxu0 0.0
        %2908 = vmatpush1.msra.mxu0 0.0
        %2909 = vmatprep.subr.mxu0 0.0
        %2910 = vmatpush1.msra.mxu0 0.0
        %2911 = vmatprep.subr.mxu0 0.0
        %2912 = vmatpush1.msra.mxu0 %v2626
        %2913 = vmatprep.subr.mxu0 0.0
        %2914 = vmatpush2.msra.mxu0 0.0
        %2915 = vmatprep.subr.mxu0 0.0
        %2916 = vmatpush2.msra.mxu0 0.0
        %2917 = vmatprep.subr.mxu0 0.0
        %2918 = vmatpush2.msra.mxu0 0.0
        %2919 = vmatprep.subr.mxu0 0.0
        %2920 = vmatpush2.msra.mxu0 0.0
        %2921 = vmatprep.subr.mxu0 0.0
        %2922 = vmatpush2.msra.mxu0 0.0
        %2923 = vmatprep.subr.mxu0 0.0
        %2924 = vmatpush2.msra.mxu0 0.0
        %2925 = vmatprep.subr.mxu0 0.0
        %2926 = vmatpush2.msra.mxu0 0.0
        %2927 = vmatprep.subr.mxu0 0.0
        %2928 = vmatpush2.msra.mxu0 0.0
        %2929 = vmatprep.subr.mxu0 0.0
        %2930 = vmatpush2.msra.mxu0 0.0
        %2931 = vmatprep.subr.mxu0 0.0
        %2932 = vmatpush2.msra.mxu0 0.0
        %2933 = vmatprep.subr.mxu0 0.0
        %2934 = vmatpush2.msra.mxu0 0.0
        %2935 = vmatprep.subr.mxu0 0.0
        %2936 = vmatpush2.msra.mxu0 0.0
        %2937 = vmatprep.subr.mxu0 0.0
        %2938 = vmatpush2.msra.mxu0 0.0
        %2939 = vmatprep.subr.mxu0 0.0
        %2940 = vmatpush2.msra.mxu0 0.0
        %2941 = vmatprep.subr.mxu0 0.0
        %2942 = vmatpush2.msra.mxu0 0.0
        %2943 = vmatprep.subr.mxu0 0.0
        %2944 = vmatpush2.msra.mxu0 0.0
        %2945 = vmatprep.mubr.f32.mxu0 0.0
        %2946 = vmatmul.mubr.f32.gmra.mxu0 %v2879
        %v2947 = vpop.f32.mrf.mxu0
        %v2948 = vadd.f32 0.0, %v2947
        %v2949 = vpop.f32.mrf.mxu0
        %2950 = vdwg.mxu0
        %v2952 = vsel %vm1268, %v2875, 0
        %v2955 = vsel %vm1268, %v2948, 0
        %2957 = vmatprep.subr.mxu0 0.0
        %2958 = vmatpush1.msra.mxu0 0.0
        %2959 = vmatprep.subr.mxu0 0.0
        %2960 = vmatpush1.msra.mxu0 0.0
        %2961 = vmatprep.subr.mxu0 0.0
        %2962 = vmatpush1.msra.mxu0 0.0
        %2963 = vmatprep.subr.mxu0 0.0
        %2964 = vmatpush1.msra.mxu0 0.0
        %2965 = vmatprep.subr.mxu0 0.0
        %2966 = vmatpush1.msra.mxu0 0.0
        %2967 = vmatprep.subr.mxu0 0.0
        %2968 = vmatpush1.msra.mxu0 0.0
        %2969 = vmatprep.subr.mxu0 0.0
        %2970 = vmatpush1.msra.mxu0 0.0
        %2971 = vmatprep.subr.mxu0 0.0
        %2972 = vmatpush1.msra.mxu0 0.0
        %2973 = vmatprep.subr.mxu0 0.0
        %2974 = vmatpush1.msra.mxu0 0.0
        %2975 = vmatprep.subr.mxu0 0.0
        %2976 = vmatpush1.msra.mxu0 0.0
        %2977 = vmatprep.subr.mxu0 0.0
        %2978 = vmatpush1.msra.mxu0 0.0
        %2979 = vmatprep.subr.mxu0 0.0
        %2980 = vmatpush1.msra.mxu0 0.0
        %2981 = vmatprep.subr.mxu0 0.0
        %2982 = vmatpush1.msra.mxu0 0.0
        %2983 = vmatprep.subr.mxu0 0.0
        %2984 = vmatpush1.msra.mxu0 0.0
        %2985 = vmatprep.subr.mxu0 0.0
        %2986 = vmatpush1.msra.mxu0 0.0
        %2987 = vmatprep.subr.mxu0 0.0
        %2988 = vmatpush1.msra.mxu0 %v1003
        %2989 = vmatprep.subr.mxu0 0.0
        %2990 = vmatpush2.msra.mxu0 0.0
        %2991 = vmatprep.subr.mxu0 0.0
        %2992 = vmatpush2.msra.mxu0 0.0
        %2993 = vmatprep.subr.mxu0 0.0
        %2994 = vmatpush2.msra.mxu0 0.0
        %2995 = vmatprep.subr.mxu0 0.0
        %2996 = vmatpush2.msra.mxu0 0.0
        %2997 = vmatprep.subr.mxu0 0.0
        %2998 = vmatpush2.msra.mxu0 0.0
        %2999 = vmatprep.subr.mxu0 0.0
        %3000 = vmatpush2.msra.mxu0 0.0
        %3001 = vmatprep.subr.mxu0 0.0
        %3002 = vmatpush2.msra.mxu0 0.0
        %3003 = vmatprep.subr.mxu0 0.0
        %3004 = vmatpush2.msra.mxu0 0.0
        %3005 = vmatprep.subr.mxu0 0.0
        %3006 = vmatpush2.msra.mxu0 0.0
        %3007 = vmatprep.subr.mxu0 0.0
        %3008 = vmatpush2.msra.mxu0 0.0
        %3009 = vmatprep.subr.mxu0 0.0
        %3010 = vmatpush2.msra.mxu0 0.0
        %3011 = vmatprep.subr.mxu0 0.0
        %3012 = vmatpush2.msra.mxu0 0.0
        %3013 = vmatprep.subr.mxu0 0.0
        %3014 = vmatpush2.msra.mxu0 0.0
        %3015 = vmatprep.subr.mxu0 0.0
        %3016 = vmatpush2.msra.mxu0 0.0
        %3017 = vmatprep.subr.mxu0 0.0
        %3018 = vmatpush2.msra.mxu0 0.0
        %3019 = vmatprep.subr.mxu0 0.0
        %3020 = vmatpush2.msra.mxu0 0.0
        %3021 = vmatprep.mubr.f32.mxu0 0.0
        %3022 = vmatmul.mubr.f32.gmra.mxu0 %v2952
        %v3023 = vpop.f32.mrf.mxu0
        %v3024 = vadd.f32 0.0, %v3023
        %v3025 = vpop.f32.mrf.mxu0
        %3026 = vmatprep.mubr.f32.mxu0 0.0
        %3027 = vmatmul.mubr.f32.gmra.mxu0 %v2955
        %v3028 = vpop.f32.mrf.mxu0
        %v3029 = vadd.f32 0.0, %v3028
        %v3030 = vpop.f32.mrf.mxu0
        %3031 = vdwg.mxu0
        %v3032 = vadd.f32 %v2357, %v3024
        %v3033 = vadd.f32 %v2358, %v3029
        %3034 = vrot.lane.b32.xlu0 %v989, 104
        %v3035 = vpop.permute.xlu0 %3034
        %3036 = vrot.lane.b32.xlu0 %v990, 104
        %v3037 = vpop.permute.xlu0 %3036
        %3038 = vrot.lane.b32.xlu0 %v991, 104
        %v3039 = vpop.permute.xlu0 %3038
        %3040 = vrot.lane.b32.xlu0 %v992, 104
        %v3041 = vpop.permute.xlu0 %3040
        %3046 = vrot.lane.b32.xlu0 %v1021, 104
        %v3047 = vpop.permute.xlu0 %3046
        %3049 = vmatprep.subr.mxu0 0.0
        %3050 = vmatpush1.msra.mxu0 0.0
        %3051 = vmatprep.subr.mxu0 0.0
        %3052 = vmatpush1.msra.mxu0 0.0
        %3053 = vmatprep.subr.mxu0 0.0
        %3054 = vmatpush1.msra.mxu0 0.0
        %3055 = vmatprep.subr.mxu0 0.0
        %3056 = vmatpush1.msra.mxu0 0.0
        %3057 = vmatprep.subr.mxu0 0.0
        %3058 = vmatpush1.msra.mxu0 0.0
        %3059 = vmatprep.subr.mxu0 0.0
        %3060 = vmatpush1.msra.mxu0 0.0
        %3061 = vmatprep.subr.mxu0 0.0
        %3062 = vmatpush1.msra.mxu0 0.0
        %3063 = vmatprep.subr.mxu0 0.0
        %3064 = vmatpush1.msra.mxu0 0.0
        %3065 = vmatprep.subr.mxu0 0.0
        %3066 = vmatpush1.msra.mxu0 0.0
        %3067 = vmatprep.subr.mxu0 0.0
        %3068 = vmatpush1.msra.mxu0 0.0
        %3069 = vmatprep.subr.mxu0 0.0
        %3070 = vmatpush1.msra.mxu0 0.0
        %3071 = vmatprep.subr.mxu0 0.0
        %3072 = vmatpush1.msra.mxu0 0.0
        %3073 = vmatprep.subr.mxu0 0.0
        %3074 = vmatpush1.msra.mxu0 %v3041
        %3075 = vmatprep.subr.mxu0 0.0
        %3076 = vmatpush1.msra.mxu0 %v3039
        %3077 = vmatprep.subr.mxu0 0.0
        %3078 = vmatpush1.msra.mxu0 %v3037
        %3079 = vmatprep.subr.mxu0 0.0
        %3080 = vmatpush1.msra.mxu0 %v3035
        %3081 = vmatprep.subr.mxu0 0.0
        %3082 = vmatpush2.msra.mxu0 0.0
        %3083 = vmatprep.subr.mxu0 0.0
        %3084 = vmatpush2.msra.mxu0 0.0
        %3085 = vmatprep.subr.mxu0 0.0
        %3086 = vmatpush2.msra.mxu0 0.0
        %3087 = vmatprep.subr.mxu0 0.0
        %3088 = vmatpush2.msra.mxu0 0.0
        %3089 = vmatprep.subr.mxu0 0.0
        %3090 = vmatpush2.msra.mxu0 0.0
        %3091 = vmatprep.subr.mxu0 0.0
        %3092 = vmatpush2.msra.mxu0 0.0
        %3093 = vmatprep.subr.mxu0 0.0
        %3094 = vmatpush2.msra.mxu0 0.0
        %3095 = vmatprep.subr.mxu0 0.0
        %3096 = vmatpush2.msra.mxu0 0.0
        %3097 = vmatprep.subr.mxu0 0.0
        %3098 = vmatpush2.msra.mxu0 0.0
        %3099 = vmatprep.subr.mxu0 0.0
        %3100 = vmatpush2.msra.mxu0 0.0
        %3101 = vmatprep.subr.mxu0 0.0
        %3102 = vmatpush2.msra.mxu0 0.0
        %3103 = vmatprep.subr.mxu0 0.0
        %3104 = vmatpush2.msra.mxu0 0.0
        %3105 = vmatprep.subr.mxu0 0.0
        %3106 = vmatpush2.msra.mxu0 0.0
        %3107 = vmatprep.subr.mxu0 0.0
        %3108 = vmatpush2.msra.mxu0 0.0
        %3109 = vmatprep.subr.mxu0 0.0
        %3110 = vmatpush2.msra.mxu0 0.0
        %3111 = vmatprep.subr.mxu0 0.0
        %3112 = vmatpush2.msra.mxu0 0.0
        %3113 = vmatprep.mubr.f32.mxu0 0.0
        %3114 = vmatmul.mubr.f32.gmra.mxu0 %v1024
        %v3115 = vpop.f32.mrf.mxu0
        %v3116 = vadd.f32 %v3047, %v3115
        %v3117 = vpop.f32.mrf.mxu0
        %3118 = vmatprep.mubr.f32.mxu0 0.0
        %3119 = vmatmul.mubr.f32.gmra.mxu0 %v1027
        %v3120 = vpop.f32.mrf.mxu0
        %v3121 = vadd.f32 %v3047, %v3120
        %v3122 = vpop.f32.mrf.mxu0
        %3123 = vdwg.mxu0
        %3124 = vrot.lane.b32.xlu0 %v993, 104
        %v3125 = vpop.permute.xlu0 %3124
        %3126 = vrot.lane.b32.xlu0 %v994, 104
        %v3127 = vpop.permute.xlu0 %3126
        %3128 = vrot.lane.b32.xlu0 %v995, 104
        %v3129 = vpop.permute.xlu0 %3128
        %3130 = vrot.lane.b32.xlu0 %v996, 104
        %v3131 = vpop.permute.xlu0 %3130
        %3136 = vrot.lane.b32.xlu0 %v1108, 104
        %v3137 = vpop.permute.xlu0 %3136
        %3139 = vmatprep.subr.mxu0 0.0
        %3140 = vmatpush1.msra.mxu0 0.0
        %3141 = vmatprep.subr.mxu0 0.0
        %3142 = vmatpush1.msra.mxu0 0.0
        %3143 = vmatprep.subr.mxu0 0.0
        %3144 = vmatpush1.msra.mxu0 0.0
        %3145 = vmatprep.subr.mxu0 0.0
        %3146 = vmatpush1.msra.mxu0 0.0
        %3147 = vmatprep.subr.mxu0 0.0
        %3148 = vmatpush1.msra.mxu0 0.0
        %3149 = vmatprep.subr.mxu0 0.0
        %3150 = vmatpush1.msra.mxu0 0.0
        %3151 = vmatprep.subr.mxu0 0.0
        %3152 = vmatpush1.msra.mxu0 0.0
        %3153 = vmatprep.subr.mxu0 0.0
        %3154 = vmatpush1.msra.mxu0 0.0
        %3155 = vmatprep.subr.mxu0 0.0
        %3156 = vmatpush1.msra.mxu0 0.0
        %3157 = vmatprep.subr.mxu0 0.0
        %3158 = vmatpush1.msra.mxu0 0.0
        %3159 = vmatprep.subr.mxu0 0.0
        %3160 = vmatpush1.msra.mxu0 0.0
        %3161 = vmatprep.subr.mxu0 0.0
        %3162 = vmatpush1.msra.mxu0 0.0
        %3163 = vmatprep.subr.mxu0 0.0
        %3164 = vmatpush1.msra.mxu0 %v3131
        %3165 = vmatprep.subr.mxu0 0.0
        %3166 = vmatpush1.msra.mxu0 %v3129
        %3167 = vmatprep.subr.mxu0 0.0
        %3168 = vmatpush1.msra.mxu0 %v3127
        %3169 = vmatprep.subr.mxu0 0.0
        %3170 = vmatpush1.msra.mxu0 %v3125
        %3171 = vmatprep.subr.mxu0 0.0
        %3172 = vmatpush2.msra.mxu0 0.0
        %3173 = vmatprep.subr.mxu0 0.0
        %3174 = vmatpush2.msra.mxu0 0.0
        %3175 = vmatprep.subr.mxu0 0.0
        %3176 = vmatpush2.msra.mxu0 0.0
        %3177 = vmatprep.subr.mxu0 0.0
        %3178 = vmatpush2.msra.mxu0 0.0
        %3179 = vmatprep.subr.mxu0 0.0
        %3180 = vmatpush2.msra.mxu0 0.0
        %3181 = vmatprep.subr.mxu0 0.0
        %3182 = vmatpush2.msra.mxu0 0.0
        %3183 = vmatprep.subr.mxu0 0.0
        %3184 = vmatpush2.msra.mxu0 0.0
        %3185 = vmatprep.subr.mxu0 0.0
        %3186 = vmatpush2.msra.mxu0 0.0
        %3187 = vmatprep.subr.mxu0 0.0
        %3188 = vmatpush2.msra.mxu0 0.0
        %3189 = vmatprep.subr.mxu0 0.0
        %3190 = vmatpush2.msra.mxu0 0.0
        %3191 = vmatprep.subr.mxu0 0.0
        %3192 = vmatpush2.msra.mxu0 0.0
        %3193 = vmatprep.subr.mxu0 0.0
        %3194 = vmatpush2.msra.mxu0 0.0
        %3195 = vmatprep.subr.mxu0 0.0
        %3196 = vmatpush2.msra.mxu0 0.0
        %3197 = vmatprep.subr.mxu0 0.0
        %3198 = vmatpush2.msra.mxu0 0.0
        %3199 = vmatprep.subr.mxu0 0.0
        %3200 = vmatpush2.msra.mxu0 0.0
        %3201 = vmatprep.subr.mxu0 0.0
        %3202 = vmatpush2.msra.mxu0 0.0
        %3203 = vmatprep.mubr.f32.mxu0 0.0
        %3204 = vmatmul.mubr.f32.gmra.mxu0 %v1024
        %v3205 = vpop.f32.mrf.mxu0
        %v3206 = vadd.f32 %v3137, %v3205
        %v3207 = vpop.f32.mrf.mxu0
        %3208 = vmatprep.mubr.f32.mxu0 0.0
        %3209 = vmatmul.mubr.f32.gmra.mxu0 %v1027
        %v3210 = vpop.f32.mrf.mxu0
        %v3211 = vadd.f32 %v3137, %v3210
        %v3212 = vpop.f32.mrf.mxu0
        %3213 = vdwg.mxu0
        %3214 = vrot.lane.b32.xlu0 %v997, 104
        %v3215 = vpop.permute.xlu0 %3214
        %3216 = vrot.lane.b32.xlu0 %v998, 104
        %v3217 = vpop.permute.xlu0 %3216
        %3218 = vrot.lane.b32.xlu0 %v999, 104
        %v3219 = vpop.permute.xlu0 %3218
        %3220 = vrot.lane.b32.xlu0 %v1000, 104
        %v3221 = vpop.permute.xlu0 %3220
        %3226 = vrot.lane.b32.xlu0 %v1189, 104
        %v3227 = vpop.permute.xlu0 %3226
        %3229 = vmatprep.subr.mxu0 0.0
        %3230 = vmatpush1.msra.mxu0 0.0
        %3231 = vmatprep.subr.mxu0 0.0
        %3232 = vmatpush1.msra.mxu0 0.0
        %3233 = vmatprep.subr.mxu0 0.0
        %3234 = vmatpush1.msra.mxu0 0.0
        %3235 = vmatprep.subr.mxu0 0.0
        %3236 = vmatpush1.msra.mxu0 0.0
        %3237 = vmatprep.subr.mxu0 0.0
        %3238 = vmatpush1.msra.mxu0 0.0
        %3239 = vmatprep.subr.mxu0 0.0
        %3240 = vmatpush1.msra.mxu0 0.0
        %3241 = vmatprep.subr.mxu0 0.0
        %3242 = vmatpush1.msra.mxu0 0.0
        %3243 = vmatprep.subr.mxu0 0.0
        %3244 = vmatpush1.msra.mxu0 0.0
        %3245 = vmatprep.subr.mxu0 0.0
        %3246 = vmatpush1.msra.mxu0 0.0
        %3247 = vmatprep.subr.mxu0 0.0
        %3248 = vmatpush1.msra.mxu0 0.0
        %3249 = vmatprep.subr.mxu0 0.0
        %3250 = vmatpush1.msra.mxu0 0.0
        %3251 = vmatprep.subr.mxu0 0.0
        %3252 = vmatpush1.msra.mxu0 0.0
        %3253 = vmatprep.subr.mxu0 0.0
        %3254 = vmatpush1.msra.mxu0 %v3221
        %3255 = vmatprep.subr.mxu0 0.0
        %3256 = vmatpush1.msra.mxu0 %v3219
        %3257 = vmatprep.subr.mxu0 0.0
        %3258 = vmatpush1.msra.mxu0 %v3217
        %3259 = vmatprep.subr.mxu0 0.0
        %3260 = vmatpush1.msra.mxu0 %v3215
        %3261 = vmatprep.subr.mxu0 0.0
        %3262 = vmatpush2.msra.mxu0 0.0
        %3263 = vmatprep.subr.mxu0 0.0
        %3264 = vmatpush2.msra.mxu0 0.0
        %3265 = vmatprep.subr.mxu0 0.0
        %3266 = vmatpush2.msra.mxu0 0.0
        %3267 = vmatprep.subr.mxu0 0.0
        %3268 = vmatpush2.msra.mxu0 0.0
        %3269 = vmatprep.subr.mxu0 0.0
        %3270 = vmatpush2.msra.mxu0 0.0
        %3271 = vmatprep.subr.mxu0 0.0
        %3272 = vmatpush2.msra.mxu0 0.0
        %3273 = vmatprep.subr.mxu0 0.0
        %3274 = vmatpush2.msra.mxu0 0.0
        %3275 = vmatprep.subr.mxu0 0.0
        %3276 = vmatpush2.msra.mxu0 0.0
        %3277 = vmatprep.subr.mxu0 0.0
        %3278 = vmatpush2.msra.mxu0 0.0
        %3279 = vmatprep.subr.mxu0 0.0
        %3280 = vmatpush2.msra.mxu0 0.0
        %3281 = vmatprep.subr.mxu0 0.0
        %3282 = vmatpush2.msra.mxu0 0.0
        %3283 = vmatprep.subr.mxu0 0.0
        %3284 = vmatpush2.msra.mxu0 0.0
        %3285 = vmatprep.subr.mxu0 0.0
        %3286 = vmatpush2.msra.mxu0 0.0
        %3287 = vmatprep.subr.mxu0 0.0
        %3288 = vmatpush2.msra.mxu0 0.0
        %3289 = vmatprep.subr.mxu0 0.0
        %3290 = vmatpush2.msra.mxu0 0.0
        %3291 = vmatprep.subr.mxu0 0.0
        %3292 = vmatpush2.msra.mxu0 0.0
        %3293 = vmatprep.mubr.f32.mxu0 0.0
        %3294 = vmatmul.mubr.f32.gmra.mxu0 %v1024
        %v3295 = vpop.f32.mrf.mxu0
        %v3296 = vadd.f32 %v3227, %v3295
        %v3297 = vpop.f32.mrf.mxu0
        %3298 = vmatprep.mubr.f32.mxu0 0.0
        %3299 = vmatmul.mubr.f32.gmra.mxu0 %v1027
        %v3300 = vpop.f32.mrf.mxu0
        %v3301 = vadd.f32 %v3227, %v3300
        %v3302 = vpop.f32.mrf.mxu0
        %3303 = vdwg.mxu0
        %v3304 = vmul.f32 %v3116, 0.35355338
        %v3305 = vmul.f32 %v3121, 0.35355338
        %v3307 = vsel %vm1268, %v3304, 0
        %v3310 = vsel %vm1268, %v3206, 0
        %3312 = vmatprep.subr.mxu0 0.0
        %3313 = vmatpush1.xpose.msra.mxu0 0.0
        %3314 = vmatprep.subr.mxu0 0.0
        %3315 = vmatpush1.xpose.msra.mxu0 0.0
        %3316 = vmatprep.subr.mxu0 0.0
        %3317 = vmatpush1.xpose.msra.mxu0 0.0
        %3318 = vmatprep.subr.mxu0 0.0
        %3319 = vmatpush1.xpose.msra.mxu0 0.0
        %3320 = vmatprep.subr.mxu0 0.0
        %3321 = vmatpush1.xpose.msra.mxu0 0.0
        %3322 = vmatprep.subr.mxu0 0.0
        %3323 = vmatpush1.xpose.msra.mxu0 0.0
        %3324 = vmatprep.subr.mxu0 0.0
        %3325 = vmatpush1.xpose.msra.mxu0 0.0
        %3326 = vmatprep.subr.mxu0 0.0
        %3327 = vmatpush1.xpose.msra.mxu0 0.0
        %3328 = vmatprep.subr.mxu0 0.0
        %3329 = vmatpush1.xpose.msra.mxu0 0.0
        %3330 = vmatprep.subr.mxu0 0.0
        %3331 = vmatpush1.xpose.msra.mxu0 0.0
        %3332 = vmatprep.subr.mxu0 0.0
        %3333 = vmatpush1.xpose.msra.mxu0 0.0
        %3334 = vmatprep.subr.mxu0 0.0
        %3335 = vmatpush1.xpose.msra.mxu0 0.0
        %3336 = vmatprep.subr.mxu0 0.0
        %3337 = vmatpush1.xpose.msra.mxu0 0.0
        %3338 = vmatprep.subr.mxu0 0.0
        %3339 = vmatpush1.xpose.msra.mxu0 0.0
        %3340 = vmatprep.subr.mxu0 0.0
        %3341 = vmatpush1.xpose.msra.mxu0 0.0
        %3342 = vmatprep.subr.mxu0 0.0
        %3343 = vmatpush1.xpose.msra.mxu0 %v3310
        %3344 = vmatprep.subr.mxu0 0.0
        %3345 = vmatpush2.xpose.msra.mxu0 0.0
        %3346 = vmatprep.subr.mxu0 0.0
        %3347 = vmatpush2.xpose.msra.mxu0 0.0
        %3348 = vmatprep.subr.mxu0 0.0
        %3349 = vmatpush2.xpose.msra.mxu0 0.0
        %3350 = vmatprep.subr.mxu0 0.0
        %3351 = vmatpush2.xpose.msra.mxu0 0.0
        %3352 = vmatprep.subr.mxu0 0.0
        %3353 = vmatpush2.xpose.msra.mxu0 0.0
        %3354 = vmatprep.subr.mxu0 0.0
        %3355 = vmatpush2.xpose.msra.mxu0 0.0
        %3356 = vmatprep.subr.mxu0 0.0
        %3357 = vmatpush2.xpose.msra.mxu0 0.0
        %3358 = vmatprep.subr.mxu0 0.0
        %3359 = vmatpush2.xpose.msra.mxu0 0.0
        %3360 = vmatprep.subr.mxu0 0.0
        %3361 = vmatpush2.xpose.msra.mxu0 0.0
        %3362 = vmatprep.subr.mxu0 0.0
        %3363 = vmatpush2.xpose.msra.mxu0 0.0
        %3364 = vmatprep.subr.mxu0 0.0
        %3365 = vmatpush2.xpose.msra.mxu0 0.0
        %3366 = vmatprep.subr.mxu0 0.0
        %3367 = vmatpush2.xpose.msra.mxu0 0.0
        %3368 = vmatprep.subr.mxu0 0.0
        %3369 = vmatpush2.xpose.msra.mxu0 0.0
        %3370 = vmatprep.subr.mxu0 0.0
        %3371 = vmatpush2.xpose.msra.mxu0 0.0
        %3372 = vmatprep.subr.mxu0 0.0
        %3373 = vmatpush2.xpose.msra.mxu0 0.0
        %3374 = vmatprep.subr.mxu0 0.0
        %3375 = vmatpush2.xpose.msra.mxu0 0.0
        %3376 = vmatprep.mubr.f32.mxu0 0.0
        %3377 = vmatmul.mubr.f32.gmra.mxu0 %v3307
        %v3378 = vpop.f32.mrf.mxu0
        %v3379 = vadd.f32 0.0, %v3378
        %v3380 = vpop.f32.mrf.mxu0
        %3381 = vdwg.mxu0
        %v3383 = vsel %vm1268, %v3305, 0
        %v3386 = vsel %vm1268, %v3211, 0
        %3388 = vmatprep.subr.mxu0 0.0
        %3389 = vmatpush1.xpose.msra.mxu0 0.0
        %3390 = vmatprep.subr.mxu0 0.0
        %3391 = vmatpush1.xpose.msra.mxu0 0.0
        %3392 = vmatprep.subr.mxu0 0.0
        %3393 = vmatpush1.xpose.msra.mxu0 0.0
        %3394 = vmatprep.subr.mxu0 0.0
        %3395 = vmatpush1.xpose.msra.mxu0 0.0
        %3396 = vmatprep.subr.mxu0 0.0
        %3397 = vmatpush1.xpose.msra.mxu0 0.0
        %3398 = vmatprep.subr.mxu0 0.0
        %3399 = vmatpush1.xpose.msra.mxu0 0.0
        %3400 = vmatprep.subr.mxu0 0.0
        %3401 = vmatpush1.xpose.msra.mxu0 0.0
        %3402 = vmatprep.subr.mxu0 0.0
        %3403 = vmatpush1.xpose.msra.mxu0 0.0
        %3404 = vmatprep.subr.mxu0 0.0
        %3405 = vmatpush1.xpose.msra.mxu0 0.0
        %3406 = vmatprep.subr.mxu0 0.0
        %3407 = vmatpush1.xpose.msra.mxu0 0.0
        %3408 = vmatprep.subr.mxu0 0.0
        %3409 = vmatpush1.xpose.msra.mxu0 0.0
        %3410 = vmatprep.subr.mxu0 0.0
        %3411 = vmatpush1.xpose.msra.mxu0 0.0
        %3412 = vmatprep.subr.mxu0 0.0
        %3413 = vmatpush1.xpose.msra.mxu0 0.0
        %3414 = vmatprep.subr.mxu0 0.0
        %3415 = vmatpush1.xpose.msra.mxu0 0.0
        %3416 = vmatprep.subr.mxu0 0.0
        %3417 = vmatpush1.xpose.msra.mxu0 0.0
        %3418 = vmatprep.subr.mxu0 0.0
        %3419 = vmatpush1.xpose.msra.mxu0 %v3386
        %3420 = vmatprep.subr.mxu0 0.0
        %3421 = vmatpush2.xpose.msra.mxu0 0.0
        %3422 = vmatprep.subr.mxu0 0.0
        %3423 = vmatpush2.xpose.msra.mxu0 0.0
        %3424 = vmatprep.subr.mxu0 0.0
        %3425 = vmatpush2.xpose.msra.mxu0 0.0
        %3426 = vmatprep.subr.mxu0 0.0
        %3427 = vmatpush2.xpose.msra.mxu0 0.0
        %3428 = vmatprep.subr.mxu0 0.0
        %3429 = vmatpush2.xpose.msra.mxu0 0.0
        %3430 = vmatprep.subr.mxu0 0.0
        %3431 = vmatpush2.xpose.msra.mxu0 0.0
        %3432 = vmatprep.subr.mxu0 0.0
        %3433 = vmatpush2.xpose.msra.mxu0 0.0
        %3434 = vmatprep.subr.mxu0 0.0
        %3435 = vmatpush2.xpose.msra.mxu0 0.0
        %3436 = vmatprep.subr.mxu0 0.0
        %3437 = vmatpush2.xpose.msra.mxu0 0.0
        %3438 = vmatprep.subr.mxu0 0.0
        %3439 = vmatpush2.xpose.msra.mxu0 0.0
        %3440 = vmatprep.subr.mxu0 0.0
        %3441 = vmatpush2.xpose.msra.mxu0 0.0
        %3442 = vmatprep.subr.mxu0 0.0
        %3443 = vmatpush2.xpose.msra.mxu0 0.0
        %3444 = vmatprep.subr.mxu0 0.0
        %3445 = vmatpush2.xpose.msra.mxu0 0.0
        %3446 = vmatprep.subr.mxu0 0.0
        %3447 = vmatpush2.xpose.msra.mxu0 0.0
        %3448 = vmatprep.subr.mxu0 0.0
        %3449 = vmatpush2.xpose.msra.mxu0 0.0
        %3450 = vmatprep.subr.mxu0 0.0
        %3451 = vmatpush2.xpose.msra.mxu0 0.0
        %3452 = vmatprep.mubr.f32.mxu0 0.0
        %3453 = vmatmul.mubr.f32.gmra.mxu0 %v3383
        %v3454 = vpop.f32.mrf.mxu0
        %v3455 = vadd.f32 0.0, %v3454
        %v3456 = vpop.f32.mrf.mxu0
        %3457 = vdwg.mxu0
        %v3458 = vsel %vm1268, %v3379, -inf
        %3459 = vmax.xlane.f32.xlu0 %v3458
        %v3460 = vpop.xlane.xlu0 %3459
        %v3461 = vsel %vm1268, %v3455, -inf
        %3462 = vmax.xlane.f32.xlu0 %v3461
        %v3463 = vpop.xlane.xlu0 %3462
        %v3464 = vsub.f32 %v3379, %v3460
        %v3465 = vsub.f32 %v3455, %v3463
        %v3466 = vmul.f32 %v3464, 1.442695
        %v3467 = vpow.pop %v3466
        %v3468 = vmul.f32 %v3465, 1.442695
        %v3469 = vpow.pop %v3468
        %v3470 = vsel %vm1268, %v3467, 0.0
        %3471 = vadd.xlane.f32.xlu0 %v3470
        %v3472 = vpop.xlane.xlu0 %3471
        %v3473 = vsel %vm1268, %v3469, 0.0
        %3474 = vadd.xlane.f32.xlu0 %v3473
        %v3475 = vpop.xlane.xlu0 %3474
        %v3476 = vrcp.pop %v3472
        %v3477 = vmul.f32 %v3467, %v3476
        %v3478 = vrcp.pop %v3475
        %v3479 = vmul.f32 %v3469, %v3478
        %v3481 = vsel %vm1268, %v3477, 0
        %3483 = vmatprep.subr.mxu0 0.0
        %3484 = vmatpush1.msra.mxu0 0.0
        %3485 = vmatprep.subr.mxu0 0.0
        %3486 = vmatpush1.msra.mxu0 0.0
        %3487 = vmatprep.subr.mxu0 0.0
        %3488 = vmatpush1.msra.mxu0 0.0
        %3489 = vmatprep.subr.mxu0 0.0
        %3490 = vmatpush1.msra.mxu0 0.0
        %3491 = vmatprep.subr.mxu0 0.0
        %3492 = vmatpush1.msra.mxu0 0.0
        %3493 = vmatprep.subr.mxu0 0.0
        %3494 = vmatpush1.msra.mxu0 0.0
        %3495 = vmatprep.subr.mxu0 0.0
        %3496 = vmatpush1.msra.mxu0 0.0
        %3497 = vmatprep.subr.mxu0 0.0
        %3498 = vmatpush1.msra.mxu0 0.0
        %3499 = vmatprep.subr.mxu0 0.0
        %3500 = vmatpush1.msra.mxu0 0.0
        %3501 = vmatprep.subr.mxu0 0.0
        %3502 = vmatpush1.msra.mxu0 0.0
        %3503 = vmatprep.subr.mxu0 0.0
        %3504 = vmatpush1.msra.mxu0 0.0
        %3505 = vmatprep.subr.mxu0 0.0
        %3506 = vmatpush1.msra.mxu0 0.0
        %3507 = vmatprep.subr.mxu0 0.0
        %3508 = vmatpush1.msra.mxu0 0.0
        %3509 = vmatprep.subr.mxu0 0.0
        %3510 = vmatpush1.msra.mxu0 0.0
        %3511 = vmatprep.subr.mxu0 0.0
        %3512 = vmatpush1.msra.mxu0 0.0
        %3513 = vmatprep.subr.mxu0 0.0
        %3514 = vmatpush1.msra.mxu0 %v3296
        %3515 = vmatprep.subr.mxu0 0.0
        %3516 = vmatpush2.msra.mxu0 0.0
        %3517 = vmatprep.subr.mxu0 0.0
        %3518 = vmatpush2.msra.mxu0 0.0
        %3519 = vmatprep.subr.mxu0 0.0
        %3520 = vmatpush2.msra.mxu0 0.0
        %3521 = vmatprep.subr.mxu0 0.0
        %3522 = vmatpush2.msra.mxu0 0.0
        %3523 = vmatprep.subr.mxu0 0.0
        %3524 = vmatpush2.msra.mxu0 0.0
        %3525 = vmatprep.subr.mxu0 0.0
        %3526 = vmatpush2.msra.mxu0 0.0
        %3527 = vmatprep.subr.mxu0 0.0
        %3528 = vmatpush2.msra.mxu0 0.0
        %3529 = vmatprep.subr.mxu0 0.0
        %3530 = vmatpush2.msra.mxu0 0.0
        %3531 = vmatprep.subr.mxu0 0.0
        %3532 = vmatpush2.msra.mxu0 0.0
        %3533 = vmatprep.subr.mxu0 0.0
        %3534 = vmatpush2.msra.mxu0 0.0
        %3535 = vmatprep.subr.mxu0 0.0
        %3536 = vmatpush2.msra.mxu0 0.0
        %3537 = vmatprep.subr.mxu0 0.0
        %3538 = vmatpush2.msra.mxu0 0.0
        %3539 = vmatprep.subr.mxu0 0.0
        %3540 = vmatpush2.msra.mxu0 0.0
        %3541 = vmatprep.subr.mxu0 0.0
        %3542 = vmatpush2.msra.mxu0 0.0
        %3543 = vmatprep.subr.mxu0 0.0
        %3544 = vmatpush2.msra.mxu0 0.0
        %3545 = vmatprep.subr.mxu0 0.0
        %3546 = vmatpush2.msra.mxu0 0.0
        %3547 = vmatprep.mubr.f32.mxu0 0.0
        %3548 = vmatmul.mubr.f32.gmra.mxu0 %v3481
        %v3549 = vpop.f32.mrf.mxu0
        %v3550 = vadd.f32 0.0, %v3549
        %v3551 = vpop.f32.mrf.mxu0
        %3552 = vdwg.mxu0
        %v3554 = vsel %vm1268, %v3479, 0
        %3556 = vmatprep.subr.mxu0 0.0
        %3557 = vmatpush1.msra.mxu0 0.0
        %3558 = vmatprep.subr.mxu0 0.0
        %3559 = vmatpush1.msra.mxu0 0.0
        %3560 = vmatprep.subr.mxu0 0.0
        %3561 = vmatpush1.msra.mxu0 0.0
        %3562 = vmatprep.subr.mxu0 0.0
        %3563 = vmatpush1.msra.mxu0 0.0
        %3564 = vmatprep.subr.mxu0 0.0
        %3565 = vmatpush1.msra.mxu0 0.0
        %3566 = vmatprep.subr.mxu0 0.0
        %3567 = vmatpush1.msra.mxu0 0.0
        %3568 = vmatprep.subr.mxu0 0.0
        %3569 = vmatpush1.msra.mxu0 0.0
        %3570 = vmatprep.subr.mxu0 0.0
        %3571 = vmatpush1.msra.mxu0 0.0
        %3572 = vmatprep.subr.mxu0 0.0
        %3573 = vmatpush1.msra.mxu0 0.0
        %3574 = vmatprep.subr.mxu0 0.0
        %3575 = vmatpush1.msra.mxu0 0.0
        %3576 = vmatprep.subr.mxu0 0.0
        %3577 = vmatpush1.msra.mxu0 0.0
        %3578 = vmatprep.subr.mxu0 0.0
        %3579 = vmatpush1.msra.mxu0 0.0
        %3580 = vmatprep.subr.mxu0 0.0
        %3581 = vmatpush1.msra.mxu0 0.0
        %3582 = vmatprep.subr.mxu0 0.0
        %3583 = vmatpush1.msra.mxu0 0.0
        %3584 = vmatprep.subr.mxu0 0.0
        %3585 = vmatpush1.msra.mxu0 0.0
        %3586 = vmatprep.subr.mxu0 0.0
        %3587 = vmatpush1.msra.mxu0 %v3301
        %3588 = vmatprep.subr.mxu0 0.0
        %3589 = vmatpush2.msra.mxu0 0.0
        %3590 = vmatprep.subr.mxu0 0.0
        %3591 = vmatpush2.msra.mxu0 0.0
        %3592 = vmatprep.subr.mxu0 0.0
        %3593 = vmatpush2.msra.mxu0 0.0
        %3594 = vmatprep.subr.mxu0 0.0
        %3595 = vmatpush2.msra.mxu0 0.0
        %3596 = vmatprep.subr.mxu0 0.0
        %3597 = vmatpush2.msra.mxu0 0.0
        %3598 = vmatprep.subr.mxu0 0.0
        %3599 = vmatpush2.msra.mxu0 0.0
        %3600 = vmatprep.subr.mxu0 0.0
        %3601 = vmatpush2.msra.mxu0 0.0
        %3602 = vmatprep.subr.mxu0 0.0
        %3603 = vmatpush2.msra.mxu0 0.0
        %3604 = vmatprep.subr.mxu0 0.0
        %3605 = vmatpush2.msra.mxu0 0.0
        %3606 = vmatprep.subr.mxu0 0.0
        %3607 = vmatpush2.msra.mxu0 0.0
        %3608 = vmatprep.subr.mxu0 0.0
        %3609 = vmatpush2.msra.mxu0 0.0
        %3610 = vmatprep.subr.mxu0 0.0
        %3611 = vmatpush2.msra.mxu0 0.0
        %3612 = vmatprep.subr.mxu0 0.0
        %3613 = vmatpush2.msra.mxu0 0.0
        %3614 = vmatprep.subr.mxu0 0.0
        %3615 = vmatpush2.msra.mxu0 0.0
        %3616 = vmatprep.subr.mxu0 0.0
        %3617 = vmatpush2.msra.mxu0 0.0
        %3618 = vmatprep.subr.mxu0 0.0
        %3619 = vmatpush2.msra.mxu0 0.0
        %3620 = vmatprep.mubr.f32.mxu0 0.0
        %3621 = vmatmul.mubr.f32.gmra.mxu0 %v3554
        %v3622 = vpop.f32.mrf.mxu0
        %v3623 = vadd.f32 0.0, %v3622
        %v3624 = vpop.f32.mrf.mxu0
        %3625 = vdwg.mxu0
        %v3627 = vsel %vm1268, %v3550, 0
        %v3630 = vsel %vm1268, %v3623, 0
        %3632 = vmatprep.subr.mxu0 0.0
        %3633 = vmatpush1.msra.mxu0 0.0
        %3634 = vmatprep.subr.mxu0 0.0
        %3635 = vmatpush1.msra.mxu0 0.0
        %3636 = vmatprep.subr.mxu0 0.0
        %3637 = vmatpush1.msra.mxu0 0.0
        %3638 = vmatprep.subr.mxu0 0.0
        %3639 = vmatpush1.msra.mxu0 0.0
        %3640 = vmatprep.subr.mxu0 0.0
        %3641 = vmatpush1.msra.mxu0 0.0
        %3642 = vmatprep.subr.mxu0 0.0
        %3643 = vmatpush1.msra.mxu0 0.0
        %3644 = vmatprep.subr.mxu0 0.0
        %3645 = vmatpush1.msra.mxu0 0.0
        %3646 = vmatprep.subr.mxu0 0.0
        %3647 = vmatpush1.msra.mxu0 0.0
        %3648 = vmatprep.subr.mxu0 0.0
        %3649 = vmatpush1.msra.mxu0 0.0
        %3650 = vmatprep.subr.mxu0 0.0
        %3651 = vmatpush1.msra.mxu0 0.0
        %3652 = vmatprep.subr.mxu0 0.0
        %3653 = vmatpush1.msra.mxu0 0.0
        %3654 = vmatprep.subr.mxu0 0.0
        %3655 = vmatpush1.msra.mxu0 0.0
        %3656 = vmatprep.subr.mxu0 0.0
        %3657 = vmatpush1.msra.mxu0 0.0
        %3658 = vmatprep.subr.mxu0 0.0
        %3659 = vmatpush1.msra.mxu0 0.0
        %3660 = vmatprep.subr.mxu0 0.0
        %3661 = vmatpush1.msra.mxu0 0.0
        %3662 = vmatprep.subr.mxu0 0.0
        %3663 = vmatpush1.msra.mxu0 %v1004
        %3664 = vmatprep.subr.mxu0 0.0
        %3665 = vmatpush2.msra.mxu0 0.0
        %3666 = vmatprep.subr.mxu0 0.0
        %3667 = vmatpush2.msra.mxu0 0.0
        %3668 = vmatprep.subr.mxu0 0.0
        %3669 = vmatpush2.msra.mxu0 0.0
        %3670 = vmatprep.subr.mxu0 0.0
        %3671 = vmatpush2.msra.mxu0 0.0
        %3672 = vmatprep.subr.mxu0 0.0
        %3673 = vmatpush2.msra.mxu0 0.0
        %3674 = vmatprep.subr.mxu0 0.0
        %3675 = vmatpush2.msra.mxu0 0.0
        %3676 = vmatprep.subr.mxu0 0.0
        %3677 = vmatpush2.msra.mxu0 0.0
        %3678 = vmatprep.subr.mxu0 0.0
        %3679 = vmatpush2.msra.mxu0 0.0
        %3680 = vmatprep.subr.mxu0 0.0
        %3681 = vmatpush2.msra.mxu0 0.0
        %3682 = vmatprep.subr.mxu0 0.0
        %3683 = vmatpush2.msra.mxu0 0.0
        %3684 = vmatprep.subr.mxu0 0.0
        %3685 = vmatpush2.msra.mxu0 0.0
        %3686 = vmatprep.subr.mxu0 0.0
        %3687 = vmatpush2.msra.mxu0 0.0
        %3688 = vmatprep.subr.mxu0 0.0
        %3689 = vmatpush2.msra.mxu0 0.0
        %3690 = vmatprep.subr.mxu0 0.0
        %3691 = vmatpush2.msra.mxu0 0.0
        %3692 = vmatprep.subr.mxu0 0.0
        %3693 = vmatpush2.msra.mxu0 0.0
        %3694 = vmatprep.subr.mxu0 0.0
        %3695 = vmatpush2.msra.mxu0 0.0
        %3696 = vmatprep.mubr.f32.mxu0 0.0
        %3697 = vmatmul.mubr.f32.gmra.mxu0 %v3627
        %v3698 = vpop.f32.mrf.mxu0
        %v3699 = vadd.f32 0.0, %v3698
        %v3700 = vpop.f32.mrf.mxu0
        %3701 = vmatprep.mubr.f32.mxu0 0.0
        %3702 = vmatmul.mubr.f32.gmra.mxu0 %v3630
        %v3703 = vpop.f32.mrf.mxu0
        %v3704 = vadd.f32 0.0, %v3703
        %v3705 = vpop.f32.mrf.mxu0
        %3706 = vdwg.mxu0
        %v3707 = vadd.f32 %v3032, %v3699
        %v3708 = vadd.f32 %v3033, %v3704
        %v3709 = vld [vmem:[%s912] sm:$0x1]
        %v3710 = vld [vmem:[%s915] sm:$0x1]
        %v3711 = vsel %vm941, %v3707, 0.0
        %3712 = vadd.xlane.f32.xlu0 %v3711
        %v3713 = vpop.xlane.xlu0 %3712
        %v3714 = vsel %vm941, %v3708, 0.0
        %3715 = vadd.xlane.f32.xlu0 %v3714
        %v3716 = vpop.xlane.xlu0 %3715
        %v3717 = vmul.f32 %v3713, %v948
        %v3718 = vmul.f32 %v3716, %v948
        %v3719 = vmul.f32 %v3707, %v3707
        %v3720 = vmul.f32 %v3708, %v3708
        %v3721 = vsel %vm941, %v3719, 0.0
        %3722 = vadd.xlane.f32.xlu0 %v3721
        %v3723 = vpop.xlane.xlu0 %3722
        %v3724 = vsel %vm941, %v3720, 0.0
        %3725 = vadd.xlane.f32.xlu0 %v3724
        %v3726 = vpop.xlane.xlu0 %3725
        %v3727 = vmul.f32 %v3723, %v948
        %v3728 = vmul.f32 %v3726, %v948
        %v3729 = vmul.f32 %v3717, %v3717
        %v3730 = vmul.f32 %v3718, %v3718
        %v3731 = vsub.f32 %v3727, %v3729
        %v3732 = vsub.f32 %v3728, %v3730
        %v3733 = vsub.f32 %v3707, %v3717
        %v3734 = vsub.f32 %v3708, %v3718
        %v3735 = vadd.f32 %v3731, 1e-05
        %v3736 = vadd.f32 %v3732, 1e-05
        %v3737 = vrsqrt.pop %v3735
        %v3738 = vrsqrt.pop %v3736
        %v3739 = vmul.f32 %v3733, %v3737
        %v3740 = vmul.f32 %v3734, %v3738
        %v3742 = vlaneseq
        %v3743 = vshrl.u32 %v3742, 7
        %v3744 = vsub.s32 0, %v3743
        %v3745 = vrot.slane %v3709, %v3744
        %v3747 = vmul.f32 %v3739, %v3745
        %v3748 = vmul.f32 %v3740, %v3745
        %v3750 = vlaneseq
        %v3751 = vshrl.u32 %v3750, 7
        %v3752 = vsub.s32 0, %v3751
        %v3753 = vrot.slane %v3710, %v3752
        %v3755 = vadd.f32 %v3747, %v3753
        %v3756 = vadd.f32 %v3748, %v3753
        %v3757 = vld [vmem:[%s773] sm:$0xff]
        %v3758 = vld [vmem:[%s773 + $0x8] sm:$0xff]
        %v3759 = vld [vmem:[%s773 + $0x10] sm:$0xff]
        %v3760 = vld [vmem:[%s773 + $0x18] sm:$0xff]
        %v3761 = vld [vmem:[%s918] sm:$0x1]
        %v3763 = vlaneseq
        %v3764 = vshrl.u32 %v3763, 7
        %v3765 = vsub.s32 0, %v3764
        %v3766 = vrot.slane %v3761, %v3765
        %v3769 = vsel %vm941, %v3755, 0
        %v3772 = vsel %vm941, %v3756, 0
        %3774 = vmatprep.subr.mxu0 0.0
        %3775 = vmatpush1.msra.mxu0 0.0
        %3776 = vmatprep.subr.mxu0 0.0
        %3777 = vmatpush1.msra.mxu0 0.0
        %3778 = vmatprep.subr.mxu0 0.0
        %3779 = vmatpush1.msra.mxu0 0.0
        %3780 = vmatprep.subr.mxu0 0.0
        %3781 = vmatpush1.msra.mxu0 0.0
        %3782 = vmatprep.subr.mxu0 0.0
        %3783 = vmatpush1.msra.mxu0 0.0
        %3784 = vmatprep.subr.mxu0 0.0
        %3785 = vmatpush1.msra.mxu0 0.0
        %3786 = vmatprep.subr.mxu0 0.0
        %3787 = vmatpush1.msra.mxu0 0.0
        %3788 = vmatprep.subr.mxu0 0.0
        %3789 = vmatpush1.msra.mxu0 0.0
        %3790 = vmatprep.subr.mxu0 0.0
        %3791 = vmatpush1.msra.mxu0 0.0
        %3792 = vmatprep.subr.mxu0 0.0
        %3793 = vmatpush1.msra.mxu0 0.0
        %3794 = vmatprep.subr.mxu0 0.0
        %3795 = vmatpush1.msra.mxu0 0.0
        %3796 = vmatprep.subr.mxu0 0.0
        %3797 = vmatpush1.msra.mxu0 0.0
        %3798 = vmatprep.subr.mxu0 0.0
        %3799 = vmatpush1.msra.mxu0 %v3760
        %3800 = vmatprep.subr.mxu0 0.0
        %3801 = vmatpush1.msra.mxu0 %v3759
        %3802 = vmatprep.subr.mxu0 0.0
        %3803 = vmatpush1.msra.mxu0 %v3758
        %3804 = vmatprep.subr.mxu0 0.0
        %3805 = vmatpush1.msra.mxu0 %v3757
        %3806 = vmatprep.subr.mxu0 0.0
        %3807 = vmatpush2.msra.mxu0 0.0
        %3808 = vmatprep.subr.mxu0 0.0
        %3809 = vmatpush2.msra.mxu0 0.0
        %3810 = vmatprep.subr.mxu0 0.0
        %3811 = vmatpush2.msra.mxu0 0.0
        %3812 = vmatprep.subr.mxu0 0.0
        %3813 = vmatpush2.msra.mxu0 0.0
        %3814 = vmatprep.subr.mxu0 0.0
        %3815 = vmatpush2.msra.mxu0 0.0
        %3816 = vmatprep.subr.mxu0 0.0
        %3817 = vmatpush2.msra.mxu0 0.0
        %3818 = vmatprep.subr.mxu0 0.0
        %3819 = vmatpush2.msra.mxu0 0.0
        %3820 = vmatprep.subr.mxu0 0.0
        %3821 = vmatpush2.msra.mxu0 0.0
        %3822 = vmatprep.subr.mxu0 0.0
        %3823 = vmatpush2.msra.mxu0 0.0
        %3824 = vmatprep.subr.mxu0 0.0
        %3825 = vmatpush2.msra.mxu0 0.0
        %3826 = vmatprep.subr.mxu0 0.0
        %3827 = vmatpush2.msra.mxu0 0.0
        %3828 = vmatprep.subr.mxu0 0.0
        %3829 = vmatpush2.msra.mxu0 0.0
        %3830 = vmatprep.subr.mxu0 0.0
        %3831 = vmatpush2.msra.mxu0 0.0
        %3832 = vmatprep.subr.mxu0 0.0
        %3833 = vmatpush2.msra.mxu0 0.0
        %3834 = vmatprep.subr.mxu0 0.0
        %3835 = vmatpush2.msra.mxu0 0.0
        %3836 = vmatprep.subr.mxu0 0.0
        %3837 = vmatpush2.msra.mxu0 0.0
        %3838 = vmatprep.mubr.f32.mxu0 0.0
        %3839 = vmatmul.mubr.f32.gmra.mxu0 %v3769
        %v3840 = vpop.f32.mrf.mxu0
        %v3841 = vadd.f32 %v3766, %v3840
        %v3842 = vpop.f32.mrf.mxu0
        %3843 = vmatprep.mubr.f32.mxu0 0.0
        %3844 = vmatmul.mubr.f32.gmra.mxu0 %v3772
        %v3845 = vpop.f32.mrf.mxu0
        %v3846 = vadd.f32 %v3766, %v3845
        %v3847 = vpop.f32.mrf.mxu0
        %3848 = vdwg.mxu0
        %v3849 = vmax.f32 %v3841, 0.0
        %v3850 = vmax.f32 %v3846, 0.0
        %v3851 = vld [vmem:[%s923] sm:$0xff]
        %v3852 = vld [vmem:[%s923 + $0x8] sm:$0xff]
        %v3853 = vld [vmem:[%s923 + $0x10] sm:$0xff]
        %v3854 = vld [vmem:[%s923 + $0x18] sm:$0xff]
        %v3855 = vld [vmem:[%s923 + $0x20] sm:$0xff]
        %v3856 = vld [vmem:[%s923 + $0x28] sm:$0xff]
        %v3857 = vld [vmem:[%s923 + $0x30] sm:$0xff]
        %v3858 = vld [vmem:[%s923 + $0x38] sm:$0xff]
        %vm3859 = vcmask 523264
        %v3861 = vsel %vm3859, %v3849, 0
        %v3864 = vsel %vm3859, %v3850, 0
        %3866 = vmatprep.subr.mxu0 0.0
        %3867 = vmatpush1.msra.mxu0 0.0
        %3868 = vmatprep.subr.mxu0 0.0
        %3869 = vmatpush1.msra.mxu0 0.0
        %3870 = vmatprep.subr.mxu0 0.0
        %3871 = vmatpush1.msra.mxu0 0.0
        %3872 = vmatprep.subr.mxu0 0.0
        %3873 = vmatpush1.msra.mxu0 0.0
        %3874 = vmatprep.subr.mxu0 0.0
        %3875 = vmatpush1.msra.mxu0 0.0
        %3876 = vmatprep.subr.mxu0 0.0
        %3877 = vmatpush1.msra.mxu0 0.0
        %3878 = vmatprep.subr.mxu0 0.0
        %3879 = vmatpush1.msra.mxu0 0.0
        %3880 = vmatprep.subr.mxu0 0.0
        %3881 = vmatpush1.msra.mxu0 0.0
        %3882 = vmatprep.subr.mxu0 0.0
        %3883 = vmatpush1.msra.mxu0 %v3858
        %3884 = vmatprep.subr.mxu0 0.0
        %3885 = vmatpush1.msra.mxu0 %v3857
        %3886 = vmatprep.subr.mxu0 0.0
        %3887 = vmatpush1.msra.mxu0 %v3856
        %3888 = vmatprep.subr.mxu0 0.0
        %3889 = vmatpush1.msra.mxu0 %v3855
        %3890 = vmatprep.subr.mxu0 0.0
        %3891 = vmatpush1.msra.mxu0 %v3854
        %3892 = vmatprep.subr.mxu0 0.0
        %3893 = vmatpush1.msra.mxu0 %v3853
        %3894 = vmatprep.subr.mxu0 0.0
        %3895 = vmatpush1.msra.mxu0 %v3852
        %3896 = vmatprep.subr.mxu0 0.0
        %3897 = vmatpush1.msra.mxu0 %v3851
        %3898 = vmatprep.subr.mxu0 0.0
        %3899 = vmatpush2.msra.mxu0 0.0
        %3900 = vmatprep.subr.mxu0 0.0
        %3901 = vmatpush2.msra.mxu0 0.0
        %3902 = vmatprep.subr.mxu0 0.0
        %3903 = vmatpush2.msra.mxu0 0.0
        %3904 = vmatprep.subr.mxu0 0.0
        %3905 = vmatpush2.msra.mxu0 0.0
        %3906 = vmatprep.subr.mxu0 0.0
        %3907 = vmatpush2.msra.mxu0 0.0
        %3908 = vmatprep.subr.mxu0 0.0
        %3909 = vmatpush2.msra.mxu0 0.0
        %3910 = vmatprep.subr.mxu0 0.0
        %3911 = vmatpush2.msra.mxu0 0.0
        %3912 = vmatprep.subr.mxu0 0.0
        %3913 = vmatpush2.msra.mxu0 0.0
        %3914 = vmatprep.subr.mxu0 0.0
        %3915 = vmatpush2.msra.mxu0 0.0
        %3916 = vmatprep.subr.mxu0 0.0
        %3917 = vmatpush2.msra.mxu0 0.0
        %3918 = vmatprep.subr.mxu0 0.0
        %3919 = vmatpush2.msra.mxu0 0.0
        %3920 = vmatprep.subr.mxu0 0.0
        %3921 = vmatpush2.msra.mxu0 0.0
        %3922 = vmatprep.subr.mxu0 0.0
        %3923 = vmatpush2.msra.mxu0 0.0
        %3924 = vmatprep.subr.mxu0 0.0
        %3925 = vmatpush2.msra.mxu0 0.0
        %3926 = vmatprep.subr.mxu0 0.0
        %3927 = vmatpush2.msra.mxu0 0.0
        %3928 = vmatprep.subr.mxu0 0.0
        %3929 = vmatpush2.msra.mxu0 0.0
        %3930 = vmatprep.mubr.f32.mxu0 0.0
        %3931 = vmatmul.mubr.f32.gmra.mxu0 %v3861
        %v3932 = vpop.f32.mrf.mxu0
        %v3933 = vadd.f32 0.0, %v3932
        %v3934 = vpop.f32.mrf.mxu0
        %3935 = vmatprep.mubr.f32.mxu0 0.0
        %3936 = vmatmul.mubr.f32.gmra.mxu0 %v3864
        %v3937 = vpop.f32.mrf.mxu0
        %v3938 = vadd.f32 0.0, %v3937
        %v3939 = vpop.f32.mrf.mxu0
        %3940 = vdwg.mxu0
        %v3941 = vadd.f32 %v3707, %v3933
        %v3942 = vadd.f32 %v3708, %v3938
        %v3943 = vld [vmem:[%s926] sm:$0x1]
        %v3945 = vlaneseq
        %v3946 = vshrl.u32 %v3945, 7
        %v3947 = vsub.s32 0, %v3946
        %v3948 = vrot.slane %v3943, %v3947
        %v3950 = vadd.f32 %v3941, %v3948
        %v3951 = vadd.f32 %v3942, %v3948
        %p3952 = scmp.lt.s32.totalorder %s43, 1
        // Predicated region
        $region117: #{tpu_custom_call.1} parent=95 // pred_check
          %p3953 = pneg %p3952
        $region118: #{tpu_custom_call.1} parent=95 // pred_check_branch
          %3955 = sbr.rel (%p3953) target = $region120
        $region119: #{tpu_custom_call.1} parent=95 // pred_region
          %3956 = vst.msk [vmem:[#allocation10] sm:$0xff] %vm941, %v3950
          %3957 = vst.msk [vmem:[#allocation10 + $0x8] sm:$0xff] %vm941, %v3951
        $region120: #{tpu_custom_call.1} parent=95 // pred_fallthru
          _
        %p3958 = scmp.eq.s32.totalorder %s43, 1
        // Predicated region
        $region121: #{tpu_custom_call.1} parent=95 // pred_check
          %p3959 = pneg %p3958
        $region122: #{tpu_custom_call.1} parent=95 // pred_check_branch
          %3961 = sbr.rel (%p3959) target = $region124
        $region123: #{tpu_custom_call.1} parent=95 // pred_region
          %v3962 = vld [vmem:[%s17] sm:$0x1]
          %v3963 = vld [vmem:[%s18] sm:$0x1]
          %v3964 = vsel %vm941, %v3950, 0.0
          %3965 = vadd.xlane.f32.xlu0 %v3964
          %v3966 = vpop.xlane.xlu0 %3965
          %v3967 = vsel %vm941, %v3951, 0.0
          %3968 = vadd.xlane.f32.xlu0 %v3967
          %v3969 = vpop.xlane.xlu0 %3968
          %v3970 = vmul.f32 %v3966, %v948
          %v3971 = vmul.f32 %v3969, %v948
          %v3972 = vmul.f32 %v3950, %v3950
          %v3973 = vmul.f32 %v3951, %v3951
          %v3974 = vsel %vm941, %v3972, 0.0
          %3975 = vadd.xlane.f32.xlu0 %v3974
          %v3976 = vpop.xlane.xlu0 %3975
          %v3977 = vsel %vm941, %v3973, 0.0
          %3978 = vadd.xlane.f32.xlu0 %v3977
          %v3979 = vpop.xlane.xlu0 %3978
          %v3980 = vmul.f32 %v3976, %v948
          %v3981 = vmul.f32 %v3979, %v948
          %v3982 = vmul.f32 %v3970, %v3970
          %v3983 = vmul.f32 %v3971, %v3971
          %v3984 = vsub.f32 %v3980, %v3982
          %v3985 = vsub.f32 %v3981, %v3983
          %v3986 = vsub.f32 %v3950, %v3970
          %v3987 = vsub.f32 %v3951, %v3971
          %v3988 = vadd.f32 %v3984, 1e-05
          %v3989 = vadd.f32 %v3985, 1e-05
          %v3990 = vrsqrt.pop %v3988
          %v3991 = vrsqrt.pop %v3989
          %v3992 = vmul.f32 %v3986, %v3990
          %v3993 = vmul.f32 %v3987, %v3991
          %v3995 = vlaneseq
          %v3996 = vshrl.u32 %v3995, 7
          %v3997 = vsub.s32 0, %v3996
          %v3998 = vrot.slane %v3962, %v3997
          %v4000 = vmul.f32 %v3992, %v3998
          %v4001 = vmul.f32 %v3993, %v3998
          %v4003 = vlaneseq
          %v4004 = vshrl.u32 %v4003, 7
          %v4005 = vsub.s32 0, %v4004
          %v4006 = vrot.slane %v3963, %v4005
          %v4008 = vadd.f32 %v4000, %v4006
          %v4009 = vadd.f32 %v4001, %v4006
          %4010 = vst.msk [vmem:[#allocation10] sm:$0xff] %vm941, %v4008
          %4011 = vst.msk [vmem:[#allocation10 + $0x8] sm:$0xff] %vm941, %v4009
        $region124: #{tpu_custom_call.1} parent=95 // pred_fallthru
          _
        // Predicated region
        $region125: #{tpu_custom_call.1} parent=95 // pred_check
          %p4012 = pneg %p552
        $region126: #{tpu_custom_call.1} parent=95 // pred_check_branch
          %4014 = sbr.rel (%p4012) target = $region128
        $region127: #{tpu_custom_call.1} parent=95 // pred_region
          %s4015 = smul.u32 2, %s42
          %s4017 = ssub.s32 256, 256
          %4018 = vsyncadd [#allocation4], %s4017
          %s4019 = smul.addr %s4015, 128
          %s4020 = scalar_lea.hbm %s19, %s4019
          %s4021 = sshll.u32 [#allocation10], 4
          %s4022 = int_to_ptr.vmem [resolvable:$true] %s4021
          %4027 = dma.vmem_to_hbm [thread:$0]  %s4022, 256, %s4020, [#allocation4], 128, 128, 8
        $region128: #{tpu_custom_call.1} parent=95 // pred_fallthru
          _
        // Predicated region
        $region129: #{tpu_custom_call.1} parent=95 // pred_check
          %p4028 = pneg %p552
        $region130: #{tpu_custom_call.1} parent=95 // pred_check_branch
          %4030 = sbr.rel (%p4028) target = $region132
        $region131: #{tpu_custom_call.1} parent=95 // pred_region
          %4031 = dma.done [#allocation4], 256
        $region132: #{tpu_custom_call.1} parent=95 // pred_fallthru
          _
      $region96: #{tpu_custom_call.1} parent=5 // pred_fallthru
        _
      %p4032 = scmp.le.s32.totalorder 2, %s33
      // Predicated region
      $region133: #{tpu_custom_call.1} parent=5 // pred_check
        %p4033 = pneg %p4032
      $region134: #{tpu_custom_call.1} parent=5 // pred_check_branch
        %4035 = sbr.rel (%p4033) target = $region136
      $region135: #{tpu_custom_call.1} parent=5 // pred_region
        %s4036 = ssub.s32 %s33, 2
      $region136: #{tpu_custom_call.1} parent=5 // pred_fallthru
        _
    $region6: #{tpu_custom_call.1} parent=1 // loop_footer
      %s37 = sadd.s32 1, %s33
    $region7: #{tpu_custom_call.1} parent=1 // loop_footer_branch
      %32 = sbr.rel target = $region3
    $region8: #{tpu_custom_call.1} parent=1 // loop_exit
      _
    %4037 = vsyncpa [#allocation3], 1
    %s4038 = scalar_lea.sflag [#allocation3], 1
    %4039 = vsyncpa %s4038, 1
    %4040 = vsyncpa [#allocation6], 1
    %s4041 = scalar_lea.sflag [#allocation6], 1
    %4042 = vsyncpa %s4041, 1
    %4043 = vsyncpa [#allocation9], 1
    %s4044 = scalar_lea.sflag [#allocation9], 1
    %4045 = vsyncpa %s4044, 1
    %4046 = vsyncpa [#allocation4], 1
    %s4047 = scalar_lea.sflag [#allocation4], 1
    %4048 = vsyncpa %s4047, 1

</llo_original>
